<compile_context>
chip_gen: v5e
topology: v5e:2x2
jax: 0.10.0
libtpu: 0.0.40
codegen_flags: <defaults>
</compile_context>

<pallas_src>
import functools
import math

import jax
import jax.numpy as jnp
from jax import lax
from jax.experimental import pallas as pl
from jax.experimental.pallas import tpu as pltpu


# ---------------------------------------------------------------------------
# Pallas kernel: out = act(W @ X + b), transposed orientation
#   W: (N, K) bf16, X: (K, S) bf16, b: (N, 1) f32  ->  out: (N, S) f32
# ---------------------------------------------------------------------------
def _wx_bias_act_kernel(w_ref, b_ref, x_ref, o_ref, *, apply_relu):
    acc = jnp.dot(w_ref[...], x_ref[...], preferred_element_type=jnp.float32)
    acc = acc + b_ref[...]                    # (N, 1) broadcasts over lanes
    if apply_relu:
        acc = jnp.maximum(acc, 0.0)
    o_ref[...] = acc.astype(o_ref.dtype)


def fused_wxT_bias_act(w, b2d, pT, *, apply_relu):
    """act(w @ pT[g] + b) for each grid step g.

    w:   (N, K)    bf16  (grid-invariant, fetched once)
    b2d: (N, 1)    f32   (grid-invariant)
    pT:  (G, K, S) bf16  (one (K, S) slab per grid step; S is lane-dense)
    ->   (G, N, S) f32
    All blocks are full-dim: no padding, no output slicing, one grid step per
    image.
    """
    G, K, S = pT.shape
    N = w.shape[0]
    kernel = functools.partial(_wx_bias_act_kernel, apply_relu=apply_relu)
    return pl.pallas_call(
        kernel,
        out_shape=jax.ShapeDtypeStruct((G, N, S), jnp.float32),
        grid_spec=pltpu.PrefetchScalarGridSpec(
            num_scalar_prefetch=0,
            grid=(G,),
            in_specs=[
                pl.BlockSpec((N, K), lambda g: (0, 0)),           # weight
                pl.BlockSpec((N, 1), lambda g: (0, 0)),           # bias
                pl.BlockSpec((None, K, S), lambda g: (g, 0, 0)),  # patches^T
            ],
            out_specs=pl.BlockSpec((None, N, S), lambda g: (g, 0, 0)),
        ),
        compiler_params=pltpu.CompilerParams(
            dimension_semantics=("parallel",)),
    )(w, b2d, pT)


# ---------------------------------------------------------------------------
# Patch extraction (JAX glue, no gather): NCHW -> (B, C*k*k, Ho*Wo) bf16
# K ordering is (kh, kw, c_in) to match the pre-reshaped weights.
# Uses 2*k static strided slices (k per spatial axis), not k^2, not gather.
# ---------------------------------------------------------------------------
def extract_patches_T(x_nchw, k, stride, pad):
    B, C, H, W = x_nchw.shape
    xp = x_nchw.astype(jnp.bfloat16)
    if pad > 0:
        xp = jnp.pad(xp, ((0, 0), (0, 0), (pad, pad), (pad, pad)))
    Hp, Wp = H + 2 * pad, W + 2 * pad
    Ho = (Hp - k) // stride + 1
    Wo = (Wp - k) // stride + 1

    # H phases: k strided slices along H -> (B, kh, C, Ho, Wp)
    h_slabs = [xp[:, :, kh: kh + (Ho - 1) * stride + 1: stride, :]
               for kh in range(k)]
    xh = jnp.stack(h_slabs, axis=1)
    # W phases: k strided slices along W -> (B, kh, kw, C, Ho, Wo)
    w_slabs = [xh[..., kw: kw + (Wo - 1) * stride + 1: stride]
               for kw in range(k)]
    p6 = jnp.stack(w_slabs, axis=2)
    # Contiguous grouping -> free reshape to (B, K, S)
    pT = p6.reshape(B, k * k * C, Ho * Wo)
    return pT, Ho, Wo


def conv2d_relu_pallas(x_nchw, layer):
    pT, Ho, Wo = extract_patches_T(x_nchw, layer["k"], layer["stride"],
                                   layer["pad"])
    out = fused_wxT_bias_act(layer["w_mat"], layer["b2d"], pT,
                             apply_relu=True)            # (B, C_out, Ho*Wo)
    return out.reshape(out.shape[0], layer["c_out"], Ho, Wo)   # NCHW, no transpose


# ---------------------------------------------------------------------------
# SConvB parameters + forward
# ---------------------------------------------------------------------------
def init_conv(key, c_in, c_out, k, stride, pad):
    n = k * k * c_out
    wkey, bkey = jax.random.split(key)
    w = jax.random.normal(wkey, (c_out, c_in, k, k), jnp.float32) * math.sqrt(2.0 / n)
    bound = 1.0 / math.sqrt(c_in * k * k)
    b = jax.random.uniform(bkey, (c_out,), jnp.float32, -bound, bound)
    # Hoisted weight prep: (C_out, K) with K ordered (kh, kw, c_in); bf16 MXU operand.
    w_mat = w.transpose(0, 2, 3, 1).reshape(c_out, k * k * c_in).astype(jnp.bfloat16)
    return {"w_oihw": w, "b": b,                       # f32 originals (reference)
            "w_mat": w_mat, "b2d": b.reshape(c_out, 1),
            "k": k, "stride": stride, "pad": pad, "c_out": c_out}


def init_linear(key, d_in, d_out):
    wkey, bkey = jax.random.split(key)
    bound = 1.0 / math.sqrt(d_in)
    w = jax.random.uniform(wkey, (d_out, d_in), jnp.float32, -bound, bound)
    b = jax.random.uniform(bkey, (d_out,), jnp.float32, -bound, bound)
    return {"w_f32": w, "b_f32": b,
            "w_mat": w.astype(jnp.bfloat16), "b2d": b.reshape(d_out, 1)}


def init_sconvb(key, n_layers, n_units, n_channels, n_classes=10):
    keys = jax.random.split(key, n_layers + 1)
    convs = []
    # Conv2d(n_channels, n_units, kernel_size=25, stride=5, padding=1)
    convs.append(init_conv(keys[0], n_channels, n_units, 25, 5, 1))
    # (n_layers - 2) x Conv2d(n_units, n_units, kernel_size=3, stride=1, padding=1)
    for i in range(n_layers - 2):
        convs.append(init_conv(keys[1 + i], n_units, n_units, 3, 1, 1))
    # Conv2d(n_units, n_units, kernel_size=15, stride=3, padding=0)
    convs.append(init_conv(keys[n_layers - 1], n_units, n_units, 15, 3, 0))
    linear = init_linear(keys[n_layers], n_units, n_classes)
    return {"convs": convs, "linear": linear}


def sconvb_forward(params, x):
    y = x                                              # NCHW f32 throughout
    for layer in params["convs"]:
        y = conv2d_relu_pallas(y, layer)
    feat = y.reshape(y.shape[0], -1)                   # Flatten (spatial is 1x1)
    lin = params["linear"]
    pT_lin = feat.astype(jnp.bfloat16).T[None]         # (1, n_units, B) -- tiny
    logits_T = fused_wxT_bias_act(lin["w_mat"], lin["b2d"], pT_lin,
                                  apply_relu=False)    # (1, n_classes, B)
    return logits_T[0].T                               # (B, n_classes)


# Pure-JAX f32 reference (correctness check only)
def sconvb_reference(params, x):
    y = x
    for layer in params["convs"]:
        y = lax.conv_general_dilated(
            y, layer["w_oihw"], (layer["stride"],) * 2,
            [(layer["pad"], layer["pad"])] * 2,
            dimension_numbers=("NCHW", "OIHW", "NCHW"))
        y = jax.nn.relu(y + layer["b"][None, :, None, None])
    y = y.reshape(y.shape[0], -1)
    lin = params["linear"]
    return y @ lin["w_f32"].T + lin["b_f32"]


if __name__ == "__main__":
    # Smallest input consistent with the architecture: the final
    # Linear(n_units, n_classes) after Flatten requires the last conv output
    # to be spatially 1x1, which forces H = W = 93:
    #   93 --(k25,s5,p1)--> 15 --(k3,s1,p1)--> 15 --(k15,s3,p0)--> 1
    n_layers, n_units, n_channels, n_classes = 3, 8, 3, 10
    B, H, W = 2, 93, 93

    key = jax.random.PRNGKey(0)
    pkey, xkey = jax.random.split(key)
    params = init_sconvb(pkey, n_layers, n_units, n_channels, n_classes)
    x = jax.random.normal(xkey, (B, n_channels, H, W), jnp.float32)

    fwd = jax.jit(lambda inp: sconvb_forward(params, inp))
    logits = jax.block_until_ready(fwd(x))
    ref = jax.block_until_ready(jax.jit(lambda inp: sconvb_reference(params, inp))(x))

    assert logits.shape == (B, n_classes), logits.shape
    assert jnp.allclose(logits, ref, rtol=5e-2, atol=5e-2), (
        "Pallas output mismatch vs reference; max abs err = "
        f"{jnp.max(jnp.abs(logits - ref))}")
    print("KERNEL_OK")
</pallas_src>

<mosaic_0001>
module attributes {stable_mosaic.version = 11 : i64} {
  func.func @_wx_bias_act_kernel(%arg0: i32, %arg1: memref<8x1875xbf16, #tpu.memory_space<vmem>>, %arg2: memref<8x1xf32, #tpu.memory_space<vmem>>, %arg3: memref<1x1875x225xbf16, #tpu.memory_space<vmem>>, %arg4: memref<1x8x225xf32, #tpu.memory_space<vmem>>) attributes {dimension_semantics = [#tpu.dimension_semantics<parallel>], iteration_bounds = array<i64: 2>, scalar_prefetch = 0 : i64, scratch_operands = 0 : i64, tpu.core_type = #tpu.core_type<tc>, window_params = [{pipeline_mode = #tpu.pipeline_mode<synchronous>, transform_indices = @transform_0, window_bounds = array<i64: 8, 1875>}, {pipeline_mode = #tpu.pipeline_mode<synchronous>, transform_indices = @transform_1, window_bounds = array<i64: 8, 1>}, {transform_indices = @transform_2, window_bounds = array<i64: 1, 1875, 225>}, {transform_indices = @transform_3, window_bounds = array<i64: 1, 8, 225>}]} {
    %c0 = arith.constant 0 : index
    %c0_0 = arith.constant 0 : index
    %0 = vector.load %arg1[%c0, %c0_0] : memref<8x1875xbf16, #tpu.memory_space<vmem>>, vector<8x1875xbf16>
    %c0_1 = arith.constant 0 : index
    %c0_2 = arith.constant 0 : index
    %c0_3 = arith.constant 0 : index
    %1 = vector.load %arg3[%c0_1, %c0_2, %c0_3] : memref<1x1875x225xbf16, #tpu.memory_space<vmem>>, vector<1x1875x225xbf16>
    %2 = vector.shape_cast %1 : vector<1x1875x225xbf16> to vector<1875x225xbf16>
    %cst = arith.constant dense<0.000000e+00> : vector<8x225xf32>
    %3 = tpu.matmul %0, %2, %cst {dimension_numbers = #tpu.dot_dimension_numbers<[1], [0], [0], [1], [0, 0, 1, 1], [], []>} : vector<8x1875xbf16>, vector<1875x225xbf16>, vector<8x225xf32> -> vector<8x225xf32>
    %c0_4 = arith.constant 0 : index
    %c0_5 = arith.constant 0 : index
    %4 = vector.load %arg2[%c0_4, %c0_5] : memref<8x1xf32, #tpu.memory_space<vmem>>, vector<8x1xf32>
    %5 = vector.broadcast %4 : vector<8x1xf32> to vector<8x225xf32>
    %6 = arith.addf %3, %5 : vector<8x225xf32>
    %cst_6 = arith.constant 0.000000e+00 : f32
    %7 = vector.broadcast %cst_6 : f32 to vector<8x225xf32>
    %8 = arith.maximumf %6, %7 : vector<8x225xf32>
    %c0_7 = arith.constant 0 : index
    %c0_8 = arith.constant 0 : index
    %c0_9 = arith.constant 0 : index
    %9 = vector.load %arg4[%c0_7, %c0_8, %c0_9] : memref<1x8x225xf32, #tpu.memory_space<vmem>>, vector<1x8x225xf32>
    %10 = vector.shape_cast %9 : vector<1x8x225xf32> to vector<8x225xf32>
    %11 = vector.shape_cast %8 : vector<8x225xf32> to vector<1x8x225xf32>
    tpu.vector_store %arg4[%c0_7, %c0_8, %c0_9], %11 {strides = array<i32>} : memref<1x8x225xf32, #tpu.memory_space<vmem>>, vector<1x8x225xf32>,
    return
  }
  func.func @transform_0(%arg0: i32) -> (i32, i32) {
    %c0_i32 = arith.constant 0 : i32
    %c0_i32_0 = arith.constant 0 : i32
    %c0_i32_1 = arith.constant 0 : i32
    return %c0_i32, %c0_i32_0 : i32, i32
  }
  func.func @transform_1(%arg0: i32) -> (i32, i32) {
    %c0_i32 = arith.constant 0 : i32
    %c0_i32_0 = arith.constant 0 : i32
    %c0_i32_1 = arith.constant 0 : i32
    return %c0_i32, %c0_i32_0 : i32, i32
  }
  func.func @transform_2(%arg0: i32) -> (i32, i32, i32) {
    %c0_i32 = arith.constant 0 : i32
    %c0_i32_0 = arith.constant 0 : i32
    %c0_i32_1 = arith.constant 0 : i32
    return %arg0, %c0_i32, %c0_i32_0 : i32, i32, i32
  }
  func.func @transform_3(%arg0: i32) -> (i32, i32, i32) {
    %c0_i32 = arith.constant 0 : i32
    %c0_i32_0 = arith.constant 0 : i32
    %c0_i32_1 = arith.constant 0 : i32
    return %arg0, %c0_i32, %c0_i32_0 : i32, i32, i32
  }
}

module attributes {stable_mosaic.version = 11 : i64} {
  func.func @_wx_bias_act_kernel(%arg0: i32, %arg1: memref<8x72xbf16, #tpu.memory_space<vmem>>, %arg2: memref<8x1xf32, #tpu.memory_space<vmem>>, %arg3: memref<1x72x225xbf16, #tpu.memory_space<vmem>>, %arg4: memref<1x8x225xf32, #tpu.memory_space<vmem>>) attributes {dimension_semantics = [#tpu.dimension_semantics<parallel>], iteration_bounds = array<i64: 2>, scalar_prefetch = 0 : i64, scratch_operands = 0 : i64, tpu.core_type = #tpu.core_type<tc>, window_params = [{pipeline_mode = #tpu.pipeline_mode<synchronous>, transform_indices = @transform_0, window_bounds = array<i64: 8, 72>}, {pipeline_mode = #tpu.pipeline_mode<synchronous>, transform_indices = @transform_1, window_bounds = array<i64: 8, 1>}, {transform_indices = @transform_2, window_bounds = array<i64: 1, 72, 225>}, {transform_indices = @transform_3, window_bounds = array<i64: 1, 8, 225>}]} {
    %c0 = arith.constant 0 : index
    %c0_0 = arith.constant 0 : index
    %0 = vector.load %arg1[%c0, %c0_0] : memref<8x72xbf16, #tpu.memory_space<vmem>>, vector<8x72xbf16>
    %c0_1 = arith.constant 0 : index
    %c0_2 = arith.constant 0 : index
    %c0_3 = arith.constant 0 : index
    %1 = vector.load %arg3[%c0_1, %c0_2, %c0_3] : memref<1x72x225xbf16, #tpu.memory_space<vmem>>, vector<1x72x225xbf16>
    %2 = vector.shape_cast %1 : vector<1x72x225xbf16> to vector<72x225xbf16>
    %cst = arith.constant dense<0.000000e+00> : vector<8x225xf32>
    %3 = tpu.matmul %0, %2, %cst {dimension_numbers = #tpu.dot_dimension_numbers<[1], [0], [0], [1], [0, 0, 1, 1], [], []>} : vector<8x72xbf16>, vector<72x225xbf16>, vector<8x225xf32> -> vector<8x225xf32>
    %c0_4 = arith.constant 0 : index
    %c0_5 = arith.constant 0 : index
    %4 = vector.load %arg2[%c0_4, %c0_5] : memref<8x1xf32, #tpu.memory_space<vmem>>, vector<8x1xf32>
    %5 = vector.broadcast %4 : vector<8x1xf32> to vector<8x225xf32>
    %6 = arith.addf %3, %5 : vector<8x225xf32>
    %cst_6 = arith.constant 0.000000e+00 : f32
    %7 = vector.broadcast %cst_6 : f32 to vector<8x225xf32>
    %8 = arith.maximumf %6, %7 : vector<8x225xf32>
    %c0_7 = arith.constant 0 : index
    %c0_8 = arith.constant 0 : index
    %c0_9 = arith.constant 0 : index
    %9 = vector.load %arg4[%c0_7, %c0_8, %c0_9] : memref<1x8x225xf32, #tpu.memory_space<vmem>>, vector<1x8x225xf32>
    %10 = vector.shape_cast %9 : vector<1x8x225xf32> to vector<8x225xf32>
    %11 = vector.shape_cast %8 : vector<8x225xf32> to vector<1x8x225xf32>
    tpu.vector_store %arg4[%c0_7, %c0_8, %c0_9], %11 {strides = array<i32>} : memref<1x8x225xf32, #tpu.memory_space<vmem>>, vector<1x8x225xf32>,
    return
  }
  func.func @transform_0(%arg0: i32) -> (i32, i32) {
    %c0_i32 = arith.constant 0 : i32
    %c0_i32_0 = arith.constant 0 : i32
    %c0_i32_1 = arith.constant 0 : i32
    return %c0_i32, %c0_i32_0 : i32, i32
  }
  func.func @transform_1(%arg0: i32) -> (i32, i32) {
    %c0_i32 = arith.constant 0 : i32
    %c0_i32_0 = arith.constant 0 : i32
    %c0_i32_1 = arith.constant 0 : i32
    return %c0_i32, %c0_i32_0 : i32, i32
  }
  func.func @transform_2(%arg0: i32) -> (i32, i32, i32) {
    %c0_i32 = arith.constant 0 : i32
    %c0_i32_0 = arith.constant 0 : i32
    %c0_i32_1 = arith.constant 0 : i32
    return %arg0, %c0_i32, %c0_i32_0 : i32, i32, i32
  }
  func.func @transform_3(%arg0: i32) -> (i32, i32, i32) {
    %c0_i32 = arith.constant 0 : i32
    %c0_i32_0 = arith.constant 0 : i32
    %c0_i32_1 = arith.constant 0 : i32
    return %arg0, %c0_i32, %c0_i32_0 : i32, i32, i32
  }
}

module attributes {stable_mosaic.version = 11 : i64} {
  func.func @_wx_bias_act_kernel(%arg0: i32, %arg1: memref<8x1800xbf16, #tpu.memory_space<vmem>>, %arg2: memref<8x1xf32, #tpu.memory_space<vmem>>, %arg3: memref<1x1800x1xbf16, #tpu.memory_space<vmem>>, %arg4: memref<1x8x1xf32, #tpu.memory_space<vmem>>) attributes {dimension_semantics = [#tpu.dimension_semantics<parallel>], iteration_bounds = array<i64: 2>, scalar_prefetch = 0 : i64, scratch_operands = 0 : i64, tpu.core_type = #tpu.core_type<tc>, window_params = [{pipeline_mode = #tpu.pipeline_mode<synchronous>, transform_indices = @transform_0, window_bounds = array<i64: 8, 1800>}, {pipeline_mode = #tpu.pipeline_mode<synchronous>, transform_indices = @transform_1, window_bounds = array<i64: 8, 1>}, {transform_indices = @transform_2, window_bounds = array<i64: 1, 1800, 1>}, {transform_indices = @transform_3, window_bounds = array<i64: 1, 8, 1>}]} {
    %c0 = arith.constant 0 : index
    %c0_0 = arith.constant 0 : index
    %0 = vector.load %arg1[%c0, %c0_0] : memref<8x1800xbf16, #tpu.memory_space<vmem>>, vector<8x1800xbf16>
    %c0_1 = arith.constant 0 : index
    %c0_2 = arith.constant 0 : index
    %c0_3 = arith.constant 0 : index
    %1 = vector.load %arg3[%c0_1, %c0_2, %c0_3] : memref<1x1800x1xbf16, #tpu.memory_space<vmem>>, vector<1x1800x1xbf16>
    %2 = vector.shape_cast %1 : vector<1x1800x1xbf16> to vector<1800x1xbf16>
    %cst = arith.constant dense<0.000000e+00> : vector<8x1xf32>
    %3 = tpu.matmul %0, %2, %cst {dimension_numbers = #tpu.dot_dimension_numbers<[1], [0], [0], [1], [0, 0, 1, 1], [], []>} : vector<8x1800xbf16>, vector<1800x1xbf16>, vector<8x1xf32> -> vector<8x1xf32>
    %c0_4 = arith.constant 0 : index
    %c0_5 = arith.constant 0 : index
    %4 = vector.load %arg2[%c0_4, %c0_5] : memref<8x1xf32, #tpu.memory_space<vmem>>, vector<8x1xf32>
    %5 = arith.addf %3, %4 : vector<8x1xf32>
    %cst_6 = arith.constant 0.000000e+00 : f32
    %6 = vector.broadcast %cst_6 : f32 to vector<8x1xf32>
    %7 = arith.maximumf %5, %6 : vector<8x1xf32>
    %c0_7 = arith.constant 0 : index
    %c0_8 = arith.constant 0 : index
    %c0_9 = arith.constant 0 : index
    %8 = vector.load %arg4[%c0_7, %c0_8, %c0_9] : memref<1x8x1xf32, #tpu.memory_space<vmem>>, vector<1x8x1xf32>
    %9 = vector.shape_cast %8 : vector<1x8x1xf32> to vector<8x1xf32>
    %10 = vector.shape_cast %7 : vector<8x1xf32> to vector<1x8x1xf32>
    tpu.vector_store %arg4[%c0_7, %c0_8, %c0_9], %10 {strides = array<i32>} : memref<1x8x1xf32, #tpu.memory_space<vmem>>, vector<1x8x1xf32>,
    return
  }
  func.func @transform_0(%arg0: i32) -> (i32, i32) {
    %c0_i32 = arith.constant 0 : i32
    %c0_i32_0 = arith.constant 0 : i32
    %c0_i32_1 = arith.constant 0 : i32
    return %c0_i32, %c0_i32_0 : i32, i32
  }
  func.func @transform_1(%arg0: i32) -> (i32, i32) {
    %c0_i32 = arith.constant 0 : i32
    %c0_i32_0 = arith.constant 0 : i32
    %c0_i32_1 = arith.constant 0 : i32
    return %c0_i32, %c0_i32_0 : i32, i32
  }
  func.func @transform_2(%arg0: i32) -> (i32, i32, i32) {
    %c0_i32 = arith.constant 0 : i32
    %c0_i32_0 = arith.constant 0 : i32
    %c0_i32_1 = arith.constant 0 : i32
    return %arg0, %c0_i32, %c0_i32_0 : i32, i32, i32
  }
  func.func @transform_3(%arg0: i32) -> (i32, i32, i32) {
    %c0_i32 = arith.constant 0 : i32
    %c0_i32_0 = arith.constant 0 : i32
    %c0_i32_1 = arith.constant 0 : i32
    return %arg0, %c0_i32, %c0_i32_0 : i32, i32, i32
  }
}

module attributes {stable_mosaic.version = 11 : i64} {
  func.func @_wx_bias_act_kernel(%arg0: i32, %arg1: memref<10x8xbf16, #tpu.memory_space<vmem>>, %arg2: memref<10x1xf32, #tpu.memory_space<vmem>>, %arg3: memref<1x8x2xbf16, #tpu.memory_space<vmem>>, %arg4: memref<1x10x2xf32, #tpu.memory_space<vmem>>) attributes {dimension_semantics = [#tpu.dimension_semantics<parallel>], iteration_bounds = array<i64: 1>, scalar_prefetch = 0 : i64, scratch_operands = 0 : i64, tpu.core_type = #tpu.core_type<tc>, window_params = [{pipeline_mode = #tpu.pipeline_mode<synchronous>, transform_indices = @transform_0, window_bounds = array<i64: 10, 8>}, {pipeline_mode = #tpu.pipeline_mode<synchronous>, transform_indices = @transform_1, window_bounds = array<i64: 10, 1>}, {transform_indices = @transform_2, window_bounds = array<i64: 1, 8, 2>}, {transform_indices = @transform_3, window_bounds = array<i64: 1, 10, 2>}]} {
    %c0 = arith.constant 0 : index
    %c0_0 = arith.constant 0 : index
    %0 = vector.load %arg1[%c0, %c0_0] : memref<10x8xbf16, #tpu.memory_space<vmem>>, vector<10x8xbf16>
    %c0_1 = arith.constant 0 : index
    %c0_2 = arith.constant 0 : index
    %c0_3 = arith.constant 0 : index
    %1 = vector.load %arg3[%c0_1, %c0_2, %c0_3] : memref<1x8x2xbf16, #tpu.memory_space<vmem>>, vector<1x8x2xbf16>
    %2 = vector.shape_cast %1 : vector<1x8x2xbf16> to vector<8x2xbf16>
    %cst = arith.constant dense<0.000000e+00> : vector<10x2xf32>
    %3 = tpu.matmul %0, %2, %cst {dimension_numbers = #tpu.dot_dimension_numbers<[1], [0], [0], [1], [0, 0, 1, 1], [], []>} : vector<10x8xbf16>, vector<8x2xbf16>, vector<10x2xf32> -> vector<10x2xf32>
    %c0_4 = arith.constant 0 : index
    %c0_5 = arith.constant 0 : index
    %4 = vector.load %arg2[%c0_4, %c0_5] : memref<10x1xf32, #tpu.memory_space<vmem>>, vector<10x1xf32>
    %5 = vector.broadcast %4 : vector<10x1xf32> to vector<10x2xf32>
    %6 = arith.addf %3, %5 : vector<10x2xf32>
    %c0_6 = arith.constant 0 : index
    %c0_7 = arith.constant 0 : index
    %c0_8 = arith.constant 0 : index
    %7 = vector.load %arg4[%c0_6, %c0_7, %c0_8] : memref<1x10x2xf32, #tpu.memory_space<vmem>>, vector<1x10x2xf32>
    %8 = vector.shape_cast %7 : vector<1x10x2xf32> to vector<10x2xf32>
    %9 = vector.shape_cast %6 : vector<10x2xf32> to vector<1x10x2xf32>
    tpu.vector_store %arg4[%c0_6, %c0_7, %c0_8], %9 {strides = array<i32>} : memref<1x10x2xf32, #tpu.memory_space<vmem>>, vector<1x10x2xf32>,
    return
  }
  func.func @transform_0(%arg0: i32) -> (i32, i32) {
    %c0_i32 = arith.constant 0 : i32
    %c0_i32_0 = arith.constant 0 : i32
    %c0_i32_1 = arith.constant 0 : i32
    return %c0_i32, %c0_i32_0 : i32, i32
  }
  func.func @transform_1(%arg0: i32) -> (i32, i32) {
    %c0_i32 = arith.constant 0 : i32
    %c0_i32_0 = arith.constant 0 : i32
    %c0_i32_1 = arith.constant 0 : i32
    return %c0_i32, %c0_i32_0 : i32, i32
  }
  func.func @transform_2(%arg0: i32) -> (i32, i32, i32) {
    %c0_i32 = arith.constant 0 : i32
    %c0_i32_0 = arith.constant 0 : i32
    %c0_i32_1 = arith.constant 0 : i32
    return %arg0, %c0_i32, %c0_i32_0 : i32, i32, i32
  }
  func.func @transform_3(%arg0: i32) -> (i32, i32, i32) {
    %c0_i32 = arith.constant 0 : i32
    %c0_i32_0 = arith.constant 0 : i32
    %c0_i32_1 = arith.constant 0 : i32
    return %arg0, %c0_i32, %c0_i32_0 : i32, i32, i32
  }
}

</mosaic_0001>

<llo_original>
// kernel: _lambda_.4
$region0: #{_lambda_.4}
  #allocation0 [shape = 'u32[]', space=smem, size = 0x4, offset = 0x4, fixed_abs, tag = 'smem constant byte address 0x4 - core index']
  #allocation1 [shape = 'u32[72,128]{1,0:T(1,128)}', space=vmem, size = 0x9000, scoped, tag = 'internal scratch']
  %s0 = inlined_call_operand.vmem [shape: bf16[8,1875], index: 0, kind: input, shape index: {}]
  %s1 = inlined_call_operand.vmem [shape: f32[8,1], index: 1, kind: input, shape index: {}]
  %s2 = inlined_call_operand.vmem [shape: bf16[2,1875,225], index: 2, kind: input, shape index: {}]
  %s3 = inlined_call_operand.vmem [shape: f32[2,8,225], index: 3, kind: output, shape index: {}]
  %s4 = sld [smem:[#allocation0]]
  $region45: #{_lambda_.4} parent=0
    _
  %s6 = ssub.s32 1, %s4
  %s7 = scalar_select 0, %s6, %s4
  loop: start=0, step=1, limit=4
  $region2: #{_lambda_.4} parent=0 // loop_pre_header
    _
  $region3: #{_lambda_.4} parent=0 // loop_header
    %s9 = sphi 0, %s13
    %p10 = scmp.ge.s32.totalorder %s9, 4
    %s17 = sphi 0, %s17
    %s19 = sphi 0, %s17
    %s20 = sphi 0, %s19
    %s34 = sphi 0, %s20
    %s38 = sphi 0, %s38
    %s40 = sphi 0, %s38
    %s41 = sphi 0, %s40
    %s55 = sphi 0, %s41
    %s61 = sphi 0, %s63
    %s64 = sphi 0, %s61
    %s65 = sphi 0, %s64
    %s81 = sphi 0, %s65
    %s87 = sphi 0, %s89
    %s90 = sphi 0, %s87
    %s91 = sphi 0, %s90
    %s107 = sphi 0, %s91
  $region4: #{_lambda_.4} parent=0 // loop_header_branch
    %12 = sbr.rel (%p10) target = $region8
  $region5: #{_lambda_.4} parent=0 // loop_body
    %s14 = ssub.s32 %s9, 1
    %s15 = ssub.s32 %s9, 2
    %s16 = sadd.s32 %s9, 1
    %s18 = sadd.s32 %s17, 1
    %p21 = scmp.eq.s32.totalorder %s9, 1
    %p22 = scmp.ne.s32.totalorder %s17, %s19
    %p23 = scmp.eq.s32.totalorder %s9, 0
    %p24 = por %p22, %p23
    %p25 = scmp.ne.s32.totalorder %s17, %s19
    %p26 = scmp.eq.s32.totalorder %s14, 1
    %p27 = por %p25, %p26
    %p28 = scmp.ne.s32.totalorder %s19, %s20
    %p29 = scmp.eq.s32.totalorder %s14, 0
    %p30 = por %p28, %p29
    %p31 = scmp.ne.s32.totalorder %s19, %s20
    %p32 = scmp.eq.s32.totalorder %s15, 1
    %p33 = por %p31, %p32
    %p35 = scmp.ne.s32.totalorder %s20, %s34
    %p36 = scmp.eq.s32.totalorder %s15, 0
    %p37 = por %p35, %p36
    %s39 = sadd.s32 %s38, 1
    %p42 = scmp.eq.s32.totalorder %s9, 1
    %p43 = scmp.ne.s32.totalorder %s38, %s40
    %p44 = scmp.eq.s32.totalorder %s9, 0
    %p45 = por %p43, %p44
    %p46 = scmp.ne.s32.totalorder %s38, %s40
    %p47 = scmp.eq.s32.totalorder %s14, 1
    %p48 = por %p46, %p47
    %p49 = scmp.ne.s32.totalorder %s40, %s41
    %p50 = scmp.eq.s32.totalorder %s14, 0
    %p51 = por %p49, %p50
    %p52 = scmp.ne.s32.totalorder %s40, %s41
    %p53 = scmp.eq.s32.totalorder %s15, 1
    %p54 = por %p52, %p53
    %p56 = scmp.ne.s32.totalorder %s41, %s55
    %p57 = scmp.eq.s32.totalorder %s15, 0
    %p58 = por %p56, %p57
    %s59 = ssub.s32 %s9, %s16
    %p60 = scmp.eq.s32.totalorder %s59, 0
    %s62 = sadd.s32 %s61, 1
    %s63 = scalar_select %p60, %s61, %s62
    %p66 = pneg %p60
    %p67 = scmp.eq.s32.totalorder %s9, 1
    %p68 = por %p66, %p67
    %p69 = scmp.ne.s32.totalorder %s61, %s64
    %p70 = scmp.eq.s32.totalorder %s9, 0
    %p71 = por %p69, %p70
    %p72 = scmp.ne.s32.totalorder %s61, %s64
    %p73 = scmp.eq.s32.totalorder %s14, 1
    %p74 = por %p72, %p73
    %p75 = scmp.ne.s32.totalorder %s64, %s65
    %p76 = scmp.eq.s32.totalorder %s14, 0
    %p77 = por %p75, %p76
    %p78 = scmp.ne.s32.totalorder %s64, %s65
    %p79 = scmp.eq.s32.totalorder %s15, 1
    %p80 = por %p78, %p79
    %p82 = scmp.ne.s32.totalorder %s65, %s81
    %p83 = scmp.eq.s32.totalorder %s15, 0
    %p84 = por %p82, %p83
    %s85 = ssub.s32 %s9, %s16
    %p86 = scmp.eq.s32.totalorder %s85, 0
    %s88 = sadd.s32 %s87, 1
    %s89 = scalar_select %p86, %s87, %s88
    %p92 = pneg %p86
    %p93 = scmp.eq.s32.totalorder %s9, 1
    %p94 = por %p92, %p93
    %p95 = scmp.ne.s32.totalorder %s87, %s90
    %p96 = scmp.eq.s32.totalorder %s9, 0
    %p97 = por %p95, %p96
    %p98 = scmp.ne.s32.totalorder %s87, %s90
    %p99 = scmp.eq.s32.totalorder %s14, 1
    %p100 = por %p98, %p99
    %p101 = scmp.ne.s32.totalorder %s90, %s91
    %p102 = scmp.eq.s32.totalorder %s14, 0
    %p103 = por %p101, %p102
    %p104 = scmp.ne.s32.totalorder %s90, %s91
    %p105 = scmp.eq.s32.totalorder %s15, 1
    %p106 = por %p104, %p105
    %p108 = scmp.ne.s32.totalorder %s91, %s107
    %p109 = scmp.eq.s32.totalorder %s15, 0
    %p110 = por %p108, %p109
    %p111 = scmp.le.s32.totalorder 1, %s9
    %p112 = scmp.lt.s32.totalorder %s9, 3
    %p113 = pnand %p111, %p112
    %p114 = pneg %p113
    // Predicated region
    $region9: #{_lambda_.4} parent=5 // pred_check
      _
    $region10: #{_lambda_.4} parent=5 // pred_check_branch
      %116 = sbr.rel (%p113) target = $region12
    $region11: #{_lambda_.4} parent=5 // pred_region
      %s117 = ssub.s32 %s9, 1
      // Predicated region
      $region13: #{_lambda_.4} parent=11 // pred_check
        %p118 = pneg %p30
      $region14: #{_lambda_.4} parent=11 // pred_check_branch
        %120 = sbr.rel (%p118) target = $region16
      $region15: #{_lambda_.4} parent=11 // pred_region
        _
      $region16: #{_lambda_.4} parent=11 // pred_fallthru
        _
      // Predicated region
      $region17: #{_lambda_.4} parent=11 // pred_check
        %p121 = pneg %p51
      $region18: #{_lambda_.4} parent=11 // pred_check_branch
        %123 = sbr.rel (%p121) target = $region20
      $region19: #{_lambda_.4} parent=11 // pred_region
        _
      $region20: #{_lambda_.4} parent=11 // pred_fallthru
        _
    $region12: #{_lambda_.4} parent=5 // pred_fallthru
      _
    %p124 = scmp.lt.s32.totalorder %s9, 2
    // Predicated region
    $region21: #{_lambda_.4} parent=5 // pred_check
      %p125 = pneg %p124
    $region22: #{_lambda_.4} parent=5 // pred_check_branch
      %127 = sbr.rel (%p125) target = $region24
    $region23: #{_lambda_.4} parent=5 // pred_region
      // Predicated region
      $region25: #{_lambda_.4} parent=23 // pred_check
        %p128 = pneg %p71
      $region26: #{_lambda_.4} parent=23 // pred_check_branch
        %130 = sbr.rel (%p128) target = $region28
      $region27: #{_lambda_.4} parent=23 // pred_region
        %p131 = scmp.lt.s32.totalorder %s9, 1
        %s132 = scalar_select %p131, %s9, 1
        %s133 = smul.addr %s132, 470
        %s134 = smul.addr %s133, 4
        %s135 = scalar_lea.vmem %s2, %s134
      $region28: #{_lambda_.4} parent=23 // pred_fallthru
        _
    $region24: #{_lambda_.4} parent=5 // pred_fallthru
      _
    %p136 = scmp.le.s32.totalorder 1, %s9
    %p137 = scmp.lt.s32.totalorder %s9, 3
    %p138 = pnand %p136, %p137
    %p139 = pneg %p138
    // Predicated region
    $region29: #{_lambda_.4} parent=5 // pred_check
      _
    $region30: #{_lambda_.4} parent=5 // pred_check_branch
      %141 = sbr.rel (%p138) target = $region32
    $region31: #{_lambda_.4} parent=5 // pred_region
      %s142 = ssub.s32 %s9, 1
      %p143 = pneg %p30
      %p144 = pneg %p27
      %p145 = pneg %p51
      %p146 = pneg %p48
      %p147 = scmp.lt.s32.totalorder %s14, 1
      %s148 = scalar_select %p147, %s14, 1
      %s149 = smul.addr %s148, 470
      %s150 = smul.addr %s149, 4
      %s151 = scalar_lea.vmem %s2, %s150
      %p152 = pneg %p77
      %p153 = pneg %p74
      %p154 = pneg %p103
      %p155 = pneg %p100
      %p156 = scmp.lt.s32.totalorder %s14, 1
      %s157 = scalar_select %p156, %s14, 1
      %s158 = smul.addr %s157, 2
      %s159 = smul.addr %s158, 8
      %s160 = scalar_lea.vmem %s3, %s159
      %p161 = scmp.lt.s32.totalorder %s14, 1
      %s162 = scalar_select %p161, %s14, 1
      %s163 = smul.addr %s162, 470
      %s164 = smul.addr %s163, 4
      %s165 = scalar_lea.vmem %s2, %s164
      %p166 = scmp.lt.s32.totalorder %s14, 1
      %s167 = scalar_select %p166, %s14, 1
      %s168 = smul.addr %s167, 2
      %s169 = smul.addr %s168, 8
      %s170 = scalar_lea.vmem %s3, %s169
      %v172 = vld [vmem:[%s0] sm:$0xff]
      %v173 = vld [vmem:[%s0 + $0x8] sm:$0xff]
      %v174 = vld [vmem:[%s0 + $0x10] sm:$0xff]
      %v175 = vld [vmem:[%s0 + $0x18] sm:$0xff]
      %v176 = vld [vmem:[%s0 + $0x20] sm:$0xff]
      %v177 = vld [vmem:[%s0 + $0x28] sm:$0xff]
      %v178 = vld [vmem:[%s0 + $0x30] sm:$0xff]
      %v179 = vld [vmem:[%s0 + $0x38] sm:$0xf]
      %v180 = vld [vmem:[%s165] sm:$0xff]
      %v181 = vld [vmem:[%s165 + $0x8] sm:$0xff]
      %v182 = vld [vmem:[%s165 + $0x10] sm:$0xff]
      %v183 = vld [vmem:[%s165 + $0x18] sm:$0xff]
      %v184 = vld [vmem:[%s165 + $0x20] sm:$0xff]
      %v185 = vld [vmem:[%s165 + $0x28] sm:$0xff]
      %v186 = vld [vmem:[%s165 + $0x30] sm:$0xff]
      %v187 = vld [vmem:[%s165 + $0x38] sm:$0xff]
      %v188 = vld [vmem:[%s165 + $0x40] sm:$0xff]
      %v189 = vld [vmem:[%s165 + $0x48] sm:$0xff]
      %v190 = vld [vmem:[%s165 + $0x50] sm:$0xff]
      %v191 = vld [vmem:[%s165 + $0x58] sm:$0xff]
      %v192 = vld [vmem:[%s165 + $0x60] sm:$0xff]
      %v193 = vld [vmem:[%s165 + $0x68] sm:$0xff]
      %v194 = vld [vmem:[%s165 + $0x70] sm:$0xff]
      %v195 = vld [vmem:[%s165 + $0x78] sm:$0xff]
      %v196 = vld [vmem:[%s165 + $0x80] sm:$0xff]
      %v197 = vld [vmem:[%s165 + $0x88] sm:$0xff]
      %v198 = vld [vmem:[%s165 + $0x90] sm:$0xff]
      %v199 = vld [vmem:[%s165 + $0x98] sm:$0xff]
      %v200 = vld [vmem:[%s165 + $0xa0] sm:$0xff]
      %v201 = vld [vmem:[%s165 + $0xa8] sm:$0xff]
      %v202 = vld [vmem:[%s165 + $0xb0] sm:$0xff]
      %v203 = vld [vmem:[%s165 + $0xb8] sm:$0xff]
      %v204 = vld [vmem:[%s165 + $0xc0] sm:$0xff]
      %v205 = vld [vmem:[%s165 + $0xc8] sm:$0xff]
      %v206 = vld [vmem:[%s165 + $0xd0] sm:$0xff]
      %v207 = vld [vmem:[%s165 + $0xd8] sm:$0xff]
      %v208 = vld [vmem:[%s165 + $0xe0] sm:$0xff]
      %v209 = vld [vmem:[%s165 + $0xe8] sm:$0xff]
      %v210 = vld [vmem:[%s165 + $0xf0] sm:$0xff]
      %v211 = vld [vmem:[%s165 + $0xf8] sm:$0xff]
      %v212 = vld [vmem:[%s165 + $0x100] sm:$0xff]
      %v213 = vld [vmem:[%s165 + $0x108] sm:$0xff]
      %v214 = vld [vmem:[%s165 + $0x110] sm:$0xff]
      %v215 = vld [vmem:[%s165 + $0x118] sm:$0xff]
      %v216 = vld [vmem:[%s165 + $0x120] sm:$0xff]
      %v217 = vld [vmem:[%s165 + $0x128] sm:$0xff]
      %v218 = vld [vmem:[%s165 + $0x130] sm:$0xff]
      %v219 = vld [vmem:[%s165 + $0x138] sm:$0xff]
      %v220 = vld [vmem:[%s165 + $0x140] sm:$0xff]
      %v221 = vld [vmem:[%s165 + $0x148] sm:$0xff]
      %v222 = vld [vmem:[%s165 + $0x150] sm:$0xff]
      %v223 = vld [vmem:[%s165 + $0x158] sm:$0xff]
      %v224 = vld [vmem:[%s165 + $0x160] sm:$0xff]
      %v225 = vld [vmem:[%s165 + $0x168] sm:$0xff]
      %v226 = vld [vmem:[%s165 + $0x170] sm:$0xff]
      %v227 = vld [vmem:[%s165 + $0x178] sm:$0xff]
      %v228 = vld [vmem:[%s165 + $0x180] sm:$0xff]
      %v229 = vld [vmem:[%s165 + $0x188] sm:$0xff]
      %v230 = vld [vmem:[%s165 + $0x190] sm:$0xff]
      %v231 = vld [vmem:[%s165 + $0x198] sm:$0xff]
      %v232 = vld [vmem:[%s165 + $0x1a0] sm:$0xff]
      %v233 = vld [vmem:[%s165 + $0x1a8] sm:$0xff]
      %v234 = vld [vmem:[%s165 + $0x1b0] sm:$0xff]
      %v235 = vld [vmem:[%s165 + $0x1b8] sm:$0xff]
      %v236 = vld [vmem:[%s165 + $0x1c0] sm:$0xff]
      %v237 = vld [vmem:[%s165 + $0x1c8] sm:$0xff]
      %v238 = vld [vmem:[%s165 + $0x1d0] sm:$0xff]
      %v239 = vld [vmem:[%s165 + $0x1d8] sm:$0xff]
      %v240 = vld [vmem:[%s165 + $0x1e0] sm:$0xff]
      %v241 = vld [vmem:[%s165 + $0x1e8] sm:$0xff]
      %v242 = vld [vmem:[%s165 + $0x1f0] sm:$0xff]
      %v243 = vld [vmem:[%s165 + $0x1f8] sm:$0xff]
      %v244 = vld [vmem:[%s165 + $0x200] sm:$0xff]
      %v245 = vld [vmem:[%s165 + $0x208] sm:$0xff]
      %v246 = vld [vmem:[%s165 + $0x210] sm:$0xff]
      %v247 = vld [vmem:[%s165 + $0x218] sm:$0xff]
      %v248 = vld [vmem:[%s165 + $0x220] sm:$0xff]
      %v249 = vld [vmem:[%s165 + $0x228] sm:$0xff]
      %v250 = vld [vmem:[%s165 + $0x230] sm:$0xff]
      %v251 = vld [vmem:[%s165 + $0x238] sm:$0xff]
      %v252 = vld [vmem:[%s165 + $0x240] sm:$0xff]
      %v253 = vld [vmem:[%s165 + $0x248] sm:$0xff]
      %v254 = vld [vmem:[%s165 + $0x250] sm:$0xff]
      %v255 = vld [vmem:[%s165 + $0x258] sm:$0xff]
      %v256 = vld [vmem:[%s165 + $0x260] sm:$0xff]
      %v257 = vld [vmem:[%s165 + $0x268] sm:$0xff]
      %v258 = vld [vmem:[%s165 + $0x270] sm:$0xff]
      %v259 = vld [vmem:[%s165 + $0x278] sm:$0xff]
      %v260 = vld [vmem:[%s165 + $0x280] sm:$0xff]
      %v261 = vld [vmem:[%s165 + $0x288] sm:$0xff]
      %v262 = vld [vmem:[%s165 + $0x290] sm:$0xff]
      %v263 = vld [vmem:[%s165 + $0x298] sm:$0xff]
      %v264 = vld [vmem:[%s165 + $0x2a0] sm:$0xff]
      %v265 = vld [vmem:[%s165 + $0x2a8] sm:$0xff]
      %v266 = vld [vmem:[%s165 + $0x2b0] sm:$0xff]
      %v267 = vld [vmem:[%s165 + $0x2b8] sm:$0xff]
      %v268 = vld [vmem:[%s165 + $0x2c0] sm:$0xff]
      %v269 = vld [vmem:[%s165 + $0x2c8] sm:$0xff]
      %v270 = vld [vmem:[%s165 + $0x2d0] sm:$0xff]
      %v271 = vld [vmem:[%s165 + $0x2d8] sm:$0xff]
      %v272 = vld [vmem:[%s165 + $0x2e0] sm:$0xff]
      %v273 = vld [vmem:[%s165 + $0x2e8] sm:$0xff]
      %v274 = vld [vmem:[%s165 + $0x2f0] sm:$0xff]
      %v275 = vld [vmem:[%s165 + $0x2f8] sm:$0xff]
      %v276 = vld [vmem:[%s165 + $0x300] sm:$0xff]
      %v277 = vld [vmem:[%s165 + $0x308] sm:$0xff]
      %v278 = vld [vmem:[%s165 + $0x310] sm:$0xff]
      %v279 = vld [vmem:[%s165 + $0x318] sm:$0xff]
      %v280 = vld [vmem:[%s165 + $0x320] sm:$0xff]
      %v281 = vld [vmem:[%s165 + $0x328] sm:$0xff]
      %v282 = vld [vmem:[%s165 + $0x330] sm:$0xff]
      %v283 = vld [vmem:[%s165 + $0x338] sm:$0xff]
      %v284 = vld [vmem:[%s165 + $0x340] sm:$0xff]
      %v285 = vld [vmem:[%s165 + $0x348] sm:$0xff]
      %v286 = vld [vmem:[%s165 + $0x350] sm:$0xff]
      %v287 = vld [vmem:[%s165 + $0x358] sm:$0xff]
      %v288 = vld [vmem:[%s165 + $0x360] sm:$0xff]
      %v289 = vld [vmem:[%s165 + $0x368] sm:$0xff]
      %v290 = vld [vmem:[%s165 + $0x370] sm:$0xff]
      %v291 = vld [vmem:[%s165 + $0x378] sm:$0xff]
      %v292 = vld [vmem:[%s165 + $0x380] sm:$0xff]
      %v293 = vld [vmem:[%s165 + $0x388] sm:$0xff]
      %v294 = vld [vmem:[%s165 + $0x390] sm:$0xff]
      %v295 = vld [vmem:[%s165 + $0x398] sm:$0xff]
      %v296 = vld [vmem:[%s165 + $0x3a0] sm:$0xff]
      %v297 = vld [vmem:[%s165 + $0x3a8] sm:$0xff]
      %v298 = vld [vmem:[%s165 + $0x3b0] sm:$0xff]
      %v299 = vld [vmem:[%s165 + $0x3b8] sm:$0xff]
      %v300 = vld [vmem:[%s165 + $0x3c0] sm:$0xff]
      %v301 = vld [vmem:[%s165 + $0x3c8] sm:$0xff]
      %v302 = vld [vmem:[%s165 + $0x3d0] sm:$0xff]
      %v303 = vld [vmem:[%s165 + $0x3d8] sm:$0xff]
      %v304 = vld [vmem:[%s165 + $0x3e0] sm:$0xff]
      %v305 = vld [vmem:[%s165 + $0x3e8] sm:$0xff]
      %v306 = vld [vmem:[%s165 + $0x3f0] sm:$0xff]
      %v307 = vld [vmem:[%s165 + $0x3f8] sm:$0xff]
      %v308 = vld [vmem:[%s165 + $0x400] sm:$0xff]
      %v309 = vld [vmem:[%s165 + $0x408] sm:$0xff]
      %v310 = vld [vmem:[%s165 + $0x410] sm:$0xff]
      %v311 = vld [vmem:[%s165 + $0x418] sm:$0xff]
      %v312 = vld [vmem:[%s165 + $0x420] sm:$0xff]
      %v313 = vld [vmem:[%s165 + $0x428] sm:$0xff]
      %v314 = vld [vmem:[%s165 + $0x430] sm:$0xff]
      %v315 = vld [vmem:[%s165 + $0x438] sm:$0xff]
      %v316 = vld [vmem:[%s165 + $0x440] sm:$0xff]
      %v317 = vld [vmem:[%s165 + $0x448] sm:$0xff]
      %v318 = vld [vmem:[%s165 + $0x450] sm:$0xff]
      %v319 = vld [vmem:[%s165 + $0x458] sm:$0xff]
      %v320 = vld [vmem:[%s165 + $0x460] sm:$0xff]
      %v321 = vld [vmem:[%s165 + $0x468] sm:$0xff]
      %v322 = vld [vmem:[%s165 + $0x470] sm:$0xff]
      %v323 = vld [vmem:[%s165 + $0x478] sm:$0xff]
      %v324 = vld [vmem:[%s165 + $0x480] sm:$0xff]
      %v325 = vld [vmem:[%s165 + $0x488] sm:$0xff]
      %v326 = vld [vmem:[%s165 + $0x490] sm:$0xff]
      %v327 = vld [vmem:[%s165 + $0x498] sm:$0xff]
      %v328 = vld [vmem:[%s165 + $0x4a0] sm:$0xff]
      %v329 = vld [vmem:[%s165 + $0x4a8] sm:$0xff]
      %v330 = vld [vmem:[%s165 + $0x4b0] sm:$0xff]
      %v331 = vld [vmem:[%s165 + $0x4b8] sm:$0xff]
      %v332 = vld [vmem:[%s165 + $0x4c0] sm:$0xff]
      %v333 = vld [vmem:[%s165 + $0x4c8] sm:$0xff]
      %v334 = vld [vmem:[%s165 + $0x4d0] sm:$0xff]
      %v335 = vld [vmem:[%s165 + $0x4d8] sm:$0xff]
      %v336 = vld [vmem:[%s165 + $0x4e0] sm:$0xff]
      %v337 = vld [vmem:[%s165 + $0x4e8] sm:$0xff]
      %v338 = vld [vmem:[%s165 + $0x4f0] sm:$0xff]
      %v339 = vld [vmem:[%s165 + $0x4f8] sm:$0xff]
      %v340 = vld [vmem:[%s165 + $0x500] sm:$0xff]
      %v341 = vld [vmem:[%s165 + $0x508] sm:$0xff]
      %v342 = vld [vmem:[%s165 + $0x510] sm:$0xff]
      %v343 = vld [vmem:[%s165 + $0x518] sm:$0xff]
      %v344 = vld [vmem:[%s165 + $0x520] sm:$0xff]
      %v345 = vld [vmem:[%s165 + $0x528] sm:$0xff]
      %v346 = vld [vmem:[%s165 + $0x530] sm:$0xff]
      %v347 = vld [vmem:[%s165 + $0x538] sm:$0xff]
      %v348 = vld [vmem:[%s165 + $0x540] sm:$0xff]
      %v349 = vld [vmem:[%s165 + $0x548] sm:$0xff]
      %v350 = vld [vmem:[%s165 + $0x550] sm:$0xff]
      %v351 = vld [vmem:[%s165 + $0x558] sm:$0xff]
      %v352 = vld [vmem:[%s165 + $0x560] sm:$0xff]
      %v353 = vld [vmem:[%s165 + $0x568] sm:$0xff]
      %v354 = vld [vmem:[%s165 + $0x570] sm:$0xff]
      %v355 = vld [vmem:[%s165 + $0x578] sm:$0xff]
      %v356 = vld [vmem:[%s165 + $0x580] sm:$0xff]
      %v357 = vld [vmem:[%s165 + $0x588] sm:$0xff]
      %v358 = vld [vmem:[%s165 + $0x590] sm:$0xff]
      %v359 = vld [vmem:[%s165 + $0x598] sm:$0xff]
      %v360 = vld [vmem:[%s165 + $0x5a0] sm:$0xff]
      %v361 = vld [vmem:[%s165 + $0x5a8] sm:$0xff]
      %v362 = vld [vmem:[%s165 + $0x5b0] sm:$0xff]
      %v363 = vld [vmem:[%s165 + $0x5b8] sm:$0xff]
      %v364 = vld [vmem:[%s165 + $0x5c0] sm:$0xff]
      %v365 = vld [vmem:[%s165 + $0x5c8] sm:$0xff]
      %v366 = vld [vmem:[%s165 + $0x5d0] sm:$0xff]
      %v367 = vld [vmem:[%s165 + $0x5d8] sm:$0xff]
      %v368 = vld [vmem:[%s165 + $0x5e0] sm:$0xff]
      %v369 = vld [vmem:[%s165 + $0x5e8] sm:$0xff]
      %v370 = vld [vmem:[%s165 + $0x5f0] sm:$0xff]
      %v371 = vld [vmem:[%s165 + $0x5f8] sm:$0xff]
      %v372 = vld [vmem:[%s165 + $0x600] sm:$0xff]
      %v373 = vld [vmem:[%s165 + $0x608] sm:$0xff]
      %v374 = vld [vmem:[%s165 + $0x610] sm:$0xff]
      %v375 = vld [vmem:[%s165 + $0x618] sm:$0xff]
      %v376 = vld [vmem:[%s165 + $0x620] sm:$0xff]
      %v377 = vld [vmem:[%s165 + $0x628] sm:$0xff]
      %v378 = vld [vmem:[%s165 + $0x630] sm:$0xff]
      %v379 = vld [vmem:[%s165 + $0x638] sm:$0xff]
      %v380 = vld [vmem:[%s165 + $0x640] sm:$0xff]
      %v381 = vld [vmem:[%s165 + $0x648] sm:$0xff]
      %v382 = vld [vmem:[%s165 + $0x650] sm:$0xff]
      %v383 = vld [vmem:[%s165 + $0x658] sm:$0xff]
      %v384 = vld [vmem:[%s165 + $0x660] sm:$0xff]
      %v385 = vld [vmem:[%s165 + $0x668] sm:$0xff]
      %v386 = vld [vmem:[%s165 + $0x670] sm:$0xff]
      %v387 = vld [vmem:[%s165 + $0x678] sm:$0xff]
      %v388 = vld [vmem:[%s165 + $0x680] sm:$0xff]
      %v389 = vld [vmem:[%s165 + $0x688] sm:$0xff]
      %v390 = vld [vmem:[%s165 + $0x690] sm:$0xff]
      %v391 = vld [vmem:[%s165 + $0x698] sm:$0xff]
      %v392 = vld [vmem:[%s165 + $0x6a0] sm:$0xff]
      %v393 = vld [vmem:[%s165 + $0x6a8] sm:$0xff]
      %v394 = vld [vmem:[%s165 + $0x6b0] sm:$0xff]
      %v395 = vld [vmem:[%s165 + $0x6b8] sm:$0xff]
      %v396 = vld [vmem:[%s165 + $0x6c0] sm:$0xff]
      %v397 = vld [vmem:[%s165 + $0x6c8] sm:$0xff]
      %v398 = vld [vmem:[%s165 + $0x6d0] sm:$0xff]
      %v399 = vld [vmem:[%s165 + $0x6d8] sm:$0xff]
      %v400 = vld [vmem:[%s165 + $0x6e0] sm:$0xff]
      %v401 = vld [vmem:[%s165 + $0x6e8] sm:$0xff]
      %v402 = vld [vmem:[%s165 + $0x6f0] sm:$0xff]
      %v403 = vld [vmem:[%s165 + $0x6f8] sm:$0xff]
      %v404 = vld [vmem:[%s165 + $0x700] sm:$0xff]
      %v405 = vld [vmem:[%s165 + $0x708] sm:$0xff]
      %v406 = vld [vmem:[%s165 + $0x710] sm:$0xff]
      %v407 = vld [vmem:[%s165 + $0x718] sm:$0xff]
      %v408 = vld [vmem:[%s165 + $0x720] sm:$0xff]
      %v409 = vld [vmem:[%s165 + $0x728] sm:$0xff]
      %v410 = vld [vmem:[%s165 + $0x730] sm:$0xff]
      %v411 = vld [vmem:[%s165 + $0x738] sm:$0xff]
      %v412 = vld [vmem:[%s165 + $0x740] sm:$0xff]
      %v413 = vld [vmem:[%s165 + $0x748] sm:$0xff]
      %v414 = vld [vmem:[%s165 + $0x750] sm:$0x33]
      %v415 = vld [vmem:[%s1] sm:$0xff]
      %417 = vset.pattern.permute.xlu0 0
      %418 = vperm.xlu0 %417, %v415
      %v419 = vpop.permute.xlu0 %418
      %v429 = vunpack.c.l.b16 %v172
      %v430 = vunpack.c.h.b16 %v172
      %v431 = vunpack.c.l.b16 %v173
      %v432 = vunpack.c.h.b16 %v173
      %v433 = vunpack.c.l.b16 %v174
      %v434 = vunpack.c.h.b16 %v174
      %v435 = vunpack.c.l.b16 %v175
      %v436 = vunpack.c.h.b16 %v175
      %v437 = vunpack.c.l.b16 %v176
      %v438 = vunpack.c.h.b16 %v176
      %v439 = vunpack.c.l.b16 %v177
      %v440 = vunpack.c.h.b16 %v177
      %v441 = vunpack.c.l.b16 %v178
      %v442 = vunpack.c.h.b16 %v178
      %v443 = vunpack.c.l.b16 %v179
      %v444 = vpack.c.b16 %v429, %v429
      %v445 = vpack.c.b16 %v430, %v430
      %v446 = vpack.c.b16 %v431, %v431
      %v447 = vpack.c.b16 %v432, %v432
      %v448 = vpack.c.b16 %v433, %v433
      %v449 = vpack.c.b16 %v434, %v434
      %v450 = vpack.c.b16 %v435, %v435
      %v451 = vpack.c.b16 %v436, %v436
      %v452 = vpack.c.b16 %v437, %v437
      %v453 = vpack.c.b16 %v438, %v438
      %v454 = vpack.c.b16 %v439, %v439
      %v455 = vpack.c.b16 %v440, %v440
      %v456 = vpack.c.b16 %v441, %v441
      %v457 = vpack.c.b16 %v442, %v442
      %v458 = vpack.c.b16 %v443, %v443
      %v708 = vunpack.c.l.b16 %v180
      %v709 = vunpack.c.h.b16 %v180
      %v710 = vunpack.c.l.b16 %v181
      %v711 = vunpack.c.h.b16 %v181
      %v712 = vunpack.c.l.b16 %v182
      %v713 = vunpack.c.h.b16 %v182
      %v714 = vunpack.c.l.b16 %v183
      %v715 = vunpack.c.h.b16 %v183
      %v716 = vunpack.c.l.b16 %v184
      %v717 = vunpack.c.h.b16 %v184
      %v718 = vunpack.c.l.b16 %v185
      %v719 = vunpack.c.h.b16 %v185
      %v720 = vunpack.c.l.b16 %v186
      %v721 = vunpack.c.h.b16 %v186
      %v722 = vunpack.c.l.b16 %v187
      %v723 = vunpack.c.h.b16 %v187
      %v724 = vunpack.c.l.b16 %v188
      %v725 = vunpack.c.h.b16 %v188
      %v726 = vunpack.c.l.b16 %v189
      %v727 = vunpack.c.h.b16 %v189
      %v728 = vunpack.c.l.b16 %v190
      %v729 = vunpack.c.h.b16 %v190
      %v730 = vunpack.c.l.b16 %v191
      %v731 = vunpack.c.h.b16 %v191
      %v732 = vunpack.c.l.b16 %v192
      %v733 = vunpack.c.h.b16 %v192
      %v734 = vunpack.c.l.b16 %v193
      %v735 = vunpack.c.h.b16 %v193
      %v736 = vunpack.c.l.b16 %v194
      %v737 = vunpack.c.h.b16 %v194
      %v738 = vunpack.c.l.b16 %v195
      %v739 = vunpack.c.h.b16 %v195
      %v740 = vunpack.c.l.b16 %v196
      %v741 = vunpack.c.h.b16 %v196
      %v742 = vunpack.c.l.b16 %v197
      %v743 = vunpack.c.h.b16 %v197
      %v744 = vunpack.c.l.b16 %v198
      %v745 = vunpack.c.h.b16 %v198
      %v746 = vunpack.c.l.b16 %v199
      %v747 = vunpack.c.h.b16 %v199
      %v748 = vunpack.c.l.b16 %v200
      %v749 = vunpack.c.h.b16 %v200
      %v750 = vunpack.c.l.b16 %v201
      %v751 = vunpack.c.h.b16 %v201
      %v752 = vunpack.c.l.b16 %v202
      %v753 = vunpack.c.h.b16 %v202
      %v754 = vunpack.c.l.b16 %v203
      %v755 = vunpack.c.h.b16 %v203
      %v756 = vunpack.c.l.b16 %v204
      %v757 = vunpack.c.h.b16 %v204
      %v758 = vunpack.c.l.b16 %v205
      %v759 = vunpack.c.h.b16 %v205
      %v760 = vunpack.c.l.b16 %v206
      %v761 = vunpack.c.h.b16 %v206
      %v762 = vunpack.c.l.b16 %v207
      %v763 = vunpack.c.h.b16 %v207
      %v764 = vunpack.c.l.b16 %v208
      %v765 = vunpack.c.h.b16 %v208
      %v766 = vunpack.c.l.b16 %v209
      %v767 = vunpack.c.h.b16 %v209
      %v768 = vunpack.c.l.b16 %v210
      %v769 = vunpack.c.h.b16 %v210
      %v770 = vunpack.c.l.b16 %v211
      %v771 = vunpack.c.h.b16 %v211
      %v772 = vunpack.c.l.b16 %v212
      %v773 = vunpack.c.h.b16 %v212
      %v774 = vunpack.c.l.b16 %v213
      %v775 = vunpack.c.h.b16 %v213
      %v776 = vunpack.c.l.b16 %v214
      %v777 = vunpack.c.h.b16 %v214
      %v778 = vunpack.c.l.b16 %v215
      %v779 = vunpack.c.h.b16 %v215
      %v780 = vunpack.c.l.b16 %v216
      %v781 = vunpack.c.h.b16 %v216
      %v782 = vunpack.c.l.b16 %v217
      %v783 = vunpack.c.h.b16 %v217
      %v784 = vunpack.c.l.b16 %v218
      %v785 = vunpack.c.h.b16 %v218
      %v786 = vunpack.c.l.b16 %v219
      %v787 = vunpack.c.h.b16 %v219
      %v788 = vunpack.c.l.b16 %v220
      %v789 = vunpack.c.h.b16 %v220
      %v790 = vunpack.c.l.b16 %v221
      %v791 = vunpack.c.h.b16 %v221
      %v792 = vunpack.c.l.b16 %v222
      %v793 = vunpack.c.h.b16 %v222
      %v794 = vunpack.c.l.b16 %v223
      %v795 = vunpack.c.h.b16 %v223
      %v796 = vunpack.c.l.b16 %v224
      %v797 = vunpack.c.h.b16 %v224
      %v798 = vunpack.c.l.b16 %v225
      %v799 = vunpack.c.h.b16 %v225
      %v800 = vunpack.c.l.b16 %v226
      %v801 = vunpack.c.h.b16 %v226
      %v802 = vunpack.c.l.b16 %v227
      %v803 = vunpack.c.h.b16 %v227
      %v804 = vunpack.c.l.b16 %v228
      %v805 = vunpack.c.h.b16 %v228
      %v806 = vunpack.c.l.b16 %v229
      %v807 = vunpack.c.h.b16 %v229
      %v808 = vunpack.c.l.b16 %v230
      %v809 = vunpack.c.h.b16 %v230
      %v810 = vunpack.c.l.b16 %v231
      %v811 = vunpack.c.h.b16 %v231
      %v812 = vunpack.c.l.b16 %v232
      %v813 = vunpack.c.h.b16 %v232
      %v814 = vunpack.c.l.b16 %v233
      %v815 = vunpack.c.h.b16 %v233
      %v816 = vunpack.c.l.b16 %v234
      %v817 = vunpack.c.h.b16 %v234
      %v818 = vunpack.c.l.b16 %v235
      %v819 = vunpack.c.h.b16 %v235
      %v820 = vunpack.c.l.b16 %v236
      %v821 = vunpack.c.h.b16 %v236
      %v822 = vunpack.c.l.b16 %v237
      %v823 = vunpack.c.h.b16 %v237
      %v824 = vunpack.c.l.b16 %v238
      %v825 = vunpack.c.h.b16 %v238
      %v826 = vunpack.c.l.b16 %v239
      %v827 = vunpack.c.h.b16 %v239
      %v828 = vunpack.c.l.b16 %v240
      %v829 = vunpack.c.h.b16 %v240
      %v830 = vunpack.c.l.b16 %v241
      %v831 = vunpack.c.h.b16 %v241
      %v832 = vunpack.c.l.b16 %v242
      %v833 = vunpack.c.h.b16 %v242
      %v834 = vunpack.c.l.b16 %v243
      %v835 = vunpack.c.h.b16 %v243
      %v836 = vunpack.c.l.b16 %v244
      %v837 = vunpack.c.h.b16 %v244
      %v838 = vunpack.c.l.b16 %v245
      %v839 = vunpack.c.h.b16 %v245
      %v840 = vunpack.c.l.b16 %v246
      %v841 = vunpack.c.h.b16 %v246
      %v842 = vunpack.c.l.b16 %v247
      %v843 = vunpack.c.h.b16 %v247
      %v844 = vunpack.c.l.b16 %v248
      %v845 = vunpack.c.h.b16 %v248
      %v846 = vunpack.c.l.b16 %v249
      %v847 = vunpack.c.h.b16 %v249
      %v848 = vunpack.c.l.b16 %v250
      %v849 = vunpack.c.h.b16 %v250
      %v850 = vunpack.c.l.b16 %v251
      %v851 = vunpack.c.h.b16 %v251
      %v852 = vunpack.c.l.b16 %v252
      %v853 = vunpack.c.h.b16 %v252
      %v854 = vunpack.c.l.b16 %v253
      %v855 = vunpack.c.h.b16 %v253
      %v856 = vunpack.c.l.b16 %v254
      %v857 = vunpack.c.h.b16 %v254
      %v858 = vunpack.c.l.b16 %v255
      %v859 = vunpack.c.h.b16 %v255
      %v860 = vunpack.c.l.b16 %v256
      %v861 = vunpack.c.h.b16 %v256
      %v862 = vunpack.c.l.b16 %v257
      %v863 = vunpack.c.h.b16 %v257
      %v864 = vunpack.c.l.b16 %v258
      %v865 = vunpack.c.h.b16 %v258
      %v866 = vunpack.c.l.b16 %v259
      %v867 = vunpack.c.h.b16 %v259
      %v868 = vunpack.c.l.b16 %v260
      %v869 = vunpack.c.h.b16 %v260
      %v870 = vunpack.c.l.b16 %v261
      %v871 = vunpack.c.h.b16 %v261
      %v872 = vunpack.c.l.b16 %v262
      %v873 = vunpack.c.h.b16 %v262
      %v874 = vunpack.c.l.b16 %v263
      %v875 = vunpack.c.h.b16 %v263
      %v876 = vunpack.c.l.b16 %v264
      %v877 = vunpack.c.h.b16 %v264
      %v878 = vunpack.c.l.b16 %v265
      %v879 = vunpack.c.h.b16 %v265
      %v880 = vunpack.c.l.b16 %v266
      %v881 = vunpack.c.h.b16 %v266
      %v882 = vunpack.c.l.b16 %v267
      %v883 = vunpack.c.h.b16 %v267
      %v884 = vunpack.c.l.b16 %v268
      %v885 = vunpack.c.h.b16 %v268
      %v886 = vunpack.c.l.b16 %v269
      %v887 = vunpack.c.h.b16 %v269
      %v888 = vunpack.c.l.b16 %v270
      %v889 = vunpack.c.h.b16 %v270
      %v890 = vunpack.c.l.b16 %v271
      %v891 = vunpack.c.h.b16 %v271
      %v892 = vunpack.c.l.b16 %v272
      %v893 = vunpack.c.h.b16 %v272
      %v894 = vunpack.c.l.b16 %v273
      %v895 = vunpack.c.h.b16 %v273
      %v896 = vunpack.c.l.b16 %v274
      %v897 = vunpack.c.h.b16 %v274
      %v898 = vunpack.c.l.b16 %v275
      %v899 = vunpack.c.h.b16 %v275
      %v900 = vunpack.c.l.b16 %v276
      %v901 = vunpack.c.h.b16 %v276
      %v902 = vunpack.c.l.b16 %v277
      %v903 = vunpack.c.h.b16 %v277
      %v904 = vunpack.c.l.b16 %v278
      %v905 = vunpack.c.h.b16 %v278
      %v906 = vunpack.c.l.b16 %v279
      %v907 = vunpack.c.h.b16 %v279
      %v908 = vunpack.c.l.b16 %v280
      %v909 = vunpack.c.h.b16 %v280
      %v910 = vunpack.c.l.b16 %v281
      %v911 = vunpack.c.h.b16 %v281
      %v912 = vunpack.c.l.b16 %v282
      %v913 = vunpack.c.h.b16 %v282
      %v914 = vunpack.c.l.b16 %v283
      %v915 = vunpack.c.h.b16 %v283
      %v916 = vunpack.c.l.b16 %v284
      %v917 = vunpack.c.h.b16 %v284
      %v918 = vunpack.c.l.b16 %v285
      %v919 = vunpack.c.h.b16 %v285
      %v920 = vunpack.c.l.b16 %v286
      %v921 = vunpack.c.h.b16 %v286
      %v922 = vunpack.c.l.b16 %v287
      %v923 = vunpack.c.h.b16 %v287
      %v924 = vunpack.c.l.b16 %v288
      %v925 = vunpack.c.h.b16 %v288
      %v926 = vunpack.c.l.b16 %v289
      %v927 = vunpack.c.h.b16 %v289
      %v928 = vunpack.c.l.b16 %v290
      %v929 = vunpack.c.h.b16 %v290
      %v930 = vunpack.c.l.b16 %v291
      %v931 = vunpack.c.h.b16 %v291
      %v932 = vunpack.c.l.b16 %v292
      %v933 = vunpack.c.h.b16 %v292
      %v934 = vunpack.c.l.b16 %v293
      %v935 = vunpack.c.h.b16 %v293
      %v936 = vunpack.c.l.b16 %v294
      %v937 = vunpack.c.h.b16 %v294
      %v938 = vunpack.c.l.b16 %v295
      %v939 = vunpack.c.h.b16 %v295
      %v940 = vunpack.c.l.b16 %v296
      %v941 = vunpack.c.h.b16 %v296
      %v942 = vunpack.c.l.b16 %v297
      %v943 = vunpack.c.h.b16 %v297
      %v944 = vunpack.c.l.b16 %v298
      %v945 = vunpack.c.h.b16 %v298
      %v946 = vunpack.c.l.b16 %v299
      %v947 = vunpack.c.h.b16 %v299
      %v948 = vunpack.c.l.b16 %v300
      %v949 = vunpack.c.h.b16 %v300
      %v950 = vunpack.c.l.b16 %v301
      %v951 = vunpack.c.h.b16 %v301
      %v952 = vunpack.c.l.b16 %v302
      %v953 = vunpack.c.h.b16 %v302
      %v954 = vunpack.c.l.b16 %v303
      %v955 = vunpack.c.h.b16 %v303
      %v956 = vunpack.c.l.b16 %v304
      %v957 = vunpack.c.h.b16 %v304
      %v958 = vunpack.c.l.b16 %v305
      %v959 = vunpack.c.h.b16 %v305
      %v960 = vunpack.c.l.b16 %v306
      %v961 = vunpack.c.h.b16 %v306
      %v962 = vunpack.c.l.b16 %v307
      %v963 = vunpack.c.h.b16 %v307
      %v964 = vunpack.c.l.b16 %v308
      %v965 = vunpack.c.h.b16 %v308
      %v966 = vunpack.c.l.b16 %v309
      %v967 = vunpack.c.h.b16 %v309
      %v968 = vunpack.c.l.b16 %v310
      %v969 = vunpack.c.h.b16 %v310
      %v970 = vunpack.c.l.b16 %v311
      %v971 = vunpack.c.h.b16 %v311
      %v972 = vunpack.c.l.b16 %v312
      %v973 = vunpack.c.h.b16 %v312
      %v974 = vunpack.c.l.b16 %v313
      %v975 = vunpack.c.h.b16 %v313
      %v976 = vunpack.c.l.b16 %v314
      %v977 = vunpack.c.h.b16 %v314
      %v978 = vunpack.c.l.b16 %v315
      %v979 = vunpack.c.h.b16 %v315
      %v980 = vunpack.c.l.b16 %v316
      %v981 = vunpack.c.h.b16 %v316
      %v982 = vunpack.c.l.b16 %v317
      %v983 = vunpack.c.h.b16 %v317
      %v984 = vunpack.c.l.b16 %v318
      %v985 = vunpack.c.h.b16 %v318
      %v986 = vunpack.c.l.b16 %v319
      %v987 = vunpack.c.h.b16 %v319
      %v988 = vunpack.c.l.b16 %v320
      %v989 = vunpack.c.h.b16 %v320
      %v990 = vunpack.c.l.b16 %v321
      %v991 = vunpack.c.h.b16 %v321
      %v992 = vunpack.c.l.b16 %v322
      %v993 = vunpack.c.h.b16 %v322
      %v994 = vunpack.c.l.b16 %v323
      %v995 = vunpack.c.h.b16 %v323
      %v996 = vunpack.c.l.b16 %v324
      %v997 = vunpack.c.h.b16 %v324
      %v998 = vunpack.c.l.b16 %v325
      %v999 = vunpack.c.h.b16 %v325
      %v1000 = vunpack.c.l.b16 %v326
      %v1001 = vunpack.c.h.b16 %v326
      %v1002 = vunpack.c.l.b16 %v327
      %v1003 = vunpack.c.h.b16 %v327
      %v1004 = vunpack.c.l.b16 %v328
      %v1005 = vunpack.c.h.b16 %v328
      %v1006 = vunpack.c.l.b16 %v329
      %v1007 = vunpack.c.h.b16 %v329
      %v1008 = vunpack.c.l.b16 %v330
      %v1009 = vunpack.c.h.b16 %v330
      %v1010 = vunpack.c.l.b16 %v331
      %v1011 = vunpack.c.h.b16 %v331
      %v1012 = vunpack.c.l.b16 %v332
      %v1013 = vunpack.c.h.b16 %v332
      %v1014 = vunpack.c.l.b16 %v333
      %v1015 = vunpack.c.h.b16 %v333
      %v1016 = vunpack.c.l.b16 %v334
      %v1017 = vunpack.c.h.b16 %v334
      %v1018 = vunpack.c.l.b16 %v335
      %v1019 = vunpack.c.h.b16 %v335
      %v1020 = vunpack.c.l.b16 %v336
      %v1021 = vunpack.c.h.b16 %v336
      %v1022 = vunpack.c.l.b16 %v337
      %v1023 = vunpack.c.h.b16 %v337
      %v1024 = vunpack.c.l.b16 %v338
      %v1025 = vunpack.c.h.b16 %v338
      %v1026 = vunpack.c.l.b16 %v339
      %v1027 = vunpack.c.h.b16 %v339
      %v1028 = vunpack.c.l.b16 %v340
      %v1029 = vunpack.c.h.b16 %v340
      %v1030 = vunpack.c.l.b16 %v341
      %v1031 = vunpack.c.h.b16 %v341
      %v1032 = vunpack.c.l.b16 %v342
      %v1033 = vunpack.c.h.b16 %v342
      %v1034 = vunpack.c.l.b16 %v343
      %v1035 = vunpack.c.h.b16 %v343
      %v1036 = vunpack.c.l.b16 %v344
      %v1037 = vunpack.c.h.b16 %v344
      %v1038 = vunpack.c.l.b16 %v345
      %v1039 = vunpack.c.h.b16 %v345
      %v1040 = vunpack.c.l.b16 %v346
      %v1041 = vunpack.c.h.b16 %v346
      %v1042 = vunpack.c.l.b16 %v347
      %v1043 = vunpack.c.h.b16 %v347
      %v1044 = vunpack.c.l.b16 %v348
      %v1045 = vunpack.c.h.b16 %v348
      %v1046 = vunpack.c.l.b16 %v349
      %v1047 = vunpack.c.h.b16 %v349
      %v1048 = vunpack.c.l.b16 %v350
      %v1049 = vunpack.c.h.b16 %v350
      %v1050 = vunpack.c.l.b16 %v351
      %v1051 = vunpack.c.h.b16 %v351
      %v1052 = vunpack.c.l.b16 %v352
      %v1053 = vunpack.c.h.b16 %v352
      %v1054 = vunpack.c.l.b16 %v353
      %v1055 = vunpack.c.h.b16 %v353
      %v1056 = vunpack.c.l.b16 %v354
      %v1057 = vunpack.c.h.b16 %v354
      %v1058 = vunpack.c.l.b16 %v355
      %v1059 = vunpack.c.h.b16 %v355
      %v1060 = vunpack.c.l.b16 %v356
      %v1061 = vunpack.c.h.b16 %v356
      %v1062 = vunpack.c.l.b16 %v357
      %v1063 = vunpack.c.h.b16 %v357
      %v1064 = vunpack.c.l.b16 %v358
      %v1065 = vunpack.c.h.b16 %v358
      %v1066 = vunpack.c.l.b16 %v359
      %v1067 = vunpack.c.h.b16 %v359
      %v1068 = vunpack.c.l.b16 %v360
      %v1069 = vunpack.c.h.b16 %v360
      %v1070 = vunpack.c.l.b16 %v361
      %v1071 = vunpack.c.h.b16 %v361
      %v1072 = vunpack.c.l.b16 %v362
      %v1073 = vunpack.c.h.b16 %v362
      %v1074 = vunpack.c.l.b16 %v363
      %v1075 = vunpack.c.h.b16 %v363
      %v1076 = vunpack.c.l.b16 %v364
      %v1077 = vunpack.c.h.b16 %v364
      %v1078 = vunpack.c.l.b16 %v365
      %v1079 = vunpack.c.h.b16 %v365
      %v1080 = vunpack.c.l.b16 %v366
      %v1081 = vunpack.c.h.b16 %v366
      %v1082 = vunpack.c.l.b16 %v367
      %v1083 = vunpack.c.h.b16 %v367
      %v1084 = vunpack.c.l.b16 %v368
      %v1085 = vunpack.c.h.b16 %v368
      %v1086 = vunpack.c.l.b16 %v369
      %v1087 = vunpack.c.h.b16 %v369
      %v1088 = vunpack.c.l.b16 %v370
      %v1089 = vunpack.c.h.b16 %v370
      %v1090 = vunpack.c.l.b16 %v371
      %v1091 = vunpack.c.h.b16 %v371
      %v1092 = vunpack.c.l.b16 %v372
      %v1093 = vunpack.c.h.b16 %v372
      %v1094 = vunpack.c.l.b16 %v373
      %v1095 = vunpack.c.h.b16 %v373
      %v1096 = vunpack.c.l.b16 %v374
      %v1097 = vunpack.c.h.b16 %v374
      %v1098 = vunpack.c.l.b16 %v375
      %v1099 = vunpack.c.h.b16 %v375
      %v1100 = vunpack.c.l.b16 %v376
      %v1101 = vunpack.c.h.b16 %v376
      %v1102 = vunpack.c.l.b16 %v377
      %v1103 = vunpack.c.h.b16 %v377
      %v1104 = vunpack.c.l.b16 %v378
      %v1105 = vunpack.c.h.b16 %v378
      %v1106 = vunpack.c.l.b16 %v379
      %v1107 = vunpack.c.h.b16 %v379
      %v1108 = vunpack.c.l.b16 %v380
      %v1109 = vunpack.c.h.b16 %v380
      %v1110 = vunpack.c.l.b16 %v381
      %v1111 = vunpack.c.h.b16 %v381
      %v1112 = vunpack.c.l.b16 %v382
      %v1113 = vunpack.c.h.b16 %v382
      %v1114 = vunpack.c.l.b16 %v383
      %v1115 = vunpack.c.h.b16 %v383
      %v1116 = vunpack.c.l.b16 %v384
      %v1117 = vunpack.c.h.b16 %v384
      %v1118 = vunpack.c.l.b16 %v385
      %v1119 = vunpack.c.h.b16 %v385
      %v1120 = vunpack.c.l.b16 %v386
      %v1121 = vunpack.c.h.b16 %v386
      %v1122 = vunpack.c.l.b16 %v387
      %v1123 = vunpack.c.h.b16 %v387
      %v1124 = vunpack.c.l.b16 %v388
      %v1125 = vunpack.c.h.b16 %v388
      %v1126 = vunpack.c.l.b16 %v389
      %v1127 = vunpack.c.h.b16 %v389
      %v1128 = vunpack.c.l.b16 %v390
      %v1129 = vunpack.c.h.b16 %v390
      %v1130 = vunpack.c.l.b16 %v391
      %v1131 = vunpack.c.h.b16 %v391
      %v1132 = vunpack.c.l.b16 %v392
      %v1133 = vunpack.c.h.b16 %v392
      %v1134 = vunpack.c.l.b16 %v393
      %v1135 = vunpack.c.h.b16 %v393
      %v1136 = vunpack.c.l.b16 %v394
      %v1137 = vunpack.c.h.b16 %v394
      %v1138 = vunpack.c.l.b16 %v395
      %v1139 = vunpack.c.h.b16 %v395
      %v1140 = vunpack.c.l.b16 %v396
      %v1141 = vunpack.c.h.b16 %v396
      %v1142 = vunpack.c.l.b16 %v397
      %v1143 = vunpack.c.h.b16 %v397
      %v1144 = vunpack.c.l.b16 %v398
      %v1145 = vunpack.c.h.b16 %v398
      %v1146 = vunpack.c.l.b16 %v399
      %v1147 = vunpack.c.h.b16 %v399
      %v1148 = vunpack.c.l.b16 %v400
      %v1149 = vunpack.c.h.b16 %v400
      %v1150 = vunpack.c.l.b16 %v401
      %v1151 = vunpack.c.h.b16 %v401
      %v1152 = vunpack.c.l.b16 %v402
      %v1153 = vunpack.c.h.b16 %v402
      %v1154 = vunpack.c.l.b16 %v403
      %v1155 = vunpack.c.h.b16 %v403
      %v1156 = vunpack.c.l.b16 %v404
      %v1157 = vunpack.c.h.b16 %v404
      %v1158 = vunpack.c.l.b16 %v405
      %v1159 = vunpack.c.h.b16 %v405
      %v1160 = vunpack.c.l.b16 %v406
      %v1161 = vunpack.c.h.b16 %v406
      %v1162 = vunpack.c.l.b16 %v407
      %v1163 = vunpack.c.h.b16 %v407
      %v1164 = vunpack.c.l.b16 %v408
      %v1165 = vunpack.c.h.b16 %v408
      %v1166 = vunpack.c.l.b16 %v409
      %v1167 = vunpack.c.h.b16 %v409
      %v1168 = vunpack.c.l.b16 %v410
      %v1169 = vunpack.c.h.b16 %v410
      %v1170 = vunpack.c.l.b16 %v411
      %v1171 = vunpack.c.h.b16 %v411
      %v1172 = vunpack.c.l.b16 %v412
      %v1173 = vunpack.c.h.b16 %v412
      %v1174 = vunpack.c.l.b16 %v413
      %v1175 = vunpack.c.h.b16 %v413
      %v1176 = vunpack.c.l.b16 %v414
      %v1177 = vunpack.c.h.b16 %v414
      %v1178 = vpack.c.b16 %v710, %v708
      %v1179 = vpack.c.b16 %v711, %v709
      %v1180 = vpack.c.b16 %v714, %v712
      %v1181 = vpack.c.b16 %v715, %v713
      %v1182 = vpack.c.b16 %v718, %v716
      %v1183 = vpack.c.b16 %v719, %v717
      %v1184 = vpack.c.b16 %v722, %v720
      %v1185 = vpack.c.b16 %v723, %v721
      %v1186 = vpack.c.b16 %v726, %v724
      %v1187 = vpack.c.b16 %v727, %v725
      %v1188 = vpack.c.b16 %v730, %v728
      %v1189 = vpack.c.b16 %v731, %v729
      %v1190 = vpack.c.b16 %v734, %v732
      %v1191 = vpack.c.b16 %v735, %v733
      %v1192 = vpack.c.b16 %v738, %v736
      %v1193 = vpack.c.b16 %v739, %v737
      %v1194 = vpack.c.b16 %v742, %v740
      %v1195 = vpack.c.b16 %v743, %v741
      %v1196 = vpack.c.b16 %v746, %v744
      %v1197 = vpack.c.b16 %v747, %v745
      %v1198 = vpack.c.b16 %v750, %v748
      %v1199 = vpack.c.b16 %v751, %v749
      %v1200 = vpack.c.b16 %v754, %v752
      %v1201 = vpack.c.b16 %v755, %v753
      %v1202 = vpack.c.b16 %v758, %v756
      %v1203 = vpack.c.b16 %v759, %v757
      %v1204 = vpack.c.b16 %v762, %v760
      %v1205 = vpack.c.b16 %v763, %v761
      %v1206 = vpack.c.b16 %v766, %v764
      %v1207 = vpack.c.b16 %v767, %v765
      %v1208 = vpack.c.b16 %v770, %v768
      %v1209 = vpack.c.b16 %v771, %v769
      %v1210 = vpack.c.b16 %v774, %v772
      %v1211 = vpack.c.b16 %v775, %v773
      %v1212 = vpack.c.b16 %v778, %v776
      %v1213 = vpack.c.b16 %v779, %v777
      %v1214 = vpack.c.b16 %v782, %v780
      %v1215 = vpack.c.b16 %v783, %v781
      %v1216 = vpack.c.b16 %v786, %v784
      %v1217 = vpack.c.b16 %v787, %v785
      %v1218 = vpack.c.b16 %v790, %v788
      %v1219 = vpack.c.b16 %v791, %v789
      %v1220 = vpack.c.b16 %v794, %v792
      %v1221 = vpack.c.b16 %v795, %v793
      %v1222 = vpack.c.b16 %v798, %v796
      %v1223 = vpack.c.b16 %v799, %v797
      %v1224 = vpack.c.b16 %v802, %v800
      %v1225 = vpack.c.b16 %v803, %v801
      %v1226 = vpack.c.b16 %v806, %v804
      %v1227 = vpack.c.b16 %v807, %v805
      %v1228 = vpack.c.b16 %v810, %v808
      %v1229 = vpack.c.b16 %v811, %v809
      %v1230 = vpack.c.b16 %v814, %v812
      %v1231 = vpack.c.b16 %v815, %v813
      %v1232 = vpack.c.b16 %v818, %v816
      %v1233 = vpack.c.b16 %v819, %v817
      %v1234 = vpack.c.b16 %v822, %v820
      %v1235 = vpack.c.b16 %v823, %v821
      %v1236 = vpack.c.b16 %v826, %v824
      %v1237 = vpack.c.b16 %v827, %v825
      %v1238 = vpack.c.b16 %v830, %v828
      %v1239 = vpack.c.b16 %v831, %v829
      %v1240 = vpack.c.b16 %v834, %v832
      %v1241 = vpack.c.b16 %v835, %v833
      %v1242 = vpack.c.b16 %v838, %v836
      %v1243 = vpack.c.b16 %v839, %v837
      %v1244 = vpack.c.b16 %v842, %v840
      %v1245 = vpack.c.b16 %v843, %v841
      %v1246 = vpack.c.b16 %v846, %v844
      %v1247 = vpack.c.b16 %v847, %v845
      %v1248 = vpack.c.b16 %v850, %v848
      %v1249 = vpack.c.b16 %v851, %v849
      %v1250 = vpack.c.b16 %v854, %v852
      %v1251 = vpack.c.b16 %v855, %v853
      %v1252 = vpack.c.b16 %v858, %v856
      %v1253 = vpack.c.b16 %v859, %v857
      %v1254 = vpack.c.b16 %v862, %v860
      %v1255 = vpack.c.b16 %v863, %v861
      %v1256 = vpack.c.b16 %v866, %v864
      %v1257 = vpack.c.b16 %v867, %v865
      %v1258 = vpack.c.b16 %v870, %v868
      %v1259 = vpack.c.b16 %v871, %v869
      %v1260 = vpack.c.b16 %v874, %v872
      %v1261 = vpack.c.b16 %v875, %v873
      %v1262 = vpack.c.b16 %v878, %v876
      %v1263 = vpack.c.b16 %v879, %v877
      %v1264 = vpack.c.b16 %v882, %v880
      %v1265 = vpack.c.b16 %v883, %v881
      %v1266 = vpack.c.b16 %v886, %v884
      %v1267 = vpack.c.b16 %v887, %v885
      %v1268 = vpack.c.b16 %v890, %v888
      %v1269 = vpack.c.b16 %v891, %v889
      %v1270 = vpack.c.b16 %v894, %v892
      %v1271 = vpack.c.b16 %v895, %v893
      %v1272 = vpack.c.b16 %v898, %v896
      %v1273 = vpack.c.b16 %v899, %v897
      %v1274 = vpack.c.b16 %v902, %v900
      %v1275 = vpack.c.b16 %v903, %v901
      %v1276 = vpack.c.b16 %v906, %v904
      %v1277 = vpack.c.b16 %v907, %v905
      %v1278 = vpack.c.b16 %v910, %v908
      %v1279 = vpack.c.b16 %v911, %v909
      %v1280 = vpack.c.b16 %v914, %v912
      %v1281 = vpack.c.b16 %v915, %v913
      %v1282 = vpack.c.b16 %v918, %v916
      %v1283 = vpack.c.b16 %v919, %v917
      %v1284 = vpack.c.b16 %v922, %v920
      %v1285 = vpack.c.b16 %v923, %v921
      %v1286 = vpack.c.b16 %v926, %v924
      %v1287 = vpack.c.b16 %v927, %v925
      %v1288 = vpack.c.b16 %v930, %v928
      %v1289 = vpack.c.b16 %v931, %v929
      %v1290 = vpack.c.b16 %v934, %v932
      %v1291 = vpack.c.b16 %v935, %v933
      %v1292 = vpack.c.b16 %v938, %v936
      %v1293 = vpack.c.b16 %v939, %v937
      %v1294 = vpack.c.b16 %v942, %v940
      %v1295 = vpack.c.b16 %v943, %v941
      %v1296 = vpack.c.b16 %v946, %v944
      %v1297 = vpack.c.b16 %v947, %v945
      %v1298 = vpack.c.b16 %v950, %v948
      %v1299 = vpack.c.b16 %v951, %v949
      %v1300 = vpack.c.b16 %v954, %v952
      %v1301 = vpack.c.b16 %v955, %v953
      %v1302 = vpack.c.b16 %v958, %v956
      %v1303 = vpack.c.b16 %v959, %v957
      %v1304 = vpack.c.b16 %v962, %v960
      %v1305 = vpack.c.b16 %v963, %v961
      %v1306 = vpack.c.b16 %v966, %v964
      %v1307 = vpack.c.b16 %v967, %v965
      %v1308 = vpack.c.b16 %v970, %v968
      %v1309 = vpack.c.b16 %v971, %v969
      %v1310 = vpack.c.b16 %v974, %v972
      %v1311 = vpack.c.b16 %v975, %v973
      %v1312 = vpack.c.b16 %v978, %v976
      %v1313 = vpack.c.b16 %v979, %v977
      %v1314 = vpack.c.b16 %v982, %v980
      %v1315 = vpack.c.b16 %v983, %v981
      %v1316 = vpack.c.b16 %v986, %v984
      %v1317 = vpack.c.b16 %v987, %v985
      %v1318 = vpack.c.b16 %v990, %v988
      %v1319 = vpack.c.b16 %v991, %v989
      %v1320 = vpack.c.b16 %v994, %v992
      %v1321 = vpack.c.b16 %v995, %v993
      %v1322 = vpack.c.b16 %v998, %v996
      %v1323 = vpack.c.b16 %v999, %v997
      %v1324 = vpack.c.b16 %v1002, %v1000
      %v1325 = vpack.c.b16 %v1003, %v1001
      %v1326 = vpack.c.b16 %v1006, %v1004
      %v1327 = vpack.c.b16 %v1007, %v1005
      %v1328 = vpack.c.b16 %v1010, %v1008
      %v1329 = vpack.c.b16 %v1011, %v1009
      %v1330 = vpack.c.b16 %v1014, %v1012
      %v1331 = vpack.c.b16 %v1015, %v1013
      %v1332 = vpack.c.b16 %v1018, %v1016
      %v1333 = vpack.c.b16 %v1019, %v1017
      %v1334 = vpack.c.b16 %v1022, %v1020
      %v1335 = vpack.c.b16 %v1023, %v1021
      %v1336 = vpack.c.b16 %v1026, %v1024
      %v1337 = vpack.c.b16 %v1027, %v1025
      %v1338 = vpack.c.b16 %v1030, %v1028
      %v1339 = vpack.c.b16 %v1031, %v1029
      %v1340 = vpack.c.b16 %v1034, %v1032
      %v1341 = vpack.c.b16 %v1035, %v1033
      %v1342 = vpack.c.b16 %v1038, %v1036
      %v1343 = vpack.c.b16 %v1039, %v1037
      %v1344 = vpack.c.b16 %v1042, %v1040
      %v1345 = vpack.c.b16 %v1043, %v1041
      %v1346 = vpack.c.b16 %v1046, %v1044
      %v1347 = vpack.c.b16 %v1047, %v1045
      %v1348 = vpack.c.b16 %v1050, %v1048
      %v1349 = vpack.c.b16 %v1051, %v1049
      %v1350 = vpack.c.b16 %v1054, %v1052
      %v1351 = vpack.c.b16 %v1055, %v1053
      %v1352 = vpack.c.b16 %v1058, %v1056
      %v1353 = vpack.c.b16 %v1059, %v1057
      %v1354 = vpack.c.b16 %v1062, %v1060
      %v1355 = vpack.c.b16 %v1063, %v1061
      %v1356 = vpack.c.b16 %v1066, %v1064
      %v1357 = vpack.c.b16 %v1067, %v1065
      %v1358 = vpack.c.b16 %v1070, %v1068
      %v1359 = vpack.c.b16 %v1071, %v1069
      %v1360 = vpack.c.b16 %v1074, %v1072
      %v1361 = vpack.c.b16 %v1075, %v1073
      %v1362 = vpack.c.b16 %v1078, %v1076
      %v1363 = vpack.c.b16 %v1079, %v1077
      %v1364 = vpack.c.b16 %v1082, %v1080
      %v1365 = vpack.c.b16 %v1083, %v1081
      %v1366 = vpack.c.b16 %v1086, %v1084
      %v1367 = vpack.c.b16 %v1087, %v1085
      %v1368 = vpack.c.b16 %v1090, %v1088
      %v1369 = vpack.c.b16 %v1091, %v1089
      %v1370 = vpack.c.b16 %v1094, %v1092
      %v1371 = vpack.c.b16 %v1095, %v1093
      %v1372 = vpack.c.b16 %v1098, %v1096
      %v1373 = vpack.c.b16 %v1099, %v1097
      %v1374 = vpack.c.b16 %v1102, %v1100
      %v1375 = vpack.c.b16 %v1103, %v1101
      %v1376 = vpack.c.b16 %v1106, %v1104
      %v1377 = vpack.c.b16 %v1107, %v1105
      %v1378 = vpack.c.b16 %v1110, %v1108
      %v1379 = vpack.c.b16 %v1111, %v1109
      %v1380 = vpack.c.b16 %v1114, %v1112
      %v1381 = vpack.c.b16 %v1115, %v1113
      %v1382 = vpack.c.b16 %v1118, %v1116
      %v1383 = vpack.c.b16 %v1119, %v1117
      %v1384 = vpack.c.b16 %v1122, %v1120
      %v1385 = vpack.c.b16 %v1123, %v1121
      %v1386 = vpack.c.b16 %v1126, %v1124
      %v1387 = vpack.c.b16 %v1127, %v1125
      %v1388 = vpack.c.b16 %v1130, %v1128
      %v1389 = vpack.c.b16 %v1131, %v1129
      %v1390 = vpack.c.b16 %v1134, %v1132
      %v1391 = vpack.c.b16 %v1135, %v1133
      %v1392 = vpack.c.b16 %v1138, %v1136
      %v1393 = vpack.c.b16 %v1139, %v1137
      %v1394 = vpack.c.b16 %v1142, %v1140
      %v1395 = vpack.c.b16 %v1143, %v1141
      %v1396 = vpack.c.b16 %v1146, %v1144
      %v1397 = vpack.c.b16 %v1147, %v1145
      %v1398 = vpack.c.b16 %v1150, %v1148
      %v1399 = vpack.c.b16 %v1151, %v1149
      %v1400 = vpack.c.b16 %v1154, %v1152
      %v1401 = vpack.c.b16 %v1155, %v1153
      %v1402 = vpack.c.b16 %v1158, %v1156
      %v1403 = vpack.c.b16 %v1159, %v1157
      %v1404 = vpack.c.b16 %v1162, %v1160
      %v1405 = vpack.c.b16 %v1163, %v1161
      %v1406 = vpack.c.b16 %v1166, %v1164
      %v1407 = vpack.c.b16 %v1167, %v1165
      %v1408 = vpack.c.b16 %v1170, %v1168
      %v1409 = vpack.c.b16 %v1171, %v1169
      %v1410 = vpack.c.b16 %v1174, %v1172
      %v1411 = vpack.c.b16 %v1175, %v1173
      %v1412 = vpack.c.b16 %v1176, %v1176
      %v1413 = vpack.c.b16 %v1177, %v1177
      %vm1648 = vcmask 678912
      %v1650 = vsel %vm1648, %v458, 0
      %vm1652 = vcmask 1040384
      %vm1653 = vcmask 1041408
      %v1654 = vsel %vm1652, 4294967295, 65535
      %v1655 = vsel %vm1653, %v1654, 0
      %v1657 = vand.u32 %v1412, %v1655
      %v1660 = vand.u32 %v1413, %v1655
      %1662 = vmatpush.bf16.msra.mxu0 %v1192
      %1663 = vmatpush.bf16.msra.mxu0 %v1190
      %1664 = vmatpush.bf16.msra.mxu0 %v1188
      %1665 = vmatpush.bf16.msra.mxu0 %v1186
      %1666 = vmatpush.bf16.msra.mxu0 %v1184
      %1667 = vmatpush.bf16.msra.mxu0 %v1182
      %1668 = vmatpush.bf16.msra.mxu0 %v1180
      %1669 = vmatpush.bf16.msra.mxu0 %v1178
      %1670 = vmatmul.bf16.gmra.mxu0 %v444
      %v1671 = vpop.f32.mrf.mxu0
      %v1672 = vadd.f32 %v419, %v1671
      %v1673 = vpop.f32.mrf.mxu0
      %1674 = vdwg.mxu0
      %1675 = vmatpush.bf16.msra.mxu0 %v1208
      %1676 = vmatpush.bf16.msra.mxu0 %v1206
      %1677 = vmatpush.bf16.msra.mxu0 %v1204
      %1678 = vmatpush.bf16.msra.mxu0 %v1202
      %1679 = vmatpush.bf16.msra.mxu0 %v1200
      %1680 = vmatpush.bf16.msra.mxu0 %v1198
      %1681 = vmatpush.bf16.msra.mxu0 %v1196
      %1682 = vmatpush.bf16.msra.mxu0 %v1194
      %1683 = vmatmul.bf16.gmra.mxu0 %v445
      %v1684 = vpop.f32.mrf.mxu0
      %v1685 = vadd.f32 %v1672, %v1684
      %v1686 = vpop.f32.mrf.mxu0
      %1687 = vdwg.mxu0
      %1688 = vmatpush.bf16.msra.mxu0 %v1224
      %1689 = vmatpush.bf16.msra.mxu0 %v1222
      %1690 = vmatpush.bf16.msra.mxu0 %v1220
      %1691 = vmatpush.bf16.msra.mxu0 %v1218
      %1692 = vmatpush.bf16.msra.mxu0 %v1216
      %1693 = vmatpush.bf16.msra.mxu0 %v1214
      %1694 = vmatpush.bf16.msra.mxu0 %v1212
      %1695 = vmatpush.bf16.msra.mxu0 %v1210
      %1696 = vmatmul.bf16.gmra.mxu0 %v446
      %v1697 = vpop.f32.mrf.mxu0
      %v1698 = vadd.f32 %v1685, %v1697
      %v1699 = vpop.f32.mrf.mxu0
      %1700 = vdwg.mxu0
      %1701 = vmatpush.bf16.msra.mxu0 %v1240
      %1702 = vmatpush.bf16.msra.mxu0 %v1238
      %1703 = vmatpush.bf16.msra.mxu0 %v1236
      %1704 = vmatpush.bf16.msra.mxu0 %v1234
      %1705 = vmatpush.bf16.msra.mxu0 %v1232
      %1706 = vmatpush.bf16.msra.mxu0 %v1230
      %1707 = vmatpush.bf16.msra.mxu0 %v1228
      %1708 = vmatpush.bf16.msra.mxu0 %v1226
      %1709 = vmatmul.bf16.gmra.mxu0 %v447
      %v1710 = vpop.f32.mrf.mxu0
      %v1711 = vadd.f32 %v1698, %v1710
      %v1712 = vpop.f32.mrf.mxu0
      %1713 = vdwg.mxu0
      %1714 = vmatpush.bf16.msra.mxu0 %v1256
      %1715 = vmatpush.bf16.msra.mxu0 %v1254
      %1716 = vmatpush.bf16.msra.mxu0 %v1252
      %1717 = vmatpush.bf16.msra.mxu0 %v1250
      %1718 = vmatpush.bf16.msra.mxu0 %v1248
      %1719 = vmatpush.bf16.msra.mxu0 %v1246
      %1720 = vmatpush.bf16.msra.mxu0 %v1244
      %1721 = vmatpush.bf16.msra.mxu0 %v1242
      %1722 = vmatmul.bf16.gmra.mxu0 %v448
      %v1723 = vpop.f32.mrf.mxu0
      %v1724 = vadd.f32 %v1711, %v1723
      %v1725 = vpop.f32.mrf.mxu0
      %1726 = vdwg.mxu0
      %1727 = vmatpush.bf16.msra.mxu0 %v1272
      %1728 = vmatpush.bf16.msra.mxu0 %v1270
      %1729 = vmatpush.bf16.msra.mxu0 %v1268
      %1730 = vmatpush.bf16.msra.mxu0 %v1266
      %1731 = vmatpush.bf16.msra.mxu0 %v1264
      %1732 = vmatpush.bf16.msra.mxu0 %v1262
      %1733 = vmatpush.bf16.msra.mxu0 %v1260
      %1734 = vmatpush.bf16.msra.mxu0 %v1258
      %1735 = vmatmul.bf16.gmra.mxu0 %v449
      %v1736 = vpop.f32.mrf.mxu0
      %v1737 = vadd.f32 %v1724, %v1736
      %v1738 = vpop.f32.mrf.mxu0
      %1739 = vdwg.mxu0
      %1740 = vmatpush.bf16.msra.mxu0 %v1288
      %1741 = vmatpush.bf16.msra.mxu0 %v1286
      %1742 = vmatpush.bf16.msra.mxu0 %v1284
      %1743 = vmatpush.bf16.msra.mxu0 %v1282
      %1744 = vmatpush.bf16.msra.mxu0 %v1280
      %1745 = vmatpush.bf16.msra.mxu0 %v1278
      %1746 = vmatpush.bf16.msra.mxu0 %v1276
      %1747 = vmatpush.bf16.msra.mxu0 %v1274
      %1748 = vmatmul.bf16.gmra.mxu0 %v450
      %v1749 = vpop.f32.mrf.mxu0
      %v1750 = vadd.f32 %v1737, %v1749
      %v1751 = vpop.f32.mrf.mxu0
      %1752 = vdwg.mxu0
      %1753 = vmatpush.bf16.msra.mxu0 %v1304
      %1754 = vmatpush.bf16.msra.mxu0 %v1302
      %1755 = vmatpush.bf16.msra.mxu0 %v1300
      %1756 = vmatpush.bf16.msra.mxu0 %v1298
      %1757 = vmatpush.bf16.msra.mxu0 %v1296
      %1758 = vmatpush.bf16.msra.mxu0 %v1294
      %1759 = vmatpush.bf16.msra.mxu0 %v1292
      %1760 = vmatpush.bf16.msra.mxu0 %v1290
      %1761 = vmatmul.bf16.gmra.mxu0 %v451
      %v1762 = vpop.f32.mrf.mxu0
      %v1763 = vadd.f32 %v1750, %v1762
      %v1764 = vpop.f32.mrf.mxu0
      %1765 = vdwg.mxu0
      %1766 = vmatpush.bf16.msra.mxu0 %v1320
      %1767 = vmatpush.bf16.msra.mxu0 %v1318
      %1768 = vmatpush.bf16.msra.mxu0 %v1316
      %1769 = vmatpush.bf16.msra.mxu0 %v1314
      %1770 = vmatpush.bf16.msra.mxu0 %v1312
      %1771 = vmatpush.bf16.msra.mxu0 %v1310
      %1772 = vmatpush.bf16.msra.mxu0 %v1308
      %1773 = vmatpush.bf16.msra.mxu0 %v1306
      %1774 = vmatmul.bf16.gmra.mxu0 %v452
      %v1775 = vpop.f32.mrf.mxu0
      %v1776 = vadd.f32 %v1763, %v1775
      %v1777 = vpop.f32.mrf.mxu0
      %1778 = vdwg.mxu0
      %1779 = vmatpush.bf16.msra.mxu0 %v1336
      %1780 = vmatpush.bf16.msra.mxu0 %v1334
      %1781 = vmatpush.bf16.msra.mxu0 %v1332
      %1782 = vmatpush.bf16.msra.mxu0 %v1330
      %1783 = vmatpush.bf16.msra.mxu0 %v1328
      %1784 = vmatpush.bf16.msra.mxu0 %v1326
      %1785 = vmatpush.bf16.msra.mxu0 %v1324
      %1786 = vmatpush.bf16.msra.mxu0 %v1322
      %1787 = vmatmul.bf16.gmra.mxu0 %v453
      %v1788 = vpop.f32.mrf.mxu0
      %v1789 = vadd.f32 %v1776, %v1788
      %v1790 = vpop.f32.mrf.mxu0
      %1791 = vdwg.mxu0
      %1792 = vmatpush.bf16.msra.mxu0 %v1352
      %1793 = vmatpush.bf16.msra.mxu0 %v1350
      %1794 = vmatpush.bf16.msra.mxu0 %v1348
      %1795 = vmatpush.bf16.msra.mxu0 %v1346
      %1796 = vmatpush.bf16.msra.mxu0 %v1344
      %1797 = vmatpush.bf16.msra.mxu0 %v1342
      %1798 = vmatpush.bf16.msra.mxu0 %v1340
      %1799 = vmatpush.bf16.msra.mxu0 %v1338
      %1800 = vmatmul.bf16.gmra.mxu0 %v454
      %v1801 = vpop.f32.mrf.mxu0
      %v1802 = vadd.f32 %v1789, %v1801
      %v1803 = vpop.f32.mrf.mxu0
      %1804 = vdwg.mxu0
      %1805 = vmatpush.bf16.msra.mxu0 %v1368
      %1806 = vmatpush.bf16.msra.mxu0 %v1366
      %1807 = vmatpush.bf16.msra.mxu0 %v1364
      %1808 = vmatpush.bf16.msra.mxu0 %v1362
      %1809 = vmatpush.bf16.msra.mxu0 %v1360
      %1810 = vmatpush.bf16.msra.mxu0 %v1358
      %1811 = vmatpush.bf16.msra.mxu0 %v1356
      %1812 = vmatpush.bf16.msra.mxu0 %v1354
      %1813 = vmatmul.bf16.gmra.mxu0 %v455
      %v1814 = vpop.f32.mrf.mxu0
      %v1815 = vadd.f32 %v1802, %v1814
      %v1816 = vpop.f32.mrf.mxu0
      %1817 = vdwg.mxu0
      %1818 = vmatpush.bf16.msra.mxu0 %v1384
      %1819 = vmatpush.bf16.msra.mxu0 %v1382
      %1820 = vmatpush.bf16.msra.mxu0 %v1380
      %1821 = vmatpush.bf16.msra.mxu0 %v1378
      %1822 = vmatpush.bf16.msra.mxu0 %v1376
      %1823 = vmatpush.bf16.msra.mxu0 %v1374
      %1824 = vmatpush.bf16.msra.mxu0 %v1372
      %1825 = vmatpush.bf16.msra.mxu0 %v1370
      %1826 = vmatmul.bf16.gmra.mxu0 %v456
      %v1827 = vpop.f32.mrf.mxu0
      %v1828 = vadd.f32 %v1815, %v1827
      %v1829 = vpop.f32.mrf.mxu0
      %1830 = vdwg.mxu0
      %1831 = vmatpush.bf16.msra.mxu0 %v1400
      %1832 = vmatpush.bf16.msra.mxu0 %v1398
      %1833 = vmatpush.bf16.msra.mxu0 %v1396
      %1834 = vmatpush.bf16.msra.mxu0 %v1394
      %1835 = vmatpush.bf16.msra.mxu0 %v1392
      %1836 = vmatpush.bf16.msra.mxu0 %v1390
      %1837 = vmatpush.bf16.msra.mxu0 %v1388
      %1838 = vmatpush.bf16.msra.mxu0 %v1386
      %1839 = vmatmul.bf16.gmra.mxu0 %v457
      %v1840 = vpop.f32.mrf.mxu0
      %v1841 = vadd.f32 %v1828, %v1840
      %v1842 = vpop.f32.mrf.mxu0
      %1843 = vdwg.mxu0
      %1844 = vmatpush.bf16.msra.mxu0 0
      %1845 = vmatpush.bf16.msra.mxu0 0
      %1846 = vmatpush.bf16.msra.mxu0 %v1657
      %1847 = vmatpush.bf16.msra.mxu0 %v1410
      %1848 = vmatpush.bf16.msra.mxu0 %v1408
      %1849 = vmatpush.bf16.msra.mxu0 %v1406
      %1850 = vmatpush.bf16.msra.mxu0 %v1404
      %1851 = vmatpush.bf16.msra.mxu0 %v1402
      %1852 = vmatmul.bf16.gmra.mxu0 %v1650
      %v1853 = vpop.f32.mrf.mxu0
      %v1854 = vadd.f32 %v1841, %v1853
      %v1855 = vpop.f32.mrf.mxu0
      %1856 = vdwg.mxu0
      %1857 = vmatpush.bf16.msra.mxu0 %v1193
      %1858 = vmatpush.bf16.msra.mxu0 %v1191
      %1859 = vmatpush.bf16.msra.mxu0 %v1189
      %1860 = vmatpush.bf16.msra.mxu0 %v1187
      %1861 = vmatpush.bf16.msra.mxu0 %v1185
      %1862 = vmatpush.bf16.msra.mxu0 %v1183
      %1863 = vmatpush.bf16.msra.mxu0 %v1181
      %1864 = vmatpush.bf16.msra.mxu0 %v1179
      %1865 = vmatmul.bf16.gmra.mxu0 %v444
      %v1866 = vpop.f32.mrf.mxu0
      %v1867 = vadd.f32 %v419, %v1866
      %v1868 = vpop.f32.mrf.mxu0
      %1869 = vdwg.mxu0
      %1870 = vmatpush.bf16.msra.mxu0 %v1209
      %1871 = vmatpush.bf16.msra.mxu0 %v1207
      %1872 = vmatpush.bf16.msra.mxu0 %v1205
      %1873 = vmatpush.bf16.msra.mxu0 %v1203
      %1874 = vmatpush.bf16.msra.mxu0 %v1201
      %1875 = vmatpush.bf16.msra.mxu0 %v1199
      %1876 = vmatpush.bf16.msra.mxu0 %v1197
      %1877 = vmatpush.bf16.msra.mxu0 %v1195
      %1878 = vmatmul.bf16.gmra.mxu0 %v445
      %v1879 = vpop.f32.mrf.mxu0
      %v1880 = vadd.f32 %v1867, %v1879
      %v1881 = vpop.f32.mrf.mxu0
      %1882 = vdwg.mxu0
      %1883 = vmatpush.bf16.msra.mxu0 %v1225
      %1884 = vmatpush.bf16.msra.mxu0 %v1223
      %1885 = vmatpush.bf16.msra.mxu0 %v1221
      %1886 = vmatpush.bf16.msra.mxu0 %v1219
      %1887 = vmatpush.bf16.msra.mxu0 %v1217
      %1888 = vmatpush.bf16.msra.mxu0 %v1215
      %1889 = vmatpush.bf16.msra.mxu0 %v1213
      %1890 = vmatpush.bf16.msra.mxu0 %v1211
      %1891 = vmatmul.bf16.gmra.mxu0 %v446
      %v1892 = vpop.f32.mrf.mxu0
      %v1893 = vadd.f32 %v1880, %v1892
      %v1894 = vpop.f32.mrf.mxu0
      %1895 = vdwg.mxu0
      %1896 = vmatpush.bf16.msra.mxu0 %v1241
      %1897 = vmatpush.bf16.msra.mxu0 %v1239
      %1898 = vmatpush.bf16.msra.mxu0 %v1237
      %1899 = vmatpush.bf16.msra.mxu0 %v1235
      %1900 = vmatpush.bf16.msra.mxu0 %v1233
      %1901 = vmatpush.bf16.msra.mxu0 %v1231
      %1902 = vmatpush.bf16.msra.mxu0 %v1229
      %1903 = vmatpush.bf16.msra.mxu0 %v1227
      %1904 = vmatmul.bf16.gmra.mxu0 %v447
      %v1905 = vpop.f32.mrf.mxu0
      %v1906 = vadd.f32 %v1893, %v1905
      %v1907 = vpop.f32.mrf.mxu0
      %1908 = vdwg.mxu0
      %1909 = vmatpush.bf16.msra.mxu0 %v1257
      %1910 = vmatpush.bf16.msra.mxu0 %v1255
      %1911 = vmatpush.bf16.msra.mxu0 %v1253
      %1912 = vmatpush.bf16.msra.mxu0 %v1251
      %1913 = vmatpush.bf16.msra.mxu0 %v1249
      %1914 = vmatpush.bf16.msra.mxu0 %v1247
      %1915 = vmatpush.bf16.msra.mxu0 %v1245
      %1916 = vmatpush.bf16.msra.mxu0 %v1243
      %1917 = vmatmul.bf16.gmra.mxu0 %v448
      %v1918 = vpop.f32.mrf.mxu0
      %v1919 = vadd.f32 %v1906, %v1918
      %v1920 = vpop.f32.mrf.mxu0
      %1921 = vdwg.mxu0
      %1922 = vmatpush.bf16.msra.mxu0 %v1273
      %1923 = vmatpush.bf16.msra.mxu0 %v1271
      %1924 = vmatpush.bf16.msra.mxu0 %v1269
      %1925 = vmatpush.bf16.msra.mxu0 %v1267
      %1926 = vmatpush.bf16.msra.mxu0 %v1265
      %1927 = vmatpush.bf16.msra.mxu0 %v1263
      %1928 = vmatpush.bf16.msra.mxu0 %v1261
      %1929 = vmatpush.bf16.msra.mxu0 %v1259
      %1930 = vmatmul.bf16.gmra.mxu0 %v449
      %v1931 = vpop.f32.mrf.mxu0
      %v1932 = vadd.f32 %v1919, %v1931
      %v1933 = vpop.f32.mrf.mxu0
      %1934 = vdwg.mxu0
      %1935 = vmatpush.bf16.msra.mxu0 %v1289
      %1936 = vmatpush.bf16.msra.mxu0 %v1287
      %1937 = vmatpush.bf16.msra.mxu0 %v1285
      %1938 = vmatpush.bf16.msra.mxu0 %v1283
      %1939 = vmatpush.bf16.msra.mxu0 %v1281
      %1940 = vmatpush.bf16.msra.mxu0 %v1279
      %1941 = vmatpush.bf16.msra.mxu0 %v1277
      %1942 = vmatpush.bf16.msra.mxu0 %v1275
      %1943 = vmatmul.bf16.gmra.mxu0 %v450
      %v1944 = vpop.f32.mrf.mxu0
      %v1945 = vadd.f32 %v1932, %v1944
      %v1946 = vpop.f32.mrf.mxu0
      %1947 = vdwg.mxu0
      %1948 = vmatpush.bf16.msra.mxu0 %v1305
      %1949 = vmatpush.bf16.msra.mxu0 %v1303
      %1950 = vmatpush.bf16.msra.mxu0 %v1301
      %1951 = vmatpush.bf16.msra.mxu0 %v1299
      %1952 = vmatpush.bf16.msra.mxu0 %v1297
      %1953 = vmatpush.bf16.msra.mxu0 %v1295
      %1954 = vmatpush.bf16.msra.mxu0 %v1293
      %1955 = vmatpush.bf16.msra.mxu0 %v1291
      %1956 = vmatmul.bf16.gmra.mxu0 %v451
      %v1957 = vpop.f32.mrf.mxu0
      %v1958 = vadd.f32 %v1945, %v1957
      %v1959 = vpop.f32.mrf.mxu0
      %1960 = vdwg.mxu0
      %1961 = vmatpush.bf16.msra.mxu0 %v1321
      %1962 = vmatpush.bf16.msra.mxu0 %v1319
      %1963 = vmatpush.bf16.msra.mxu0 %v1317
      %1964 = vmatpush.bf16.msra.mxu0 %v1315
      %1965 = vmatpush.bf16.msra.mxu0 %v1313
      %1966 = vmatpush.bf16.msra.mxu0 %v1311
      %1967 = vmatpush.bf16.msra.mxu0 %v1309
      %1968 = vmatpush.bf16.msra.mxu0 %v1307
      %1969 = vmatmul.bf16.gmra.mxu0 %v452
      %v1970 = vpop.f32.mrf.mxu0
      %v1971 = vadd.f32 %v1958, %v1970
      %v1972 = vpop.f32.mrf.mxu0
      %1973 = vdwg.mxu0
      %1974 = vmatpush.bf16.msra.mxu0 %v1337
      %1975 = vmatpush.bf16.msra.mxu0 %v1335
      %1976 = vmatpush.bf16.msra.mxu0 %v1333
      %1977 = vmatpush.bf16.msra.mxu0 %v1331
      %1978 = vmatpush.bf16.msra.mxu0 %v1329
      %1979 = vmatpush.bf16.msra.mxu0 %v1327
      %1980 = vmatpush.bf16.msra.mxu0 %v1325
      %1981 = vmatpush.bf16.msra.mxu0 %v1323
      %1982 = vmatmul.bf16.gmra.mxu0 %v453
      %v1983 = vpop.f32.mrf.mxu0
      %v1984 = vadd.f32 %v1971, %v1983
      %v1985 = vpop.f32.mrf.mxu0
      %1986 = vdwg.mxu0
      %1987 = vmatpush.bf16.msra.mxu0 %v1353
      %1988 = vmatpush.bf16.msra.mxu0 %v1351
      %1989 = vmatpush.bf16.msra.mxu0 %v1349
      %1990 = vmatpush.bf16.msra.mxu0 %v1347
      %1991 = vmatpush.bf16.msra.mxu0 %v1345
      %1992 = vmatpush.bf16.msra.mxu0 %v1343
      %1993 = vmatpush.bf16.msra.mxu0 %v1341
      %1994 = vmatpush.bf16.msra.mxu0 %v1339
      %1995 = vmatmul.bf16.gmra.mxu0 %v454
      %v1996 = vpop.f32.mrf.mxu0
      %v1997 = vadd.f32 %v1984, %v1996
      %v1998 = vpop.f32.mrf.mxu0
      %1999 = vdwg.mxu0
      %2000 = vmatpush.bf16.msra.mxu0 %v1369
      %2001 = vmatpush.bf16.msra.mxu0 %v1367
      %2002 = vmatpush.bf16.msra.mxu0 %v1365
      %2003 = vmatpush.bf16.msra.mxu0 %v1363
      %2004 = vmatpush.bf16.msra.mxu0 %v1361
      %2005 = vmatpush.bf16.msra.mxu0 %v1359
      %2006 = vmatpush.bf16.msra.mxu0 %v1357
      %2007 = vmatpush.bf16.msra.mxu0 %v1355
      %2008 = vmatmul.bf16.gmra.mxu0 %v455
      %v2009 = vpop.f32.mrf.mxu0
      %v2010 = vadd.f32 %v1997, %v2009
      %v2011 = vpop.f32.mrf.mxu0
      %2012 = vdwg.mxu0
      %2013 = vmatpush.bf16.msra.mxu0 %v1385
      %2014 = vmatpush.bf16.msra.mxu0 %v1383
      %2015 = vmatpush.bf16.msra.mxu0 %v1381
      %2016 = vmatpush.bf16.msra.mxu0 %v1379
      %2017 = vmatpush.bf16.msra.mxu0 %v1377
      %2018 = vmatpush.bf16.msra.mxu0 %v1375
      %2019 = vmatpush.bf16.msra.mxu0 %v1373
      %2020 = vmatpush.bf16.msra.mxu0 %v1371
      %2021 = vmatmul.bf16.gmra.mxu0 %v456
      %v2022 = vpop.f32.mrf.mxu0
      %v2023 = vadd.f32 %v2010, %v2022
      %v2024 = vpop.f32.mrf.mxu0
      %2025 = vdwg.mxu0
      %2026 = vmatpush.bf16.msra.mxu0 %v1401
      %2027 = vmatpush.bf16.msra.mxu0 %v1399
      %2028 = vmatpush.bf16.msra.mxu0 %v1397
      %2029 = vmatpush.bf16.msra.mxu0 %v1395
      %2030 = vmatpush.bf16.msra.mxu0 %v1393
      %2031 = vmatpush.bf16.msra.mxu0 %v1391
      %2032 = vmatpush.bf16.msra.mxu0 %v1389
      %2033 = vmatpush.bf16.msra.mxu0 %v1387
      %2034 = vmatmul.bf16.gmra.mxu0 %v457
      %v2035 = vpop.f32.mrf.mxu0
      %v2036 = vadd.f32 %v2023, %v2035
      %v2037 = vpop.f32.mrf.mxu0
      %2038 = vdwg.mxu0
      %2039 = vmatpush.bf16.msra.mxu0 0
      %2040 = vmatpush.bf16.msra.mxu0 0
      %2041 = vmatpush.bf16.msra.mxu0 %v1660
      %2042 = vmatpush.bf16.msra.mxu0 %v1411
      %2043 = vmatpush.bf16.msra.mxu0 %v1409
      %2044 = vmatpush.bf16.msra.mxu0 %v1407
      %2045 = vmatpush.bf16.msra.mxu0 %v1405
      %2046 = vmatpush.bf16.msra.mxu0 %v1403
      %2047 = vmatmul.bf16.gmra.mxu0 %v1650
      %v2048 = vpop.f32.mrf.mxu0
      %v2049 = vadd.f32 %v2036, %v2048
      %v2050 = vpop.f32.mrf.mxu0
      %2051 = vdwg.mxu0
      %v2052 = vmax.f32 %v1854, 0.0
      %v2053 = vmax.f32 %v2049, 0.0
      %2054 = vst [vmem:[%s170] sm:$0xff] %v2052
      %vm2055 = vcmask 793600
      %2056 = vst.msk [vmem:[%s170 + $0x8] sm:$0xff] %vm2055, %v2053
      %p2057 = scmp.lt.s32.totalorder %s14, 1
      %s2058 = scalar_select %p2057, %s14, 1
      %s2059 = smul.addr %s2058, 2
      %s2060 = smul.addr %s2059, 8
      %s2061 = scalar_lea.vmem %s3, %s2060
      // Predicated region
      $region33: #{_lambda_.4} parent=31 // pred_check
        %p2062 = pneg %p100
      $region34: #{_lambda_.4} parent=31 // pred_check_branch
        %2064 = sbr.rel (%p2062) target = $region36
      $region35: #{_lambda_.4} parent=31 // pred_region
        _
      $region36: #{_lambda_.4} parent=31 // pred_fallthru
        _
    $region32: #{_lambda_.4} parent=5 // pred_fallthru
      _
    %p2065 = scmp.le.s32.totalorder 2, %s9
    // Predicated region
    $region37: #{_lambda_.4} parent=5 // pred_check
      %p2066 = pneg %p2065
    $region38: #{_lambda_.4} parent=5 // pred_check_branch
      %2068 = sbr.rel (%p2066) target = $region40
    $region39: #{_lambda_.4} parent=5 // pred_region
      %s2069 = ssub.s32 %s9, 2
      // Predicated region
      $region41: #{_lambda_.4} parent=39 // pred_check
        %p2070 = pneg %p106
      $region42: #{_lambda_.4} parent=39 // pred_check_branch
        %2072 = sbr.rel (%p2070) target = $region44
      $region43: #{_lambda_.4} parent=39 // pred_region
        %p2073 = scmp.lt.s32.totalorder %s15, 1
        %s2074 = scalar_select %p2073, %s15, 1
        %s2075 = smul.addr %s2074, 2
        %s2076 = smul.addr %s2075, 8
        %s2077 = scalar_lea.vmem %s3, %s2076
      $region44: #{_lambda_.4} parent=39 // pred_fallthru
        _
    $region40: #{_lambda_.4} parent=5 // pred_fallthru
      _
  $region6: #{_lambda_.4} parent=0 // loop_footer
    %s13 = sadd.s32 1, %s9
  $region7: #{_lambda_.4} parent=0 // loop_footer_branch
    %8 = sbr.rel target = $region3
  $region8: #{_lambda_.4} parent=0 // loop_exit
    _

// kernel: _lambda_.5
$region0: #{_lambda_.5}
  #allocation0 [shape = 'u32[]', space=smem, size = 0x4, offset = 0x4, fixed_abs, tag = 'smem constant byte address 0x4 - core index']
  #allocation1 [shape = 'u32[72,128]{1,0:T(1,128)}', space=vmem, size = 0x9000, scoped, tag = 'internal scratch']
  %s0 = inlined_call_operand.vmem [shape: bf16[8,72], index: 0, kind: input, shape index: {}]
  %s1 = inlined_call_operand.vmem [shape: f32[8,1], index: 1, kind: input, shape index: {}]
  %s2 = inlined_call_operand.vmem [shape: bf16[2,72,225], index: 2, kind: input, shape index: {}]
  %s3 = inlined_call_operand.vmem [shape: f32[2,8,225], index: 3, kind: output, shape index: {}]
  %s4 = sld [smem:[#allocation0]]
  $region45: #{_lambda_.5} parent=0
    _
  %s6 = ssub.s32 1, %s4
  %s7 = scalar_select 0, %s6, %s4
  loop: start=0, step=1, limit=4
  $region2: #{_lambda_.5} parent=0 // loop_pre_header
    _
  $region3: #{_lambda_.5} parent=0 // loop_header
    %s9 = sphi 0, %s13
    %p10 = scmp.ge.s32.totalorder %s9, 4
    %s17 = sphi 0, %s17
    %s19 = sphi 0, %s17
    %s20 = sphi 0, %s19
    %s34 = sphi 0, %s20
    %s38 = sphi 0, %s38
    %s40 = sphi 0, %s38
    %s41 = sphi 0, %s40
    %s55 = sphi 0, %s41
    %s61 = sphi 0, %s63
    %s64 = sphi 0, %s61
    %s65 = sphi 0, %s64
    %s81 = sphi 0, %s65
    %s87 = sphi 0, %s89
    %s90 = sphi 0, %s87
    %s91 = sphi 0, %s90
    %s107 = sphi 0, %s91
  $region4: #{_lambda_.5} parent=0 // loop_header_branch
    %12 = sbr.rel (%p10) target = $region8
  $region5: #{_lambda_.5} parent=0 // loop_body
    %s14 = ssub.s32 %s9, 1
    %s15 = ssub.s32 %s9, 2
    %s16 = sadd.s32 %s9, 1
    %s18 = sadd.s32 %s17, 1
    %p21 = scmp.eq.s32.totalorder %s9, 1
    %p22 = scmp.ne.s32.totalorder %s17, %s19
    %p23 = scmp.eq.s32.totalorder %s9, 0
    %p24 = por %p22, %p23
    %p25 = scmp.ne.s32.totalorder %s17, %s19
    %p26 = scmp.eq.s32.totalorder %s14, 1
    %p27 = por %p25, %p26
    %p28 = scmp.ne.s32.totalorder %s19, %s20
    %p29 = scmp.eq.s32.totalorder %s14, 0
    %p30 = por %p28, %p29
    %p31 = scmp.ne.s32.totalorder %s19, %s20
    %p32 = scmp.eq.s32.totalorder %s15, 1
    %p33 = por %p31, %p32
    %p35 = scmp.ne.s32.totalorder %s20, %s34
    %p36 = scmp.eq.s32.totalorder %s15, 0
    %p37 = por %p35, %p36
    %s39 = sadd.s32 %s38, 1
    %p42 = scmp.eq.s32.totalorder %s9, 1
    %p43 = scmp.ne.s32.totalorder %s38, %s40
    %p44 = scmp.eq.s32.totalorder %s9, 0
    %p45 = por %p43, %p44
    %p46 = scmp.ne.s32.totalorder %s38, %s40
    %p47 = scmp.eq.s32.totalorder %s14, 1
    %p48 = por %p46, %p47
    %p49 = scmp.ne.s32.totalorder %s40, %s41
    %p50 = scmp.eq.s32.totalorder %s14, 0
    %p51 = por %p49, %p50
    %p52 = scmp.ne.s32.totalorder %s40, %s41
    %p53 = scmp.eq.s32.totalorder %s15, 1
    %p54 = por %p52, %p53
    %p56 = scmp.ne.s32.totalorder %s41, %s55
    %p57 = scmp.eq.s32.totalorder %s15, 0
    %p58 = por %p56, %p57
    %s59 = ssub.s32 %s9, %s16
    %p60 = scmp.eq.s32.totalorder %s59, 0
    %s62 = sadd.s32 %s61, 1
    %s63 = scalar_select %p60, %s61, %s62
    %p66 = pneg %p60
    %p67 = scmp.eq.s32.totalorder %s9, 1
    %p68 = por %p66, %p67
    %p69 = scmp.ne.s32.totalorder %s61, %s64
    %p70 = scmp.eq.s32.totalorder %s9, 0
    %p71 = por %p69, %p70
    %p72 = scmp.ne.s32.totalorder %s61, %s64
    %p73 = scmp.eq.s32.totalorder %s14, 1
    %p74 = por %p72, %p73
    %p75 = scmp.ne.s32.totalorder %s64, %s65
    %p76 = scmp.eq.s32.totalorder %s14, 0
    %p77 = por %p75, %p76
    %p78 = scmp.ne.s32.totalorder %s64, %s65
    %p79 = scmp.eq.s32.totalorder %s15, 1
    %p80 = por %p78, %p79
    %p82 = scmp.ne.s32.totalorder %s65, %s81
    %p83 = scmp.eq.s32.totalorder %s15, 0
    %p84 = por %p82, %p83
    %s85 = ssub.s32 %s9, %s16
    %p86 = scmp.eq.s32.totalorder %s85, 0
    %s88 = sadd.s32 %s87, 1
    %s89 = scalar_select %p86, %s87, %s88
    %p92 = pneg %p86
    %p93 = scmp.eq.s32.totalorder %s9, 1
    %p94 = por %p92, %p93
    %p95 = scmp.ne.s32.totalorder %s87, %s90
    %p96 = scmp.eq.s32.totalorder %s9, 0
    %p97 = por %p95, %p96
    %p98 = scmp.ne.s32.totalorder %s87, %s90
    %p99 = scmp.eq.s32.totalorder %s14, 1
    %p100 = por %p98, %p99
    %p101 = scmp.ne.s32.totalorder %s90, %s91
    %p102 = scmp.eq.s32.totalorder %s14, 0
    %p103 = por %p101, %p102
    %p104 = scmp.ne.s32.totalorder %s90, %s91
    %p105 = scmp.eq.s32.totalorder %s15, 1
    %p106 = por %p104, %p105
    %p108 = scmp.ne.s32.totalorder %s91, %s107
    %p109 = scmp.eq.s32.totalorder %s15, 0
    %p110 = por %p108, %p109
    %p111 = scmp.le.s32.totalorder 1, %s9
    %p112 = scmp.lt.s32.totalorder %s9, 3
    %p113 = pnand %p111, %p112
    %p114 = pneg %p113
    // Predicated region
    $region9: #{_lambda_.5} parent=5 // pred_check
      _
    $region10: #{_lambda_.5} parent=5 // pred_check_branch
      %116 = sbr.rel (%p113) target = $region12
    $region11: #{_lambda_.5} parent=5 // pred_region
      %s117 = ssub.s32 %s9, 1
      // Predicated region
      $region13: #{_lambda_.5} parent=11 // pred_check
        %p118 = pneg %p30
      $region14: #{_lambda_.5} parent=11 // pred_check_branch
        %120 = sbr.rel (%p118) target = $region16
      $region15: #{_lambda_.5} parent=11 // pred_region
        _
      $region16: #{_lambda_.5} parent=11 // pred_fallthru
        _
      // Predicated region
      $region17: #{_lambda_.5} parent=11 // pred_check
        %p121 = pneg %p51
      $region18: #{_lambda_.5} parent=11 // pred_check_branch
        %123 = sbr.rel (%p121) target = $region20
      $region19: #{_lambda_.5} parent=11 // pred_region
        _
      $region20: #{_lambda_.5} parent=11 // pred_fallthru
        _
    $region12: #{_lambda_.5} parent=5 // pred_fallthru
      _
    %p124 = scmp.lt.s32.totalorder %s9, 2
    // Predicated region
    $region21: #{_lambda_.5} parent=5 // pred_check
      %p125 = pneg %p124
    $region22: #{_lambda_.5} parent=5 // pred_check_branch
      %127 = sbr.rel (%p125) target = $region24
    $region23: #{_lambda_.5} parent=5 // pred_region
      // Predicated region
      $region25: #{_lambda_.5} parent=23 // pred_check
        %p128 = pneg %p71
      $region26: #{_lambda_.5} parent=23 // pred_check_branch
        %130 = sbr.rel (%p128) target = $region28
      $region27: #{_lambda_.5} parent=23 // pred_region
        %p131 = scmp.lt.s32.totalorder %s9, 1
        %s132 = scalar_select %p131, %s9, 1
        %s133 = smul.addr %s132, 18
        %s134 = smul.addr %s133, 4
        %s135 = scalar_lea.vmem %s2, %s134
      $region28: #{_lambda_.5} parent=23 // pred_fallthru
        _
    $region24: #{_lambda_.5} parent=5 // pred_fallthru
      _
    %p136 = scmp.le.s32.totalorder 1, %s9
    %p137 = scmp.lt.s32.totalorder %s9, 3
    %p138 = pnand %p136, %p137
    %p139 = pneg %p138
    // Predicated region
    $region29: #{_lambda_.5} parent=5 // pred_check
      _
    $region30: #{_lambda_.5} parent=5 // pred_check_branch
      %141 = sbr.rel (%p138) target = $region32
    $region31: #{_lambda_.5} parent=5 // pred_region
      %s142 = ssub.s32 %s9, 1
      %p143 = pneg %p30
      %p144 = pneg %p27
      %p145 = pneg %p51
      %p146 = pneg %p48
      %p147 = scmp.lt.s32.totalorder %s14, 1
      %s148 = scalar_select %p147, %s14, 1
      %s149 = smul.addr %s148, 18
      %s150 = smul.addr %s149, 4
      %s151 = scalar_lea.vmem %s2, %s150
      %p152 = pneg %p77
      %p153 = pneg %p74
      %p154 = pneg %p103
      %p155 = pneg %p100
      %p156 = scmp.lt.s32.totalorder %s14, 1
      %s157 = scalar_select %p156, %s14, 1
      %s158 = smul.addr %s157, 2
      %s159 = smul.addr %s158, 8
      %s160 = scalar_lea.vmem %s3, %s159
      %p161 = scmp.lt.s32.totalorder %s14, 1
      %s162 = scalar_select %p161, %s14, 1
      %s163 = smul.addr %s162, 18
      %s164 = smul.addr %s163, 4
      %s165 = scalar_lea.vmem %s2, %s164
      %p166 = scmp.lt.s32.totalorder %s14, 1
      %s167 = scalar_select %p166, %s14, 1
      %s168 = smul.addr %s167, 2
      %s169 = smul.addr %s168, 8
      %s170 = scalar_lea.vmem %s3, %s169
      %v172 = vld [vmem:[%s0] sm:$0xf]
      %v173 = vld [vmem:[%s165] sm:$0xff]
      %v174 = vld [vmem:[%s165 + $0x8] sm:$0xff]
      %v175 = vld [vmem:[%s165 + $0x10] sm:$0xff]
      %v176 = vld [vmem:[%s165 + $0x18] sm:$0xff]
      %v177 = vld [vmem:[%s165 + $0x20] sm:$0xff]
      %v178 = vld [vmem:[%s165 + $0x28] sm:$0xff]
      %v179 = vld [vmem:[%s165 + $0x30] sm:$0xff]
      %v180 = vld [vmem:[%s165 + $0x38] sm:$0xff]
      %v181 = vld [vmem:[%s165 + $0x40] sm:$0xff]
      %v182 = vld [vmem:[%s1] sm:$0xff]
      %184 = vset.pattern.permute.xlu0 0
      %185 = vperm.xlu0 %184, %v182
      %v186 = vpop.permute.xlu0 %185
      %v197 = vunpack.c.l.b16 %v173
      %v198 = vunpack.c.h.b16 %v173
      %v199 = vunpack.c.l.b16 %v174
      %v200 = vunpack.c.h.b16 %v174
      %v201 = vunpack.c.l.b16 %v175
      %v202 = vunpack.c.h.b16 %v175
      %v203 = vunpack.c.l.b16 %v176
      %v204 = vunpack.c.h.b16 %v176
      %v205 = vunpack.c.l.b16 %v177
      %v206 = vunpack.c.h.b16 %v177
      %v207 = vunpack.c.l.b16 %v178
      %v208 = vunpack.c.h.b16 %v178
      %v209 = vunpack.c.l.b16 %v179
      %v210 = vunpack.c.h.b16 %v179
      %v211 = vunpack.c.l.b16 %v180
      %v212 = vunpack.c.h.b16 %v180
      %v213 = vunpack.c.l.b16 %v181
      %v214 = vunpack.c.h.b16 %v181
      %v215 = vpack.c.b16 %v199, %v197
      %v216 = vpack.c.b16 %v200, %v198
      %v217 = vpack.c.b16 %v203, %v201
      %v218 = vpack.c.b16 %v204, %v202
      %v219 = vpack.c.b16 %v207, %v205
      %v220 = vpack.c.b16 %v208, %v206
      %v221 = vpack.c.b16 %v211, %v209
      %v222 = vpack.c.b16 %v212, %v210
      %v223 = vpack.c.b16 %v213, %v213
      %v224 = vpack.c.b16 %v214, %v214
      %vm233 = vcmask 588800
      %v235 = vsel %vm233, %v172, 0
      %vm237 = vcmask 1043456
      %v239 = vsel %vm237, %v223, 0
      %v242 = vsel %vm237, %v224, 0
      %244 = vmatpush.bf16.msra.mxu0 0
      %245 = vmatpush.bf16.msra.mxu0 0
      %246 = vmatpush.bf16.msra.mxu0 0
      %247 = vmatpush.bf16.msra.mxu0 %v239
      %248 = vmatpush.bf16.msra.mxu0 %v221
      %249 = vmatpush.bf16.msra.mxu0 %v219
      %250 = vmatpush.bf16.msra.mxu0 %v217
      %251 = vmatpush.bf16.msra.mxu0 %v215
      %252 = vmatmul.bf16.gmra.mxu0 %v235
      %v253 = vpop.f32.mrf.mxu0
      %v254 = vadd.f32 %v186, %v253
      %v255 = vpop.f32.mrf.mxu0
      %256 = vdwg.mxu0
      %257 = vmatpush.bf16.msra.mxu0 0
      %258 = vmatpush.bf16.msra.mxu0 0
      %259 = vmatpush.bf16.msra.mxu0 0
      %260 = vmatpush.bf16.msra.mxu0 %v242
      %261 = vmatpush.bf16.msra.mxu0 %v222
      %262 = vmatpush.bf16.msra.mxu0 %v220
      %263 = vmatpush.bf16.msra.mxu0 %v218
      %264 = vmatpush.bf16.msra.mxu0 %v216
      %265 = vmatmul.bf16.gmra.mxu0 %v235
      %v266 = vpop.f32.mrf.mxu0
      %v267 = vadd.f32 %v186, %v266
      %v268 = vpop.f32.mrf.mxu0
      %269 = vdwg.mxu0
      %v270 = vmax.f32 %v254, 0.0
      %v271 = vmax.f32 %v267, 0.0
      %272 = vst [vmem:[%s170] sm:$0xff] %v270
      %vm273 = vcmask 793600
      %274 = vst.msk [vmem:[%s170 + $0x8] sm:$0xff] %vm273, %v271
      %p275 = scmp.lt.s32.totalorder %s14, 1
      %s276 = scalar_select %p275, %s14, 1
      %s277 = smul.addr %s276, 2
      %s278 = smul.addr %s277, 8
      %s279 = scalar_lea.vmem %s3, %s278
      // Predicated region
      $region33: #{_lambda_.5} parent=31 // pred_check
        %p280 = pneg %p100
      $region34: #{_lambda_.5} parent=31 // pred_check_branch
        %282 = sbr.rel (%p280) target = $region36
      $region35: #{_lambda_.5} parent=31 // pred_region
        _
      $region36: #{_lambda_.5} parent=31 // pred_fallthru
        _
    $region32: #{_lambda_.5} parent=5 // pred_fallthru
      _
    %p283 = scmp.le.s32.totalorder 2, %s9
    // Predicated region
    $region37: #{_lambda_.5} parent=5 // pred_check
      %p284 = pneg %p283
    $region38: #{_lambda_.5} parent=5 // pred_check_branch
      %286 = sbr.rel (%p284) target = $region40
    $region39: #{_lambda_.5} parent=5 // pred_region
      %s287 = ssub.s32 %s9, 2
      // Predicated region
      $region41: #{_lambda_.5} parent=39 // pred_check
        %p288 = pneg %p106
      $region42: #{_lambda_.5} parent=39 // pred_check_branch
        %290 = sbr.rel (%p288) target = $region44
      $region43: #{_lambda_.5} parent=39 // pred_region
        %p291 = scmp.lt.s32.totalorder %s15, 1
        %s292 = scalar_select %p291, %s15, 1
        %s293 = smul.addr %s292, 2
        %s294 = smul.addr %s293, 8
        %s295 = scalar_lea.vmem %s3, %s294
      $region44: #{_lambda_.5} parent=39 // pred_fallthru
        _
    $region40: #{_lambda_.5} parent=5 // pred_fallthru
      _
  $region6: #{_lambda_.5} parent=0 // loop_footer
    %s13 = sadd.s32 1, %s9
  $region7: #{_lambda_.5} parent=0 // loop_footer_branch
    %8 = sbr.rel target = $region3
  $region8: #{_lambda_.5} parent=0 // loop_exit
    _

// kernel: _lambda_.6
$region0: #{_lambda_.6}
  #allocation0 [shape = 'u32[]', space=smem, size = 0x4, offset = 0x4, fixed_abs, tag = 'smem constant byte address 0x4 - core index']
  #allocation1 [shape = 'u32[72,128]{1,0:T(1,128)}', space=vmem, size = 0x9000, scoped, tag = 'internal scratch']
  %s0 = inlined_call_operand.vmem [shape: bf16[8,1800], index: 0, kind: input, shape index: {}]
  %s1 = inlined_call_operand.vmem [shape: f32[8,1], index: 1, kind: input, shape index: {}]
  %s2 = inlined_call_operand.vmem [shape: bf16[2,1800,1], index: 2, kind: input, shape index: {}]
  %s3 = inlined_call_operand.vmem [shape: f32[2,8,1], index: 3, kind: output, shape index: {}]
  %s4 = sld [smem:[#allocation0]]
  $region45: #{_lambda_.6} parent=0
    _
  %s6 = ssub.s32 1, %s4
  %s7 = scalar_select 0, %s6, %s4
  loop: start=0, step=1, limit=4
  $region2: #{_lambda_.6} parent=0 // loop_pre_header
    _
  $region3: #{_lambda_.6} parent=0 // loop_header
    %s9 = sphi 0, %s13
    %p10 = scmp.ge.s32.totalorder %s9, 4
    %s17 = sphi 0, %s17
    %s19 = sphi 0, %s17
    %s20 = sphi 0, %s19
    %s34 = sphi 0, %s20
    %s38 = sphi 0, %s38
    %s40 = sphi 0, %s38
    %s41 = sphi 0, %s40
    %s55 = sphi 0, %s41
    %s61 = sphi 0, %s63
    %s64 = sphi 0, %s61
    %s65 = sphi 0, %s64
    %s81 = sphi 0, %s65
    %s87 = sphi 0, %s89
    %s90 = sphi 0, %s87
    %s91 = sphi 0, %s90
    %s107 = sphi 0, %s91
  $region4: #{_lambda_.6} parent=0 // loop_header_branch
    %12 = sbr.rel (%p10) target = $region8
  $region5: #{_lambda_.6} parent=0 // loop_body
    %s14 = ssub.s32 %s9, 1
    %s15 = ssub.s32 %s9, 2
    %s16 = sadd.s32 %s9, 1
    %s18 = sadd.s32 %s17, 1
    %p21 = scmp.eq.s32.totalorder %s9, 1
    %p22 = scmp.ne.s32.totalorder %s17, %s19
    %p23 = scmp.eq.s32.totalorder %s9, 0
    %p24 = por %p22, %p23
    %p25 = scmp.ne.s32.totalorder %s17, %s19
    %p26 = scmp.eq.s32.totalorder %s14, 1
    %p27 = por %p25, %p26
    %p28 = scmp.ne.s32.totalorder %s19, %s20
    %p29 = scmp.eq.s32.totalorder %s14, 0
    %p30 = por %p28, %p29
    %p31 = scmp.ne.s32.totalorder %s19, %s20
    %p32 = scmp.eq.s32.totalorder %s15, 1
    %p33 = por %p31, %p32
    %p35 = scmp.ne.s32.totalorder %s20, %s34
    %p36 = scmp.eq.s32.totalorder %s15, 0
    %p37 = por %p35, %p36
    %s39 = sadd.s32 %s38, 1
    %p42 = scmp.eq.s32.totalorder %s9, 1
    %p43 = scmp.ne.s32.totalorder %s38, %s40
    %p44 = scmp.eq.s32.totalorder %s9, 0
    %p45 = por %p43, %p44
    %p46 = scmp.ne.s32.totalorder %s38, %s40
    %p47 = scmp.eq.s32.totalorder %s14, 1
    %p48 = por %p46, %p47
    %p49 = scmp.ne.s32.totalorder %s40, %s41
    %p50 = scmp.eq.s32.totalorder %s14, 0
    %p51 = por %p49, %p50
    %p52 = scmp.ne.s32.totalorder %s40, %s41
    %p53 = scmp.eq.s32.totalorder %s15, 1
    %p54 = por %p52, %p53
    %p56 = scmp.ne.s32.totalorder %s41, %s55
    %p57 = scmp.eq.s32.totalorder %s15, 0
    %p58 = por %p56, %p57
    %s59 = ssub.s32 %s9, %s16
    %p60 = scmp.eq.s32.totalorder %s59, 0
    %s62 = sadd.s32 %s61, 1
    %s63 = scalar_select %p60, %s61, %s62
    %p66 = pneg %p60
    %p67 = scmp.eq.s32.totalorder %s9, 1
    %p68 = por %p66, %p67
    %p69 = scmp.ne.s32.totalorder %s61, %s64
    %p70 = scmp.eq.s32.totalorder %s9, 0
    %p71 = por %p69, %p70
    %p72 = scmp.ne.s32.totalorder %s61, %s64
    %p73 = scmp.eq.s32.totalorder %s14, 1
    %p74 = por %p72, %p73
    %p75 = scmp.ne.s32.totalorder %s64, %s65
    %p76 = scmp.eq.s32.totalorder %s14, 0
    %p77 = por %p75, %p76
    %p78 = scmp.ne.s32.totalorder %s64, %s65
    %p79 = scmp.eq.s32.totalorder %s15, 1
    %p80 = por %p78, %p79
    %p82 = scmp.ne.s32.totalorder %s65, %s81
    %p83 = scmp.eq.s32.totalorder %s15, 0
    %p84 = por %p82, %p83
    %s85 = ssub.s32 %s9, %s16
    %p86 = scmp.eq.s32.totalorder %s85, 0
    %s88 = sadd.s32 %s87, 1
    %s89 = scalar_select %p86, %s87, %s88
    %p92 = pneg %p86
    %p93 = scmp.eq.s32.totalorder %s9, 1
    %p94 = por %p92, %p93
    %p95 = scmp.ne.s32.totalorder %s87, %s90
    %p96 = scmp.eq.s32.totalorder %s9, 0
    %p97 = por %p95, %p96
    %p98 = scmp.ne.s32.totalorder %s87, %s90
    %p99 = scmp.eq.s32.totalorder %s14, 1
    %p100 = por %p98, %p99
    %p101 = scmp.ne.s32.totalorder %s90, %s91
    %p102 = scmp.eq.s32.totalorder %s14, 0
    %p103 = por %p101, %p102
    %p104 = scmp.ne.s32.totalorder %s90, %s91
    %p105 = scmp.eq.s32.totalorder %s15, 1
    %p106 = por %p104, %p105
    %p108 = scmp.ne.s32.totalorder %s91, %s107
    %p109 = scmp.eq.s32.totalorder %s15, 0
    %p110 = por %p108, %p109
    %p111 = scmp.le.s32.totalorder 1, %s9
    %p112 = scmp.lt.s32.totalorder %s9, 3
    %p113 = pnand %p111, %p112
    %p114 = pneg %p113
    // Predicated region
    $region9: #{_lambda_.6} parent=5 // pred_check
      _
    $region10: #{_lambda_.6} parent=5 // pred_check_branch
      %116 = sbr.rel (%p113) target = $region12
    $region11: #{_lambda_.6} parent=5 // pred_region
      %s117 = ssub.s32 %s9, 1
      // Predicated region
      $region13: #{_lambda_.6} parent=11 // pred_check
        %p118 = pneg %p30
      $region14: #{_lambda_.6} parent=11 // pred_check_branch
        %120 = sbr.rel (%p118) target = $region16
      $region15: #{_lambda_.6} parent=11 // pred_region
        _
      $region16: #{_lambda_.6} parent=11 // pred_fallthru
        _
      // Predicated region
      $region17: #{_lambda_.6} parent=11 // pred_check
        %p121 = pneg %p51
      $region18: #{_lambda_.6} parent=11 // pred_check_branch
        %123 = sbr.rel (%p121) target = $region20
      $region19: #{_lambda_.6} parent=11 // pred_region
        _
      $region20: #{_lambda_.6} parent=11 // pred_fallthru
        _
    $region12: #{_lambda_.6} parent=5 // pred_fallthru
      _
    %p124 = scmp.lt.s32.totalorder %s9, 2
    // Predicated region
    $region21: #{_lambda_.6} parent=5 // pred_check
      %p125 = pneg %p124
    $region22: #{_lambda_.6} parent=5 // pred_check_branch
      %127 = sbr.rel (%p125) target = $region24
    $region23: #{_lambda_.6} parent=5 // pred_region
      // Predicated region
      $region25: #{_lambda_.6} parent=23 // pred_check
        %p128 = pneg %p71
      $region26: #{_lambda_.6} parent=23 // pred_check_branch
        %130 = sbr.rel (%p128) target = $region28
      $region27: #{_lambda_.6} parent=23 // pred_region
        %p131 = scmp.lt.s32.totalorder %s9, 1
        %s132 = scalar_select %p131, %s9, 1
        %s133 = smul.addr %s132, 225
        %s134 = smul.addr %s133, 4
        %s135 = scalar_lea.vmem %s2, %s134
      $region28: #{_lambda_.6} parent=23 // pred_fallthru
        _
    $region24: #{_lambda_.6} parent=5 // pred_fallthru
      _
    %p136 = scmp.le.s32.totalorder 1, %s9
    %p137 = scmp.lt.s32.totalorder %s9, 3
    %p138 = pnand %p136, %p137
    %p139 = pneg %p138
    // Predicated region
    $region29: #{_lambda_.6} parent=5 // pred_check
      _
    $region30: #{_lambda_.6} parent=5 // pred_check_branch
      %141 = sbr.rel (%p138) target = $region32
    $region31: #{_lambda_.6} parent=5 // pred_region
      %s142 = ssub.s32 %s9, 1
      %p143 = pneg %p30
      %p144 = pneg %p27
      %p145 = pneg %p51
      %p146 = pneg %p48
      %p147 = scmp.lt.s32.totalorder %s14, 1
      %s148 = scalar_select %p147, %s14, 1
      %s149 = smul.addr %s148, 225
      %s150 = smul.addr %s149, 4
      %s151 = scalar_lea.vmem %s2, %s150
      %p152 = pneg %p77
      %p153 = pneg %p74
      %p154 = pneg %p103
      %p155 = pneg %p100
      %p156 = scmp.lt.s32.totalorder %s14, 1
      %s157 = scalar_select %p156, %s14, 1
      %s158 = smul.addr %s157, 8
      %s159 = scalar_lea.vmem %s3, %s158
      %p160 = scmp.lt.s32.totalorder %s14, 1
      %s161 = scalar_select %p160, %s14, 1
      %s162 = smul.addr %s161, 225
      %s163 = smul.addr %s162, 4
      %s164 = scalar_lea.vmem %s2, %s163
      %p165 = scmp.lt.s32.totalorder %s14, 1
      %s166 = scalar_select %p165, %s14, 1
      %s167 = smul.addr %s166, 8
      %s168 = scalar_lea.vmem %s3, %s167
      %v170 = vld [vmem:[%s0] sm:$0xff]
      %v171 = vld [vmem:[%s0 + $0x8] sm:$0xff]
      %v172 = vld [vmem:[%s0 + $0x10] sm:$0xff]
      %v173 = vld [vmem:[%s0 + $0x18] sm:$0xff]
      %v174 = vld [vmem:[%s0 + $0x20] sm:$0xff]
      %v175 = vld [vmem:[%s0 + $0x28] sm:$0xff]
      %v176 = vld [vmem:[%s0 + $0x30] sm:$0xff]
      %v177 = vld [vmem:[%s0 + $0x38] sm:$0xf]
      %v178 = vld [vmem:[%s164] sm:$0xf]
      %v179 = vld [vmem:[%s164 + $0x4] sm:$0xf]
      %v180 = vld [vmem:[%s164 + $0x8] sm:$0xf]
      %v181 = vld [vmem:[%s164 + $0xc] sm:$0xf]
      %v182 = vld [vmem:[%s164 + $0x10] sm:$0xf]
      %v183 = vld [vmem:[%s164 + $0x14] sm:$0xf]
      %v184 = vld [vmem:[%s164 + $0x18] sm:$0xf]
      %v185 = vld [vmem:[%s164 + $0x1c] sm:$0xf]
      %v186 = vld [vmem:[%s164 + $0x20] sm:$0xf]
      %v187 = vld [vmem:[%s164 + $0x24] sm:$0xf]
      %v188 = vld [vmem:[%s164 + $0x28] sm:$0xf]
      %v189 = vld [vmem:[%s164 + $0x2c] sm:$0xf]
      %v190 = vld [vmem:[%s164 + $0x30] sm:$0xf]
      %v191 = vld [vmem:[%s164 + $0x34] sm:$0xf]
      %v192 = vld [vmem:[%s164 + $0x38] sm:$0xf]
      %v193 = vld [vmem:[%s164 + $0x3c] sm:$0xf]
      %v194 = vld [vmem:[%s164 + $0x40] sm:$0xf]
      %v195 = vld [vmem:[%s164 + $0x44] sm:$0xf]
      %v196 = vld [vmem:[%s164 + $0x48] sm:$0xf]
      %v197 = vld [vmem:[%s164 + $0x4c] sm:$0xf]
      %v198 = vld [vmem:[%s164 + $0x50] sm:$0xf]
      %v199 = vld [vmem:[%s164 + $0x54] sm:$0xf]
      %v200 = vld [vmem:[%s164 + $0x58] sm:$0xf]
      %v201 = vld [vmem:[%s164 + $0x5c] sm:$0xf]
      %v202 = vld [vmem:[%s164 + $0x60] sm:$0xf]
      %v203 = vld [vmem:[%s164 + $0x64] sm:$0xf]
      %v204 = vld [vmem:[%s164 + $0x68] sm:$0xf]
      %v205 = vld [vmem:[%s164 + $0x6c] sm:$0xf]
      %v206 = vld [vmem:[%s164 + $0x70] sm:$0xf]
      %v207 = vld [vmem:[%s164 + $0x74] sm:$0xf]
      %v208 = vld [vmem:[%s164 + $0x78] sm:$0xf]
      %v209 = vld [vmem:[%s164 + $0x7c] sm:$0xf]
      %v210 = vld [vmem:[%s164 + $0x80] sm:$0xf]
      %v211 = vld [vmem:[%s164 + $0x84] sm:$0xf]
      %v212 = vld [vmem:[%s164 + $0x88] sm:$0xf]
      %v213 = vld [vmem:[%s164 + $0x8c] sm:$0xf]
      %v214 = vld [vmem:[%s164 + $0x90] sm:$0xf]
      %v215 = vld [vmem:[%s164 + $0x94] sm:$0xf]
      %v216 = vld [vmem:[%s164 + $0x98] sm:$0xf]
      %v217 = vld [vmem:[%s164 + $0x9c] sm:$0xf]
      %v218 = vld [vmem:[%s164 + $0xa0] sm:$0xf]
      %v219 = vld [vmem:[%s164 + $0xa4] sm:$0xf]
      %v220 = vld [vmem:[%s164 + $0xa8] sm:$0xf]
      %v221 = vld [vmem:[%s164 + $0xac] sm:$0xf]
      %v222 = vld [vmem:[%s164 + $0xb0] sm:$0xf]
      %v223 = vld [vmem:[%s164 + $0xb4] sm:$0xf]
      %v224 = vld [vmem:[%s164 + $0xb8] sm:$0xf]
      %v225 = vld [vmem:[%s164 + $0xbc] sm:$0xf]
      %v226 = vld [vmem:[%s164 + $0xc0] sm:$0xf]
      %v227 = vld [vmem:[%s164 + $0xc4] sm:$0xf]
      %v228 = vld [vmem:[%s164 + $0xc8] sm:$0xf]
      %v229 = vld [vmem:[%s164 + $0xcc] sm:$0xf]
      %v230 = vld [vmem:[%s164 + $0xd0] sm:$0xf]
      %v231 = vld [vmem:[%s164 + $0xd4] sm:$0xf]
      %v232 = vld [vmem:[%s164 + $0xd8] sm:$0xf]
      %v233 = vld [vmem:[%s164 + $0xdc] sm:$0xf]
      %v234 = vld [vmem:[%s164 + $0xe0] sm:$0xf]
      %v235 = vld [vmem:[%s164 + $0xe4] sm:$0xf]
      %v236 = vld [vmem:[%s164 + $0xe8] sm:$0xf]
      %v237 = vld [vmem:[%s164 + $0xec] sm:$0xf]
      %v238 = vld [vmem:[%s164 + $0xf0] sm:$0xf]
      %v239 = vld [vmem:[%s164 + $0xf4] sm:$0xf]
      %v240 = vld [vmem:[%s164 + $0xf8] sm:$0xf]
      %v241 = vld [vmem:[%s164 + $0xfc] sm:$0xf]
      %v242 = vld [vmem:[%s164 + $0x100] sm:$0xf]
      %v243 = vld [vmem:[%s164 + $0x104] sm:$0xf]
      %v244 = vld [vmem:[%s164 + $0x108] sm:$0xf]
      %v245 = vld [vmem:[%s164 + $0x10c] sm:$0xf]
      %v246 = vld [vmem:[%s164 + $0x110] sm:$0xf]
      %v247 = vld [vmem:[%s164 + $0x114] sm:$0xf]
      %v248 = vld [vmem:[%s164 + $0x118] sm:$0xf]
      %v249 = vld [vmem:[%s164 + $0x11c] sm:$0xf]
      %v250 = vld [vmem:[%s164 + $0x120] sm:$0xf]
      %v251 = vld [vmem:[%s164 + $0x124] sm:$0xf]
      %v252 = vld [vmem:[%s164 + $0x128] sm:$0xf]
      %v253 = vld [vmem:[%s164 + $0x12c] sm:$0xf]
      %v254 = vld [vmem:[%s164 + $0x130] sm:$0xf]
      %v255 = vld [vmem:[%s164 + $0x134] sm:$0xf]
      %v256 = vld [vmem:[%s164 + $0x138] sm:$0xf]
      %v257 = vld [vmem:[%s164 + $0x13c] sm:$0xf]
      %v258 = vld [vmem:[%s164 + $0x140] sm:$0xf]
      %v259 = vld [vmem:[%s164 + $0x144] sm:$0xf]
      %v260 = vld [vmem:[%s164 + $0x148] sm:$0xf]
      %v261 = vld [vmem:[%s164 + $0x14c] sm:$0xf]
      %v262 = vld [vmem:[%s164 + $0x150] sm:$0xf]
      %v263 = vld [vmem:[%s164 + $0x154] sm:$0xf]
      %v264 = vld [vmem:[%s164 + $0x158] sm:$0xf]
      %v265 = vld [vmem:[%s164 + $0x15c] sm:$0xf]
      %v266 = vld [vmem:[%s164 + $0x160] sm:$0xf]
      %v267 = vld [vmem:[%s164 + $0x164] sm:$0xf]
      %v268 = vld [vmem:[%s164 + $0x168] sm:$0xf]
      %v269 = vld [vmem:[%s164 + $0x16c] sm:$0xf]
      %v270 = vld [vmem:[%s164 + $0x170] sm:$0xf]
      %v271 = vld [vmem:[%s164 + $0x174] sm:$0xf]
      %v272 = vld [vmem:[%s164 + $0x178] sm:$0xf]
      %v273 = vld [vmem:[%s164 + $0x17c] sm:$0xf]
      %v274 = vld [vmem:[%s164 + $0x180] sm:$0xf]
      %v275 = vld [vmem:[%s164 + $0x184] sm:$0xf]
      %v276 = vld [vmem:[%s164 + $0x188] sm:$0xf]
      %v277 = vld [vmem:[%s164 + $0x18c] sm:$0xf]
      %v278 = vld [vmem:[%s164 + $0x190] sm:$0xf]
      %v279 = vld [vmem:[%s164 + $0x194] sm:$0xf]
      %v280 = vld [vmem:[%s164 + $0x198] sm:$0xf]
      %v281 = vld [vmem:[%s164 + $0x19c] sm:$0xf]
      %v282 = vld [vmem:[%s164 + $0x1a0] sm:$0xf]
      %v283 = vld [vmem:[%s164 + $0x1a4] sm:$0xf]
      %v284 = vld [vmem:[%s164 + $0x1a8] sm:$0xf]
      %v285 = vld [vmem:[%s164 + $0x1ac] sm:$0xf]
      %v286 = vld [vmem:[%s164 + $0x1b0] sm:$0xf]
      %v287 = vld [vmem:[%s164 + $0x1b4] sm:$0xf]
      %v288 = vld [vmem:[%s164 + $0x1b8] sm:$0xf]
      %v289 = vld [vmem:[%s164 + $0x1bc] sm:$0xf]
      %v290 = vld [vmem:[%s164 + $0x1c0] sm:$0xf]
      %v291 = vld [vmem:[%s164 + $0x1c4] sm:$0xf]
      %v292 = vld [vmem:[%s164 + $0x1c8] sm:$0xf]
      %v293 = vld [vmem:[%s164 + $0x1cc] sm:$0xf]
      %v294 = vld [vmem:[%s164 + $0x1d0] sm:$0xf]
      %v295 = vld [vmem:[%s164 + $0x1d4] sm:$0xf]
      %v296 = vld [vmem:[%s164 + $0x1d8] sm:$0xf]
      %v297 = vld [vmem:[%s164 + $0x1dc] sm:$0xf]
      %v298 = vld [vmem:[%s164 + $0x1e0] sm:$0xf]
      %v299 = vld [vmem:[%s164 + $0x1e4] sm:$0xf]
      %v300 = vld [vmem:[%s164 + $0x1e8] sm:$0xf]
      %v301 = vld [vmem:[%s164 + $0x1ec] sm:$0xf]
      %v302 = vld [vmem:[%s164 + $0x1f0] sm:$0xf]
      %v303 = vld [vmem:[%s164 + $0x1f4] sm:$0xf]
      %v304 = vld [vmem:[%s164 + $0x1f8] sm:$0xf]
      %v305 = vld [vmem:[%s164 + $0x1fc] sm:$0xf]
      %v306 = vld [vmem:[%s164 + $0x200] sm:$0xf]
      %v307 = vld [vmem:[%s164 + $0x204] sm:$0xf]
      %v308 = vld [vmem:[%s164 + $0x208] sm:$0xf]
      %v309 = vld [vmem:[%s164 + $0x20c] sm:$0xf]
      %v310 = vld [vmem:[%s164 + $0x210] sm:$0xf]
      %v311 = vld [vmem:[%s164 + $0x214] sm:$0xf]
      %v312 = vld [vmem:[%s164 + $0x218] sm:$0xf]
      %v313 = vld [vmem:[%s164 + $0x21c] sm:$0xf]
      %v314 = vld [vmem:[%s164 + $0x220] sm:$0xf]
      %v315 = vld [vmem:[%s164 + $0x224] sm:$0xf]
      %v316 = vld [vmem:[%s164 + $0x228] sm:$0xf]
      %v317 = vld [vmem:[%s164 + $0x22c] sm:$0xf]
      %v318 = vld [vmem:[%s164 + $0x230] sm:$0xf]
      %v319 = vld [vmem:[%s164 + $0x234] sm:$0xf]
      %v320 = vld [vmem:[%s164 + $0x238] sm:$0xf]
      %v321 = vld [vmem:[%s164 + $0x23c] sm:$0xf]
      %v322 = vld [vmem:[%s164 + $0x240] sm:$0xf]
      %v323 = vld [vmem:[%s164 + $0x244] sm:$0xf]
      %v324 = vld [vmem:[%s164 + $0x248] sm:$0xf]
      %v325 = vld [vmem:[%s164 + $0x24c] sm:$0xf]
      %v326 = vld [vmem:[%s164 + $0x250] sm:$0xf]
      %v327 = vld [vmem:[%s164 + $0x254] sm:$0xf]
      %v328 = vld [vmem:[%s164 + $0x258] sm:$0xf]
      %v329 = vld [vmem:[%s164 + $0x25c] sm:$0xf]
      %v330 = vld [vmem:[%s164 + $0x260] sm:$0xf]
      %v331 = vld [vmem:[%s164 + $0x264] sm:$0xf]
      %v332 = vld [vmem:[%s164 + $0x268] sm:$0xf]
      %v333 = vld [vmem:[%s164 + $0x26c] sm:$0xf]
      %v334 = vld [vmem:[%s164 + $0x270] sm:$0xf]
      %v335 = vld [vmem:[%s164 + $0x274] sm:$0xf]
      %v336 = vld [vmem:[%s164 + $0x278] sm:$0xf]
      %v337 = vld [vmem:[%s164 + $0x27c] sm:$0xf]
      %v338 = vld [vmem:[%s164 + $0x280] sm:$0xf]
      %v339 = vld [vmem:[%s164 + $0x284] sm:$0xf]
      %v340 = vld [vmem:[%s164 + $0x288] sm:$0xf]
      %v341 = vld [vmem:[%s164 + $0x28c] sm:$0xf]
      %v342 = vld [vmem:[%s164 + $0x290] sm:$0xf]
      %v343 = vld [vmem:[%s164 + $0x294] sm:$0xf]
      %v344 = vld [vmem:[%s164 + $0x298] sm:$0xf]
      %v345 = vld [vmem:[%s164 + $0x29c] sm:$0xf]
      %v346 = vld [vmem:[%s164 + $0x2a0] sm:$0xf]
      %v347 = vld [vmem:[%s164 + $0x2a4] sm:$0xf]
      %v348 = vld [vmem:[%s164 + $0x2a8] sm:$0xf]
      %v349 = vld [vmem:[%s164 + $0x2ac] sm:$0xf]
      %v350 = vld [vmem:[%s164 + $0x2b0] sm:$0xf]
      %v351 = vld [vmem:[%s164 + $0x2b4] sm:$0xf]
      %v352 = vld [vmem:[%s164 + $0x2b8] sm:$0xf]
      %v353 = vld [vmem:[%s164 + $0x2bc] sm:$0xf]
      %v354 = vld [vmem:[%s164 + $0x2c0] sm:$0xf]
      %v355 = vld [vmem:[%s164 + $0x2c4] sm:$0xf]
      %v356 = vld [vmem:[%s164 + $0x2c8] sm:$0xf]
      %v357 = vld [vmem:[%s164 + $0x2cc] sm:$0xf]
      %v358 = vld [vmem:[%s164 + $0x2d0] sm:$0xf]
      %v359 = vld [vmem:[%s164 + $0x2d4] sm:$0xf]
      %v360 = vld [vmem:[%s164 + $0x2d8] sm:$0xf]
      %v361 = vld [vmem:[%s164 + $0x2dc] sm:$0xf]
      %v362 = vld [vmem:[%s164 + $0x2e0] sm:$0xf]
      %v363 = vld [vmem:[%s164 + $0x2e4] sm:$0xf]
      %v364 = vld [vmem:[%s164 + $0x2e8] sm:$0xf]
      %v365 = vld [vmem:[%s164 + $0x2ec] sm:$0xf]
      %v366 = vld [vmem:[%s164 + $0x2f0] sm:$0xf]
      %v367 = vld [vmem:[%s164 + $0x2f4] sm:$0xf]
      %v368 = vld [vmem:[%s164 + $0x2f8] sm:$0xf]
      %v369 = vld [vmem:[%s164 + $0x2fc] sm:$0xf]
      %v370 = vld [vmem:[%s164 + $0x300] sm:$0xf]
      %v371 = vld [vmem:[%s164 + $0x304] sm:$0xf]
      %v372 = vld [vmem:[%s164 + $0x308] sm:$0xf]
      %v373 = vld [vmem:[%s164 + $0x30c] sm:$0xf]
      %v374 = vld [vmem:[%s164 + $0x310] sm:$0xf]
      %v375 = vld [vmem:[%s164 + $0x314] sm:$0xf]
      %v376 = vld [vmem:[%s164 + $0x318] sm:$0xf]
      %v377 = vld [vmem:[%s164 + $0x31c] sm:$0xf]
      %v378 = vld [vmem:[%s164 + $0x320] sm:$0xf]
      %v379 = vld [vmem:[%s164 + $0x324] sm:$0xf]
      %v380 = vld [vmem:[%s164 + $0x328] sm:$0xf]
      %v381 = vld [vmem:[%s164 + $0x32c] sm:$0xf]
      %v382 = vld [vmem:[%s164 + $0x330] sm:$0xf]
      %v383 = vld [vmem:[%s164 + $0x334] sm:$0xf]
      %v384 = vld [vmem:[%s164 + $0x338] sm:$0xf]
      %v385 = vld [vmem:[%s164 + $0x33c] sm:$0xf]
      %v386 = vld [vmem:[%s164 + $0x340] sm:$0xf]
      %v387 = vld [vmem:[%s164 + $0x344] sm:$0xf]
      %v388 = vld [vmem:[%s164 + $0x348] sm:$0xf]
      %v389 = vld [vmem:[%s164 + $0x34c] sm:$0xf]
      %v390 = vld [vmem:[%s164 + $0x350] sm:$0xf]
      %v391 = vld [vmem:[%s164 + $0x354] sm:$0xf]
      %v392 = vld [vmem:[%s164 + $0x358] sm:$0xf]
      %v393 = vld [vmem:[%s164 + $0x35c] sm:$0xf]
      %v394 = vld [vmem:[%s164 + $0x360] sm:$0xf]
      %v395 = vld [vmem:[%s164 + $0x364] sm:$0xf]
      %v396 = vld [vmem:[%s164 + $0x368] sm:$0xf]
      %v397 = vld [vmem:[%s164 + $0x36c] sm:$0xf]
      %v398 = vld [vmem:[%s164 + $0x370] sm:$0xf]
      %v399 = vld [vmem:[%s164 + $0x374] sm:$0xf]
      %v400 = vld [vmem:[%s164 + $0x378] sm:$0xf]
      %v401 = vld [vmem:[%s164 + $0x37c] sm:$0xf]
      %v402 = vld [vmem:[%s164 + $0x380] sm:$0xf]
      %v403 = vld [vmem:[%s1] sm:$0xff]
      %v412 = vunpack.c.l.b16 %v170
      %v413 = vunpack.c.h.b16 %v170
      %v414 = vunpack.c.l.b16 %v171
      %v415 = vunpack.c.h.b16 %v171
      %v416 = vunpack.c.l.b16 %v172
      %v417 = vunpack.c.h.b16 %v172
      %v418 = vunpack.c.l.b16 %v173
      %v419 = vunpack.c.h.b16 %v173
      %v420 = vunpack.c.l.b16 %v174
      %v421 = vunpack.c.h.b16 %v174
      %v422 = vunpack.c.l.b16 %v175
      %v423 = vunpack.c.h.b16 %v175
      %v424 = vunpack.c.l.b16 %v176
      %v425 = vunpack.c.h.b16 %v176
      %v426 = vunpack.c.l.b16 %v177
      %v427 = vpack.c.b16 %v412, %v412
      %v428 = vpack.c.b16 %v413, %v413
      %v429 = vpack.c.b16 %v414, %v414
      %v430 = vpack.c.b16 %v415, %v415
      %v431 = vpack.c.b16 %v416, %v416
      %v432 = vpack.c.b16 %v417, %v417
      %v433 = vpack.c.b16 %v418, %v418
      %v434 = vpack.c.b16 %v419, %v419
      %v435 = vpack.c.b16 %v420, %v420
      %v436 = vpack.c.b16 %v421, %v421
      %v437 = vpack.c.b16 %v422, %v422
      %v438 = vpack.c.b16 %v423, %v423
      %v439 = vpack.c.b16 %v424, %v424
      %v440 = vpack.c.b16 %v425, %v425
      %v441 = vpack.c.b16 %v426, %v426
      %v681 = vunpack.c.l.b16 %v178
      %v682 = vunpack.c.l.b16 %v179
      %v683 = vunpack.c.l.b16 %v180
      %v684 = vunpack.c.l.b16 %v181
      %v685 = vunpack.c.l.b16 %v182
      %v686 = vunpack.c.l.b16 %v183
      %v687 = vunpack.c.l.b16 %v184
      %v688 = vunpack.c.l.b16 %v185
      %v689 = vunpack.c.l.b16 %v186
      %v690 = vunpack.c.l.b16 %v187
      %v691 = vunpack.c.l.b16 %v188
      %v692 = vunpack.c.l.b16 %v189
      %v693 = vunpack.c.l.b16 %v190
      %v694 = vunpack.c.l.b16 %v191
      %v695 = vunpack.c.l.b16 %v192
      %v696 = vunpack.c.l.b16 %v193
      %v697 = vunpack.c.l.b16 %v194
      %v698 = vunpack.c.l.b16 %v195
      %v699 = vunpack.c.l.b16 %v196
      %v700 = vunpack.c.l.b16 %v197
      %v701 = vunpack.c.l.b16 %v198
      %v702 = vunpack.c.l.b16 %v199
      %v703 = vunpack.c.l.b16 %v200
      %v704 = vunpack.c.l.b16 %v201
      %v705 = vunpack.c.l.b16 %v202
      %v706 = vunpack.c.l.b16 %v203
      %v707 = vunpack.c.l.b16 %v204
      %v708 = vunpack.c.l.b16 %v205
      %v709 = vunpack.c.l.b16 %v206
      %v710 = vunpack.c.l.b16 %v207
      %v711 = vunpack.c.l.b16 %v208
      %v712 = vunpack.c.l.b16 %v209
      %v713 = vunpack.c.l.b16 %v210
      %v714 = vunpack.c.l.b16 %v211
      %v715 = vunpack.c.l.b16 %v212
      %v716 = vunpack.c.l.b16 %v213
      %v717 = vunpack.c.l.b16 %v214
      %v718 = vunpack.c.l.b16 %v215
      %v719 = vunpack.c.l.b16 %v216
      %v720 = vunpack.c.l.b16 %v217
      %v721 = vunpack.c.l.b16 %v218
      %v722 = vunpack.c.l.b16 %v219
      %v723 = vunpack.c.l.b16 %v220
      %v724 = vunpack.c.l.b16 %v221
      %v725 = vunpack.c.l.b16 %v222
      %v726 = vunpack.c.l.b16 %v223
      %v727 = vunpack.c.l.b16 %v224
      %v728 = vunpack.c.l.b16 %v225
      %v729 = vunpack.c.l.b16 %v226
      %v730 = vunpack.c.l.b16 %v227
      %v731 = vunpack.c.l.b16 %v228
      %v732 = vunpack.c.l.b16 %v229
      %v733 = vunpack.c.l.b16 %v230
      %v734 = vunpack.c.l.b16 %v231
      %v735 = vunpack.c.l.b16 %v232
      %v736 = vunpack.c.l.b16 %v233
      %v737 = vunpack.c.l.b16 %v234
      %v738 = vunpack.c.l.b16 %v235
      %v739 = vunpack.c.l.b16 %v236
      %v740 = vunpack.c.l.b16 %v237
      %v741 = vunpack.c.l.b16 %v238
      %v742 = vunpack.c.l.b16 %v239
      %v743 = vunpack.c.l.b16 %v240
      %v744 = vunpack.c.l.b16 %v241
      %v745 = vunpack.c.l.b16 %v242
      %v746 = vunpack.c.l.b16 %v243
      %v747 = vunpack.c.l.b16 %v244
      %v748 = vunpack.c.l.b16 %v245
      %v749 = vunpack.c.l.b16 %v246
      %v750 = vunpack.c.l.b16 %v247
      %v751 = vunpack.c.l.b16 %v248
      %v752 = vunpack.c.l.b16 %v249
      %v753 = vunpack.c.l.b16 %v250
      %v754 = vunpack.c.l.b16 %v251
      %v755 = vunpack.c.l.b16 %v252
      %v756 = vunpack.c.l.b16 %v253
      %v757 = vunpack.c.l.b16 %v254
      %v758 = vunpack.c.l.b16 %v255
      %v759 = vunpack.c.l.b16 %v256
      %v760 = vunpack.c.l.b16 %v257
      %v761 = vunpack.c.l.b16 %v258
      %v762 = vunpack.c.l.b16 %v259
      %v763 = vunpack.c.l.b16 %v260
      %v764 = vunpack.c.l.b16 %v261
      %v765 = vunpack.c.l.b16 %v262
      %v766 = vunpack.c.l.b16 %v263
      %v767 = vunpack.c.l.b16 %v264
      %v768 = vunpack.c.l.b16 %v265
      %v769 = vunpack.c.l.b16 %v266
      %v770 = vunpack.c.l.b16 %v267
      %v771 = vunpack.c.l.b16 %v268
      %v772 = vunpack.c.l.b16 %v269
      %v773 = vunpack.c.l.b16 %v270
      %v774 = vunpack.c.l.b16 %v271
      %v775 = vunpack.c.l.b16 %v272
      %v776 = vunpack.c.l.b16 %v273
      %v777 = vunpack.c.l.b16 %v274
      %v778 = vunpack.c.l.b16 %v275
      %v779 = vunpack.c.l.b16 %v276
      %v780 = vunpack.c.l.b16 %v277
      %v781 = vunpack.c.l.b16 %v278
      %v782 = vunpack.c.l.b16 %v279
      %v783 = vunpack.c.l.b16 %v280
      %v784 = vunpack.c.l.b16 %v281
      %v785 = vunpack.c.l.b16 %v282
      %v786 = vunpack.c.l.b16 %v283
      %v787 = vunpack.c.l.b16 %v284
      %v788 = vunpack.c.l.b16 %v285
      %v789 = vunpack.c.l.b16 %v286
      %v790 = vunpack.c.l.b16 %v287
      %v791 = vunpack.c.l.b16 %v288
      %v792 = vunpack.c.l.b16 %v289
      %v793 = vunpack.c.l.b16 %v290
      %v794 = vunpack.c.l.b16 %v291
      %v795 = vunpack.c.l.b16 %v292
      %v796 = vunpack.c.l.b16 %v293
      %v797 = vunpack.c.l.b16 %v294
      %v798 = vunpack.c.l.b16 %v295
      %v799 = vunpack.c.l.b16 %v296
      %v800 = vunpack.c.l.b16 %v297
      %v801 = vunpack.c.l.b16 %v298
      %v802 = vunpack.c.l.b16 %v299
      %v803 = vunpack.c.l.b16 %v300
      %v804 = vunpack.c.l.b16 %v301
      %v805 = vunpack.c.l.b16 %v302
      %v806 = vunpack.c.l.b16 %v303
      %v807 = vunpack.c.l.b16 %v304
      %v808 = vunpack.c.l.b16 %v305
      %v809 = vunpack.c.l.b16 %v306
      %v810 = vunpack.c.l.b16 %v307
      %v811 = vunpack.c.l.b16 %v308
      %v812 = vunpack.c.l.b16 %v309
      %v813 = vunpack.c.l.b16 %v310
      %v814 = vunpack.c.l.b16 %v311
      %v815 = vunpack.c.l.b16 %v312
      %v816 = vunpack.c.l.b16 %v313
      %v817 = vunpack.c.l.b16 %v314
      %v818 = vunpack.c.l.b16 %v315
      %v819 = vunpack.c.l.b16 %v316
      %v820 = vunpack.c.l.b16 %v317
      %v821 = vunpack.c.l.b16 %v318
      %v822 = vunpack.c.l.b16 %v319
      %v823 = vunpack.c.l.b16 %v320
      %v824 = vunpack.c.l.b16 %v321
      %v825 = vunpack.c.l.b16 %v322
      %v826 = vunpack.c.l.b16 %v323
      %v827 = vunpack.c.l.b16 %v324
      %v828 = vunpack.c.l.b16 %v325
      %v829 = vunpack.c.l.b16 %v326
      %v830 = vunpack.c.l.b16 %v327
      %v831 = vunpack.c.l.b16 %v328
      %v832 = vunpack.c.l.b16 %v329
      %v833 = vunpack.c.l.b16 %v330
      %v834 = vunpack.c.l.b16 %v331
      %v835 = vunpack.c.l.b16 %v332
      %v836 = vunpack.c.l.b16 %v333
      %v837 = vunpack.c.l.b16 %v334
      %v838 = vunpack.c.l.b16 %v335
      %v839 = vunpack.c.l.b16 %v336
      %v840 = vunpack.c.l.b16 %v337
      %v841 = vunpack.c.l.b16 %v338
      %v842 = vunpack.c.l.b16 %v339
      %v843 = vunpack.c.l.b16 %v340
      %v844 = vunpack.c.l.b16 %v341
      %v845 = vunpack.c.l.b16 %v342
      %v846 = vunpack.c.l.b16 %v343
      %v847 = vunpack.c.l.b16 %v344
      %v848 = vunpack.c.l.b16 %v345
      %v849 = vunpack.c.l.b16 %v346
      %v850 = vunpack.c.l.b16 %v347
      %v851 = vunpack.c.l.b16 %v348
      %v852 = vunpack.c.l.b16 %v349
      %v853 = vunpack.c.l.b16 %v350
      %v854 = vunpack.c.l.b16 %v351
      %v855 = vunpack.c.l.b16 %v352
      %v856 = vunpack.c.l.b16 %v353
      %v857 = vunpack.c.l.b16 %v354
      %v858 = vunpack.c.l.b16 %v355
      %v859 = vunpack.c.l.b16 %v356
      %v860 = vunpack.c.l.b16 %v357
      %v861 = vunpack.c.l.b16 %v358
      %v862 = vunpack.c.l.b16 %v359
      %v863 = vunpack.c.l.b16 %v360
      %v864 = vunpack.c.l.b16 %v361
      %v865 = vunpack.c.l.b16 %v362
      %v866 = vunpack.c.l.b16 %v363
      %v867 = vunpack.c.l.b16 %v364
      %v868 = vunpack.c.l.b16 %v365
      %v869 = vunpack.c.l.b16 %v366
      %v870 = vunpack.c.l.b16 %v367
      %v871 = vunpack.c.l.b16 %v368
      %v872 = vunpack.c.l.b16 %v369
      %v873 = vunpack.c.l.b16 %v370
      %v874 = vunpack.c.l.b16 %v371
      %v875 = vunpack.c.l.b16 %v372
      %v876 = vunpack.c.l.b16 %v373
      %v877 = vunpack.c.l.b16 %v374
      %v878 = vunpack.c.l.b16 %v375
      %v879 = vunpack.c.l.b16 %v376
      %v880 = vunpack.c.l.b16 %v377
      %v881 = vunpack.c.l.b16 %v378
      %v882 = vunpack.c.l.b16 %v379
      %v883 = vunpack.c.l.b16 %v380
      %v884 = vunpack.c.l.b16 %v381
      %v885 = vunpack.c.l.b16 %v382
      %v886 = vunpack.c.l.b16 %v383
      %v887 = vunpack.c.l.b16 %v384
      %v888 = vunpack.c.l.b16 %v385
      %v889 = vunpack.c.l.b16 %v386
      %v890 = vunpack.c.l.b16 %v387
      %v891 = vunpack.c.l.b16 %v388
      %v892 = vunpack.c.l.b16 %v389
      %v893 = vunpack.c.l.b16 %v390
      %v894 = vunpack.c.l.b16 %v391
      %v895 = vunpack.c.l.b16 %v392
      %v896 = vunpack.c.l.b16 %v393
      %v897 = vunpack.c.l.b16 %v394
      %v898 = vunpack.c.l.b16 %v395
      %v899 = vunpack.c.l.b16 %v396
      %v900 = vunpack.c.l.b16 %v397
      %v901 = vunpack.c.l.b16 %v398
      %v902 = vunpack.c.l.b16 %v399
      %v903 = vunpack.c.l.b16 %v400
      %v904 = vunpack.c.l.b16 %v401
      %v905 = vunpack.c.l.b16 %v402
      %v906 = vpack.c.b16 %v682, %v681
      %v907 = vpack.c.b16 %v684, %v683
      %v908 = vpack.c.b16 %v686, %v685
      %v909 = vpack.c.b16 %v688, %v687
      %v910 = vpack.c.b16 %v690, %v689
      %v911 = vpack.c.b16 %v692, %v691
      %v912 = vpack.c.b16 %v694, %v693
      %v913 = vpack.c.b16 %v696, %v695
      %v914 = vpack.c.b16 %v698, %v697
      %v915 = vpack.c.b16 %v700, %v699
      %v916 = vpack.c.b16 %v702, %v701
      %v917 = vpack.c.b16 %v704, %v703
      %v918 = vpack.c.b16 %v706, %v705
      %v919 = vpack.c.b16 %v708, %v707
      %v920 = vpack.c.b16 %v710, %v709
      %v921 = vpack.c.b16 %v712, %v711
      %v922 = vpack.c.b16 %v714, %v713
      %v923 = vpack.c.b16 %v716, %v715
      %v924 = vpack.c.b16 %v718, %v717
      %v925 = vpack.c.b16 %v720, %v719
      %v926 = vpack.c.b16 %v722, %v721
      %v927 = vpack.c.b16 %v724, %v723
      %v928 = vpack.c.b16 %v726, %v725
      %v929 = vpack.c.b16 %v728, %v727
      %v930 = vpack.c.b16 %v730, %v729
      %v931 = vpack.c.b16 %v732, %v731
      %v932 = vpack.c.b16 %v734, %v733
      %v933 = vpack.c.b16 %v736, %v735
      %v934 = vpack.c.b16 %v738, %v737
      %v935 = vpack.c.b16 %v740, %v739
      %v936 = vpack.c.b16 %v742, %v741
      %v937 = vpack.c.b16 %v744, %v743
      %v938 = vpack.c.b16 %v746, %v745
      %v939 = vpack.c.b16 %v748, %v747
      %v940 = vpack.c.b16 %v750, %v749
      %v941 = vpack.c.b16 %v752, %v751
      %v942 = vpack.c.b16 %v754, %v753
      %v943 = vpack.c.b16 %v756, %v755
      %v944 = vpack.c.b16 %v758, %v757
      %v945 = vpack.c.b16 %v760, %v759
      %v946 = vpack.c.b16 %v762, %v761
      %v947 = vpack.c.b16 %v764, %v763
      %v948 = vpack.c.b16 %v766, %v765
      %v949 = vpack.c.b16 %v768, %v767
      %v950 = vpack.c.b16 %v770, %v769
      %v951 = vpack.c.b16 %v772, %v771
      %v952 = vpack.c.b16 %v774, %v773
      %v953 = vpack.c.b16 %v776, %v775
      %v954 = vpack.c.b16 %v778, %v777
      %v955 = vpack.c.b16 %v780, %v779
      %v956 = vpack.c.b16 %v782, %v781
      %v957 = vpack.c.b16 %v784, %v783
      %v958 = vpack.c.b16 %v786, %v785
      %v959 = vpack.c.b16 %v788, %v787
      %v960 = vpack.c.b16 %v790, %v789
      %v961 = vpack.c.b16 %v792, %v791
      %v962 = vpack.c.b16 %v794, %v793
      %v963 = vpack.c.b16 %v796, %v795
      %v964 = vpack.c.b16 %v798, %v797
      %v965 = vpack.c.b16 %v800, %v799
      %v966 = vpack.c.b16 %v802, %v801
      %v967 = vpack.c.b16 %v804, %v803
      %v968 = vpack.c.b16 %v806, %v805
      %v969 = vpack.c.b16 %v808, %v807
      %v970 = vpack.c.b16 %v810, %v809
      %v971 = vpack.c.b16 %v812, %v811
      %v972 = vpack.c.b16 %v814, %v813
      %v973 = vpack.c.b16 %v816, %v815
      %v974 = vpack.c.b16 %v818, %v817
      %v975 = vpack.c.b16 %v820, %v819
      %v976 = vpack.c.b16 %v822, %v821
      %v977 = vpack.c.b16 %v824, %v823
      %v978 = vpack.c.b16 %v826, %v825
      %v979 = vpack.c.b16 %v828, %v827
      %v980 = vpack.c.b16 %v830, %v829
      %v981 = vpack.c.b16 %v832, %v831
      %v982 = vpack.c.b16 %v834, %v833
      %v983 = vpack.c.b16 %v836, %v835
      %v984 = vpack.c.b16 %v838, %v837
      %v985 = vpack.c.b16 %v840, %v839
      %v986 = vpack.c.b16 %v842, %v841
      %v987 = vpack.c.b16 %v844, %v843
      %v988 = vpack.c.b16 %v846, %v845
      %v989 = vpack.c.b16 %v848, %v847
      %v990 = vpack.c.b16 %v850, %v849
      %v991 = vpack.c.b16 %v852, %v851
      %v992 = vpack.c.b16 %v854, %v853
      %v993 = vpack.c.b16 %v856, %v855
      %v994 = vpack.c.b16 %v858, %v857
      %v995 = vpack.c.b16 %v860, %v859
      %v996 = vpack.c.b16 %v862, %v861
      %v997 = vpack.c.b16 %v864, %v863
      %v998 = vpack.c.b16 %v866, %v865
      %v999 = vpack.c.b16 %v868, %v867
      %v1000 = vpack.c.b16 %v870, %v869
      %v1001 = vpack.c.b16 %v872, %v871
      %v1002 = vpack.c.b16 %v874, %v873
      %v1003 = vpack.c.b16 %v876, %v875
      %v1004 = vpack.c.b16 %v878, %v877
      %v1005 = vpack.c.b16 %v880, %v879
      %v1006 = vpack.c.b16 %v882, %v881
      %v1007 = vpack.c.b16 %v884, %v883
      %v1008 = vpack.c.b16 %v886, %v885
      %v1009 = vpack.c.b16 %v888, %v887
      %v1010 = vpack.c.b16 %v890, %v889
      %v1011 = vpack.c.b16 %v892, %v891
      %v1012 = vpack.c.b16 %v894, %v893
      %v1013 = vpack.c.b16 %v896, %v895
      %v1014 = vpack.c.b16 %v898, %v897
      %v1015 = vpack.c.b16 %v900, %v899
      %v1016 = vpack.c.b16 %v902, %v901
      %v1017 = vpack.c.b16 %v904, %v903
      %v1018 = vpack.c.b16 %v905, %v905
      %vm1131 = vcmask 64512
      %v1133 = vsel %vm1131, %v441, 0
      %vm1135 = vcmask 1043456
      %v1137 = vsel %vm1135, %v1018, 0
      %1139 = vmatpush.bf16.msra.mxu0 %v913
      %1140 = vmatpush.bf16.msra.mxu0 %v912
      %1141 = vmatpush.bf16.msra.mxu0 %v911
      %1142 = vmatpush.bf16.msra.mxu0 %v910
      %1143 = vmatpush.bf16.msra.mxu0 %v909
      %1144 = vmatpush.bf16.msra.mxu0 %v908
      %1145 = vmatpush.bf16.msra.mxu0 %v907
      %1146 = vmatpush.bf16.msra.mxu0 %v906
      %1147 = vmatmul.bf16.gmra.mxu0 %v427
      %v1148 = vpop.f32.mrf.mxu0
      %v1149 = vadd.f32 %v403, %v1148
      %v1150 = vpop.f32.mrf.mxu0
      %1151 = vdwg.mxu0
      %1152 = vmatpush.bf16.msra.mxu0 %v921
      %1153 = vmatpush.bf16.msra.mxu0 %v920
      %1154 = vmatpush.bf16.msra.mxu0 %v919
      %1155 = vmatpush.bf16.msra.mxu0 %v918
      %1156 = vmatpush.bf16.msra.mxu0 %v917
      %1157 = vmatpush.bf16.msra.mxu0 %v916
      %1158 = vmatpush.bf16.msra.mxu0 %v915
      %1159 = vmatpush.bf16.msra.mxu0 %v914
      %1160 = vmatmul.bf16.gmra.mxu0 %v428
      %v1161 = vpop.f32.mrf.mxu0
      %v1162 = vadd.f32 %v1149, %v1161
      %v1163 = vpop.f32.mrf.mxu0
      %1164 = vdwg.mxu0
      %1165 = vmatpush.bf16.msra.mxu0 %v929
      %1166 = vmatpush.bf16.msra.mxu0 %v928
      %1167 = vmatpush.bf16.msra.mxu0 %v927
      %1168 = vmatpush.bf16.msra.mxu0 %v926
      %1169 = vmatpush.bf16.msra.mxu0 %v925
      %1170 = vmatpush.bf16.msra.mxu0 %v924
      %1171 = vmatpush.bf16.msra.mxu0 %v923
      %1172 = vmatpush.bf16.msra.mxu0 %v922
      %1173 = vmatmul.bf16.gmra.mxu0 %v429
      %v1174 = vpop.f32.mrf.mxu0
      %v1175 = vadd.f32 %v1162, %v1174
      %v1176 = vpop.f32.mrf.mxu0
      %1177 = vdwg.mxu0
      %1178 = vmatpush.bf16.msra.mxu0 %v937
      %1179 = vmatpush.bf16.msra.mxu0 %v936
      %1180 = vmatpush.bf16.msra.mxu0 %v935
      %1181 = vmatpush.bf16.msra.mxu0 %v934
      %1182 = vmatpush.bf16.msra.mxu0 %v933
      %1183 = vmatpush.bf16.msra.mxu0 %v932
      %1184 = vmatpush.bf16.msra.mxu0 %v931
      %1185 = vmatpush.bf16.msra.mxu0 %v930
      %1186 = vmatmul.bf16.gmra.mxu0 %v430
      %v1187 = vpop.f32.mrf.mxu0
      %v1188 = vadd.f32 %v1175, %v1187
      %v1189 = vpop.f32.mrf.mxu0
      %1190 = vdwg.mxu0
      %1191 = vmatpush.bf16.msra.mxu0 %v945
      %1192 = vmatpush.bf16.msra.mxu0 %v944
      %1193 = vmatpush.bf16.msra.mxu0 %v943
      %1194 = vmatpush.bf16.msra.mxu0 %v942
      %1195 = vmatpush.bf16.msra.mxu0 %v941
      %1196 = vmatpush.bf16.msra.mxu0 %v940
      %1197 = vmatpush.bf16.msra.mxu0 %v939
      %1198 = vmatpush.bf16.msra.mxu0 %v938
      %1199 = vmatmul.bf16.gmra.mxu0 %v431
      %v1200 = vpop.f32.mrf.mxu0
      %v1201 = vadd.f32 %v1188, %v1200
      %v1202 = vpop.f32.mrf.mxu0
      %1203 = vdwg.mxu0
      %1204 = vmatpush.bf16.msra.mxu0 %v953
      %1205 = vmatpush.bf16.msra.mxu0 %v952
      %1206 = vmatpush.bf16.msra.mxu0 %v951
      %1207 = vmatpush.bf16.msra.mxu0 %v950
      %1208 = vmatpush.bf16.msra.mxu0 %v949
      %1209 = vmatpush.bf16.msra.mxu0 %v948
      %1210 = vmatpush.bf16.msra.mxu0 %v947
      %1211 = vmatpush.bf16.msra.mxu0 %v946
      %1212 = vmatmul.bf16.gmra.mxu0 %v432
      %v1213 = vpop.f32.mrf.mxu0
      %v1214 = vadd.f32 %v1201, %v1213
      %v1215 = vpop.f32.mrf.mxu0
      %1216 = vdwg.mxu0
      %1217 = vmatpush.bf16.msra.mxu0 %v961
      %1218 = vmatpush.bf16.msra.mxu0 %v960
      %1219 = vmatpush.bf16.msra.mxu0 %v959
      %1220 = vmatpush.bf16.msra.mxu0 %v958
      %1221 = vmatpush.bf16.msra.mxu0 %v957
      %1222 = vmatpush.bf16.msra.mxu0 %v956
      %1223 = vmatpush.bf16.msra.mxu0 %v955
      %1224 = vmatpush.bf16.msra.mxu0 %v954
      %1225 = vmatmul.bf16.gmra.mxu0 %v433
      %v1226 = vpop.f32.mrf.mxu0
      %v1227 = vadd.f32 %v1214, %v1226
      %v1228 = vpop.f32.mrf.mxu0
      %1229 = vdwg.mxu0
      %1230 = vmatpush.bf16.msra.mxu0 %v969
      %1231 = vmatpush.bf16.msra.mxu0 %v968
      %1232 = vmatpush.bf16.msra.mxu0 %v967
      %1233 = vmatpush.bf16.msra.mxu0 %v966
      %1234 = vmatpush.bf16.msra.mxu0 %v965
      %1235 = vmatpush.bf16.msra.mxu0 %v964
      %1236 = vmatpush.bf16.msra.mxu0 %v963
      %1237 = vmatpush.bf16.msra.mxu0 %v962
      %1238 = vmatmul.bf16.gmra.mxu0 %v434
      %v1239 = vpop.f32.mrf.mxu0
      %v1240 = vadd.f32 %v1227, %v1239
      %v1241 = vpop.f32.mrf.mxu0
      %1242 = vdwg.mxu0
      %1243 = vmatpush.bf16.msra.mxu0 %v977
      %1244 = vmatpush.bf16.msra.mxu0 %v976
      %1245 = vmatpush.bf16.msra.mxu0 %v975
      %1246 = vmatpush.bf16.msra.mxu0 %v974
      %1247 = vmatpush.bf16.msra.mxu0 %v973
      %1248 = vmatpush.bf16.msra.mxu0 %v972
      %1249 = vmatpush.bf16.msra.mxu0 %v971
      %1250 = vmatpush.bf16.msra.mxu0 %v970
      %1251 = vmatmul.bf16.gmra.mxu0 %v435
      %v1252 = vpop.f32.mrf.mxu0
      %v1253 = vadd.f32 %v1240, %v1252
      %v1254 = vpop.f32.mrf.mxu0
      %1255 = vdwg.mxu0
      %1256 = vmatpush.bf16.msra.mxu0 %v985
      %1257 = vmatpush.bf16.msra.mxu0 %v984
      %1258 = vmatpush.bf16.msra.mxu0 %v983
      %1259 = vmatpush.bf16.msra.mxu0 %v982
      %1260 = vmatpush.bf16.msra.mxu0 %v981
      %1261 = vmatpush.bf16.msra.mxu0 %v980
      %1262 = vmatpush.bf16.msra.mxu0 %v979
      %1263 = vmatpush.bf16.msra.mxu0 %v978
      %1264 = vmatmul.bf16.gmra.mxu0 %v436
      %v1265 = vpop.f32.mrf.mxu0
      %v1266 = vadd.f32 %v1253, %v1265
      %v1267 = vpop.f32.mrf.mxu0
      %1268 = vdwg.mxu0
      %1269 = vmatpush.bf16.msra.mxu0 %v993
      %1270 = vmatpush.bf16.msra.mxu0 %v992
      %1271 = vmatpush.bf16.msra.mxu0 %v991
      %1272 = vmatpush.bf16.msra.mxu0 %v990
      %1273 = vmatpush.bf16.msra.mxu0 %v989
      %1274 = vmatpush.bf16.msra.mxu0 %v988
      %1275 = vmatpush.bf16.msra.mxu0 %v987
      %1276 = vmatpush.bf16.msra.mxu0 %v986
      %1277 = vmatmul.bf16.gmra.mxu0 %v437
      %v1278 = vpop.f32.mrf.mxu0
      %v1279 = vadd.f32 %v1266, %v1278
      %v1280 = vpop.f32.mrf.mxu0
      %1281 = vdwg.mxu0
      %1282 = vmatpush.bf16.msra.mxu0 %v1001
      %1283 = vmatpush.bf16.msra.mxu0 %v1000
      %1284 = vmatpush.bf16.msra.mxu0 %v999
      %1285 = vmatpush.bf16.msra.mxu0 %v998
      %1286 = vmatpush.bf16.msra.mxu0 %v997
      %1287 = vmatpush.bf16.msra.mxu0 %v996
      %1288 = vmatpush.bf16.msra.mxu0 %v995
      %1289 = vmatpush.bf16.msra.mxu0 %v994
      %1290 = vmatmul.bf16.gmra.mxu0 %v438
      %v1291 = vpop.f32.mrf.mxu0
      %v1292 = vadd.f32 %v1279, %v1291
      %v1293 = vpop.f32.mrf.mxu0
      %1294 = vdwg.mxu0
      %1295 = vmatpush.bf16.msra.mxu0 %v1009
      %1296 = vmatpush.bf16.msra.mxu0 %v1008
      %1297 = vmatpush.bf16.msra.mxu0 %v1007
      %1298 = vmatpush.bf16.msra.mxu0 %v1006
      %1299 = vmatpush.bf16.msra.mxu0 %v1005
      %1300 = vmatpush.bf16.msra.mxu0 %v1004
      %1301 = vmatpush.bf16.msra.mxu0 %v1003
      %1302 = vmatpush.bf16.msra.mxu0 %v1002
      %1303 = vmatmul.bf16.gmra.mxu0 %v439
      %v1304 = vpop.f32.mrf.mxu0
      %v1305 = vadd.f32 %v1292, %v1304
      %v1306 = vpop.f32.mrf.mxu0
      %1307 = vdwg.mxu0
      %1308 = vmatpush.bf16.msra.mxu0 %v1017
      %1309 = vmatpush.bf16.msra.mxu0 %v1016
      %1310 = vmatpush.bf16.msra.mxu0 %v1015
      %1311 = vmatpush.bf16.msra.mxu0 %v1014
      %1312 = vmatpush.bf16.msra.mxu0 %v1013
      %1313 = vmatpush.bf16.msra.mxu0 %v1012
      %1314 = vmatpush.bf16.msra.mxu0 %v1011
      %1315 = vmatpush.bf16.msra.mxu0 %v1010
      %1316 = vmatmul.bf16.gmra.mxu0 %v440
      %v1317 = vpop.f32.mrf.mxu0
      %v1318 = vadd.f32 %v1305, %v1317
      %v1319 = vpop.f32.mrf.mxu0
      %1320 = vdwg.mxu0
      %1321 = vmatpush.bf16.msra.mxu0 0
      %1322 = vmatpush.bf16.msra.mxu0 0
      %1323 = vmatpush.bf16.msra.mxu0 0
      %1324 = vmatpush.bf16.msra.mxu0 0
      %1325 = vmatpush.bf16.msra.mxu0 0
      %1326 = vmatpush.bf16.msra.mxu0 0
      %1327 = vmatpush.bf16.msra.mxu0 0
      %1328 = vmatpush.bf16.msra.mxu0 %v1137
      %1329 = vmatmul.bf16.gmra.mxu0 %v1133
      %v1330 = vpop.f32.mrf.mxu0
      %v1331 = vadd.f32 %v1318, %v1330
      %v1332 = vpop.f32.mrf.mxu0
      %1333 = vdwg.mxu0
      %v1334 = vmax.f32 %v1331, 0.0
      %vm1335 = vcmask 7168
      %1336 = vst.msk [vmem:[%s168] sm:$0xff] %vm1335, %v1334
      %p1337 = scmp.lt.s32.totalorder %s14, 1
      %s1338 = scalar_select %p1337, %s14, 1
      %s1339 = smul.addr %s1338, 8
      %s1340 = scalar_lea.vmem %s3, %s1339
      // Predicated region
      $region33: #{_lambda_.6} parent=31 // pred_check
        %p1341 = pneg %p100
      $region34: #{_lambda_.6} parent=31 // pred_check_branch
        %1343 = sbr.rel (%p1341) target = $region36
      $region35: #{_lambda_.6} parent=31 // pred_region
        _
      $region36: #{_lambda_.6} parent=31 // pred_fallthru
        _
    $region32: #{_lambda_.6} parent=5 // pred_fallthru
      _
    %p1344 = scmp.le.s32.totalorder 2, %s9
    // Predicated region
    $region37: #{_lambda_.6} parent=5 // pred_check
      %p1345 = pneg %p1344
    $region38: #{_lambda_.6} parent=5 // pred_check_branch
      %1347 = sbr.rel (%p1345) target = $region40
    $region39: #{_lambda_.6} parent=5 // pred_region
      %s1348 = ssub.s32 %s9, 2
      // Predicated region
      $region41: #{_lambda_.6} parent=39 // pred_check
        %p1349 = pneg %p106
      $region42: #{_lambda_.6} parent=39 // pred_check_branch
        %1351 = sbr.rel (%p1349) target = $region44
      $region43: #{_lambda_.6} parent=39 // pred_region
        %p1352 = scmp.lt.s32.totalorder %s15, 1
        %s1353 = scalar_select %p1352, %s15, 1
        %s1354 = smul.addr %s1353, 8
        %s1355 = scalar_lea.vmem %s3, %s1354
      $region44: #{_lambda_.6} parent=39 // pred_fallthru
        _
    $region40: #{_lambda_.6} parent=5 // pred_fallthru
      _
  $region6: #{_lambda_.6} parent=0 // loop_footer
    %s13 = sadd.s32 1, %s9
  $region7: #{_lambda_.6} parent=0 // loop_footer_branch
    %8 = sbr.rel target = $region3
  $region8: #{_lambda_.6} parent=0 // loop_exit
    _

// kernel: _lambda_.7
$region0: #{_lambda_.7}
  #allocation0 [shape = 'u32[]', space=smem, size = 0x4, offset = 0x4, fixed_abs, tag = 'smem constant byte address 0x4 - core index']
  #allocation1 [shape = 'u32[72,128]{1,0:T(1,128)}', space=vmem, size = 0x9000, scoped, tag = 'internal scratch']
  %s0 = inlined_call_operand.vmem [shape: bf16[10,8], index: 0, kind: input, shape index: {}]
  %s1 = inlined_call_operand.vmem [shape: f32[10,1], index: 1, kind: input, shape index: {}]
  %s2 = inlined_call_operand.vmem [shape: bf16[1,8,2], index: 2, kind: input, shape index: {}]
  %s3 = inlined_call_operand.vmem [shape: f32[1,10,2], index: 3, kind: output, shape index: {}]
  %s4 = sld [smem:[#allocation0]]
  $region22: #{_lambda_.7} parent=0
    _
  %s6 = ssub.s32 1, %s4
  %s7 = scalar_select 0, %s6, %s4
  // Predicated region
  $region2: #{_lambda_.7} parent=0 // pred_check
    _
  $region3: #{_lambda_.7} parent=0 // pred_check_branch
    %9 = sbr.rel (0) target = $region5
  $region4: #{_lambda_.7} parent=0 // pred_region
    _
  $region5: #{_lambda_.7} parent=0 // pred_fallthru
    _
  // Predicated region
  $region6: #{_lambda_.7} parent=0 // pred_check
    _
  $region7: #{_lambda_.7} parent=0 // pred_check_branch
    %11 = sbr.rel (0) target = $region9
  $region8: #{_lambda_.7} parent=0 // pred_region
    _
  $region9: #{_lambda_.7} parent=0 // pred_fallthru
    _
  // Predicated region
  $region10: #{_lambda_.7} parent=0 // pred_check
    _
  $region11: #{_lambda_.7} parent=0 // pred_check_branch
    %13 = sbr.rel (0) target = $region13
  $region12: #{_lambda_.7} parent=0 // pred_region
    _
  $region13: #{_lambda_.7} parent=0 // pred_fallthru
    _
  %v15 = vld [vmem:[%s0] sm:$0xf]
  %v16 = vld [vmem:[%s0 + $0x4] sm:$0x1]
  %v17 = vld [vmem:[%s2] sm:$0xf]
  %v18 = vld [vmem:[%s1] sm:$0xff]
  %v19 = vld [vmem:[%s1 + $0x8] sm:$0x3]
  %21 = vset.pattern.permute.xlu0 0
  %22 = vperm.xlu0 %21, %v18
  %v23 = vpop.permute.xlu0 %22
  %26 = vset.pattern.permute.xlu0 0
  %27 = vperm.xlu0 %26, %v19
  %v28 = vpop.permute.xlu0 %27
  %v32 = vunpack.c.l.b16 %v15
  %v33 = vunpack.c.l.b16 %v16
  %v34 = vpack.c.b16 %v33, %v32
  %vm35 = vcmask 64512
  %v37 = vsel %vm35, %v34, 0
  %vm39 = vcmask 1043456
  %v41 = vsel %vm39, %v17, 0
  %43 = vmatpush.bf16.msra.mxu0 0
  %44 = vmatpush.bf16.msra.mxu0 0
  %45 = vmatpush.bf16.msra.mxu0 0
  %46 = vmatpush.bf16.msra.mxu0 0
  %47 = vmatpush.bf16.msra.mxu0 0
  %48 = vmatpush.bf16.msra.mxu0 0
  %49 = vmatpush.bf16.msra.mxu0 0
  %50 = vmatpush.bf16.msra.mxu0 %v41
  %51 = vmatmul.bf16.gmra.mxu0 %v37
  %v52 = vpop.f32.mrf.mxu0
  %v53 = vadd.f32 %v23, %v52
  %v54 = vpop.f32.mrf.mxu0
  %v55 = vadd.f32 %v28, %v54
  %56 = vdwg.mxu0
  %vm57 = vcmask 15360
  %58 = vst.msk [vmem:[%s3] sm:$0xff] %vm57, %v53
  %vm59 = vcmask 9216
  %60 = vst.msk [vmem:[%s3 + $0x8] sm:$0x3] %vm59, %v55
  // Predicated region
  $region14: #{_lambda_.7} parent=0 // pred_check
    _
  $region15: #{_lambda_.7} parent=0 // pred_check_branch
    %62 = sbr.rel (0) target = $region17
  $region16: #{_lambda_.7} parent=0 // pred_region
    _
  $region17: #{_lambda_.7} parent=0 // pred_fallthru
    _
  // Predicated region
  $region18: #{_lambda_.7} parent=0 // pred_check
    _
  $region19: #{_lambda_.7} parent=0 // pred_check_branch
    %64 = sbr.rel (0) target = $region21
  $region20: #{_lambda_.7} parent=0 // pred_region
    _
  $region21: #{_lambda_.7} parent=0 // pred_fallthru
    _

</llo_original>
